<compile_context>
chip_gen: v7x
topology: tpu7x:2x2x1
jax: 0.10.0
libtpu: 0.0.40
codegen_flags: <defaults>
</compile_context>

<pallas_src>
import jax
import jax.numpy as jnp
from jax import lax
from jax.experimental import pallas as pl
from jax.experimental.pallas import tpu as pltpu


def _round_up(x, m):
    return (x + m - 1) // m * m


# ---------------------------------------------------------------------------
# Fused kernel factory
# ---------------------------------------------------------------------------
def _make_fused_kernel(num_layers, seq_tile, batch_pad, hidden_pad):
    TT, Bp, Hp = seq_tile, batch_pad, hidden_pad

    def kernel(*args):
        # -- unpack refs -----------------------------------------------------
        p = 0
        x_ref = args[p]; p += 1                       # (TT*Bp, D) time-major rows
        layers = []
        for _ in range(num_layers):                   # (Din, 4Hp), (Hp, 4Hp), (1, 4Hp)
            layers.append((args[p], args[p + 1], args[p + 2])); p += 3
        wd_ref, bd_ref = args[p], args[p + 1]; p += 2  # (Hp, O), (1, O)
        out_ref = args[p]; p += 1                      # (TT*Bp, O)
        zx_scr, hseq_scr = args[p], args[p + 1]; p += 2
        state = []
        for _ in range(num_layers):                    # per-layer (h, c): (Bp, Hp)
            state.append((args[p], args[p + 1])); p += 2

        # -- reset recurrent state at the start of the sequence ---------------
        @pl.when(pl.program_id(0) == 0)
        def _():
            for h_scr, c_scr in state:
                h_scr[...] = jnp.zeros(h_scr.shape, h_scr.dtype)
                c_scr[...] = jnp.zeros(c_scr.shape, c_scr.dtype)

        # -- LSTM layers -------------------------------------------------------
        for l, (wih_ref, whh_ref, b_ref) in enumerate(layers):
            # Input to this layer for the whole tile (value read happens before
            # hseq_scr is overwritten below).
            inp = x_ref[...] if l == 0 else hseq_scr[...]

            # Hoisted input projection: one big matmul + one bias broadcast per tile.
            zx_scr[...] = (jnp.dot(inp, wih_ref[...],
                                   preferred_element_type=jnp.float32)
                           + b_ref[...])

            whh = whh_ref[...]
            h_scr, c_scr = state[l]
            h = h_scr[...]
            c = c_scr[...]

            # Fully-unrolled recurrence over the tile's timesteps.
            for t in range(TT):
                r0, r1 = t * Bp, (t + 1) * Bp          # sublane-tile aligned rows
                z = zx_scr[r0:r1, :] + jnp.dot(
                    h, whh, preferred_element_type=jnp.float32)   # (Bp, 4Hp)
                # PyTorch gate order i, f, g, o — lane-aligned slices (Hp % 128 == 0)
                i_g = jax.nn.sigmoid(z[:, 0 * Hp:1 * Hp])
                f_g = jax.nn.sigmoid(z[:, 1 * Hp:2 * Hp])
                g_g = jnp.tanh(z[:, 2 * Hp:3 * Hp])
                o_g = jax.nn.sigmoid(z[:, 3 * Hp:4 * Hp])
                c = f_g * c + i_g * g_g
                h = o_g * jnp.tanh(c)
                hseq_scr[r0:r1, :] = h

            # carry state to the next sequence tile
            h_scr[...] = h
            c_scr[...] = c

        # -- dense head (fused epilogue) ---------------------------------------
        out_ref[...] = (jnp.dot(hseq_scr[...], wd_ref[...],
                                preferred_element_type=jnp.float32)
                        + bd_ref[...])

    return kernel


# ---------------------------------------------------------------------------
# Wrapper
# ---------------------------------------------------------------------------
def ee_lstm_forward(x_btd, kparams, seq_tile=None):
    """x_btd: (B, T, input_dim) batch-first, like nn.LSTM(batch_first=True)."""
    B, T, D = x_btd.shape
    lstm = kparams["lstm"]
    wd, bd = kparams["dense"]
    Hp = kparams["hidden_pad"]
    O = wd.shape[1]
    L = len(lstm)

    if seq_tile is None:
        seq_tile = max(d for d in range(1, min(T, 32) + 1) if T % d == 0)
    TT = seq_tile
    assert T % TT == 0, (T, TT)

    Bp = _round_up(B, 8)  # sublane-pad the batch so per-step slices are tile-aligned

    # batch-first -> time-major rows, padded batch, flattened to (T*Bp, D)
    x_tm = jnp.transpose(x_btd, (1, 0, 2)).astype(jnp.float32)      # (T, B, D)
    if Bp != B:
        x_tm = jnp.pad(x_tm, ((0, 0), (0, Bp - B), (0, 0)))
    x_flat = x_tm.reshape(T * Bp, D)

    const_map = lambda ti: (0, 0)
    in_specs = [pl.BlockSpec((TT * Bp, D), lambda ti: (ti, 0))]
    flat_w = []
    for (wih, whh, b) in lstm:
        in_specs += [pl.BlockSpec(wih.shape, const_map),
                     pl.BlockSpec(whh.shape, const_map),
                     pl.BlockSpec(b.shape, const_map)]
        flat_w += [wih, whh, b]
    in_specs += [pl.BlockSpec(wd.shape, const_map), pl.BlockSpec(bd.shape, const_map)]
    flat_w += [wd, bd]

    out_spec = pl.BlockSpec((TT * Bp, O), lambda ti: (ti, 0))

    scratch = [pltpu.VMEM((TT * Bp, 4 * Hp), jnp.float32),   # hoisted gate pre-acts
               pltpu.VMEM((TT * Bp, Hp), jnp.float32)]       # current layer h sequence
    for _ in range(L):
        scratch += [pltpu.VMEM((Bp, Hp), jnp.float32),       # h carry
                    pltpu.VMEM((Bp, Hp), jnp.float32)]       # c carry

    kernel = _make_fused_kernel(L, TT, Bp, Hp)

    out_flat = pl.pallas_call(
        kernel,
        out_shape=jax.ShapeDtypeStruct((T * Bp, O), jnp.float32),
        grid_spec=pltpu.PrefetchScalarGridSpec(
            num_scalar_prefetch=0,
            grid=(T // TT,),
            in_specs=in_specs,
            out_specs=out_spec,
            scratch_shapes=scratch),
        compiler_params=pltpu.CompilerParams(
            dimension_semantics=("arbitrary",),          # recurrence crosses tiles
            vmem_limit_bytes=32 * 1024 * 1024),          # safe on v5e/v6e/v7x
    )(x_flat, *flat_w)

    out = out_flat.reshape(T, Bp, O)[:, :B, :]
    return jnp.transpose(out, (1, 0, 2))                 # (B, T, O)


# ---------------------------------------------------------------------------
# Parameters: PyTorch layout init + kernel-layout (transposed, lane-padded) prep
# ---------------------------------------------------------------------------
def init_params(key, input_dim, hidden_dim, num_layers, output_dim):
    """PyTorch-layout parameters (as nn.LSTM / nn.Linear store them)."""
    params = {"lstm": [], "dense": None}
    k = 1.0 / float(hidden_dim) ** 0.5
    for layer in range(num_layers):
        d_in = input_dim if layer == 0 else hidden_dim
        key, k1, k2, k3, k4 = jax.random.split(key, 5)
        w_ih = jax.random.uniform(k1, (4 * hidden_dim, d_in), jnp.float32, -k, k)
        w_hh = jax.random.uniform(k2, (4 * hidden_dim, hidden_dim), jnp.float32, -k, k)
        b_ih = jax.random.uniform(k3, (4 * hidden_dim,), jnp.float32, -k, k)
        b_hh = jax.random.uniform(k4, (4 * hidden_dim,), jnp.float32, -k, k)
        params["lstm"].append((w_ih, w_hh, b_ih, b_hh))
    key, k1, k2 = jax.random.split(key, 3)
    w_d = jax.random.uniform(k1, (output_dim, hidden_dim), jnp.float32, -k, k)
    b_d = jax.random.uniform(k2, (output_dim,), jnp.float32, -k, k)
    params["dense"] = (w_d, b_d)
    return params


def prepare_kernel_params(params, hidden_dim, lane=128):
    """Transpose to (in, out) layout and zero-pad the hidden dim to a lane multiple."""
    H = hidden_dim
    Hp = _round_up(H, lane)

    def pad_gate_cols(w_t):  # (Din, 4H) -> (Din, 4Hp), per-gate zero padding
        d_in = w_t.shape[0]
        out = jnp.zeros((d_in, 4, Hp), jnp.float32)
        out = out.at[:, :, :H].set(w_t.reshape(d_in, 4, H))
        return out.reshape(d_in, 4 * Hp)

    def pad_rows(w, rows_to):  # zero-pad leading (hidden-input) axis
        out = jnp.zeros((rows_to, w.shape[1]), jnp.float32)
        return out.at[:w.shape[0], :].set(w)

    lstm = []
    for li, (w_ih, w_hh, b_ih, b_hh) in enumerate(params["lstm"]):
        wih_t = w_ih.T.astype(jnp.float32)                    # (Din, 4H)
        if li > 0:
            wih_t = pad_rows(wih_t, Hp)                       # previous layer is padded
        wih_p = pad_gate_cols(wih_t)                          # (Din or Hp, 4Hp)
        whh_p = pad_gate_cols(pad_rows(w_hh.T.astype(jnp.float32), Hp))  # (Hp, 4Hp)
        b_p = pad_gate_cols((b_ih + b_hh).reshape(1, 4 * H))  # (1, 4Hp)
        lstm.append((wih_p, whh_p, b_p))

    w_d, b_d = params["dense"]
    wd_p = pad_rows(w_d.T.astype(jnp.float32), Hp)            # (Hp, O)
    bd_p = b_d.reshape(1, -1).astype(jnp.float32)             # (1, O)
    return {"lstm": lstm, "dense": (wd_p, bd_p), "hidden_pad": Hp}


# ---------------------------------------------------------------------------
# Pure-JAX reference (PyTorch-layout params) for a correctness check
# ---------------------------------------------------------------------------
def ref_forward(x_btd, params):
    B = x_btd.shape[0]
    h_seq = jnp.transpose(x_btd, (1, 0, 2)).astype(jnp.float32)   # (T, B, D)
    for (w_ih, w_hh, b_ih, b_hh) in params["lstm"]:
        H = w_hh.shape[1]

        def cell(carry, x_t, w_ih=w_ih, w_hh=w_hh, b_ih=b_ih, b_hh=b_hh, H=H):
            h, c = carry
            z = x_t @ w_ih.T + h @ w_hh.T + b_ih + b_hh
            i = jax.nn.sigmoid(z[:, :H])
            f = jax.nn.sigmoid(z[:, H:2 * H])
            g = jnp.tanh(z[:, 2 * H:3 * H])
            o = jax.nn.sigmoid(z[:, 3 * H:])
            c = f * c + i * g
            h = o * jnp.tanh(c)
            return (h, c), h

        init = (jnp.zeros((B, H), jnp.float32), jnp.zeros((B, H), jnp.float32))
        _, h_seq = lax.scan(cell, init, h_seq)
    w_d, b_d = params["dense"]
    out = h_seq @ w_d.T + b_d                                      # (T, B, O)
    return jnp.transpose(out, (1, 0, 2))                           # (B, T, O)


if __name__ == "__main__":
    # Module hyperparameters (small, consistent with EE_LSTM's forward)
    input_dim, hidden_dim, num_layers, output_dim = 4, 32, 2, 1
    batch, seq = 2, 8

    key = jax.random.PRNGKey(0)
    key, pkey, xkey = jax.random.split(key, 3)
    params = init_params(pkey, input_dim, hidden_dim, num_layers, output_dim)
    kparams = prepare_kernel_params(params, hidden_dim)
    x = jax.random.normal(xkey, (batch, seq, input_dim), jnp.float32)

    out = jax.block_until_ready(ee_lstm_forward(x, kparams))
    assert out.shape == (batch, seq, output_dim), out.shape

    ref = jax.block_until_ready(ref_forward(x, params))
    if not jnp.allclose(out, ref, atol=2e-3, rtol=2e-3):
        raise AssertionError(
            f"mismatch: max abs diff = {float(jnp.max(jnp.abs(out - ref)))}")

    print("KERNEL_OK")
</pallas_src>

<mosaic_0001>
module attributes {stable_mosaic.version = 11 : i64} {
  func.func @kernel(%arg0: i32, %arg1: memref<64x4xf32, #tpu.memory_space<vmem>>, %arg2: memref<4x512xf32, #tpu.memory_space<vmem>>, %arg3: memref<128x512xf32, #tpu.memory_space<vmem>>, %arg4: memref<1x512xf32, #tpu.memory_space<vmem>>, %arg5: memref<128x512xf32, #tpu.memory_space<vmem>>, %arg6: memref<128x512xf32, #tpu.memory_space<vmem>>, %arg7: memref<1x512xf32, #tpu.memory_space<vmem>>, %arg8: memref<128x1xf32, #tpu.memory_space<vmem>>, %arg9: memref<1x1xf32, #tpu.memory_space<vmem>>, %arg10: memref<64x1xf32, #tpu.memory_space<vmem>>, %arg11: memref<64x512xf32, #tpu.memory_space<vmem>>, %arg12: memref<64x128xf32, #tpu.memory_space<vmem>>, %arg13: memref<8x128xf32, #tpu.memory_space<vmem>>, %arg14: memref<8x128xf32, #tpu.memory_space<vmem>>, %arg15: memref<8x128xf32, #tpu.memory_space<vmem>>, %arg16: memref<8x128xf32, #tpu.memory_space<vmem>>) attributes {dimension_semantics = [#tpu.dimension_semantics<arbitrary>], iteration_bounds = array<i64: 1>, scalar_prefetch = 0 : i64, scratch_operands = 6 : i64, tpu.core_type = #tpu.core_type<tc>, window_params = [{transform_indices = @transform_0, window_bounds = array<i64: 64, 4>}, {pipeline_mode = #tpu.pipeline_mode<synchronous>, transform_indices = @transform_1, window_bounds = array<i64: 4, 512>}, {pipeline_mode = #tpu.pipeline_mode<synchronous>, transform_indices = @transform_2, window_bounds = array<i64: 128, 512>}, {pipeline_mode = #tpu.pipeline_mode<synchronous>, transform_indices = @transform_3, window_bounds = array<i64: 1, 512>}, {pipeline_mode = #tpu.pipeline_mode<synchronous>, transform_indices = @transform_4, window_bounds = array<i64: 128, 512>}, {pipeline_mode = #tpu.pipeline_mode<synchronous>, transform_indices = @transform_5, window_bounds = array<i64: 128, 512>}, {pipeline_mode = #tpu.pipeline_mode<synchronous>, transform_indices = @transform_6, window_bounds = array<i64: 1, 512>}, {pipeline_mode = #tpu.pipeline_mode<synchronous>, transform_indices = @transform_7, window_bounds = array<i64: 128, 1>}, {pipeline_mode = #tpu.pipeline_mode<synchronous>, transform_indices = @transform_8, window_bounds = array<i64: 1, 1>}, {transform_indices = @transform_9, window_bounds = array<i64: 64, 1>}]} {
    %c0_i32 = arith.constant 0 : i32
    %0 = arith.cmpi eq, %arg0, %c0_i32 : i32
    %1 = arith.extui %0 : i1 to i32
    %c0_i32_0 = arith.constant 0 : i32
    %2 = arith.cmpi ne, %1, %c0_i32_0 : i32
    scf.if %2 {
      %cst_167 = arith.constant 0.000000e+00 : f32
      %498 = vector.broadcast %cst_167 : f32 to vector<8x128xf32>
      %c0_168 = arith.constant 0 : index
      %c0_169 = arith.constant 0 : index
      %499 = vector.load %arg13[%c0_168, %c0_169] : memref<8x128xf32, #tpu.memory_space<vmem>>, vector<8x128xf32>
      tpu.vector_store %arg13[%c0_168, %c0_169], %498 {strides = array<i32>} : memref<8x128xf32, #tpu.memory_space<vmem>>, vector<8x128xf32>,
      %cst_170 = arith.constant 0.000000e+00 : f32
      %500 = vector.broadcast %cst_170 : f32 to vector<8x128xf32>
      %c0_171 = arith.constant 0 : index
      %c0_172 = arith.constant 0 : index
      %501 = vector.load %arg14[%c0_171, %c0_172] : memref<8x128xf32, #tpu.memory_space<vmem>>, vector<8x128xf32>
      tpu.vector_store %arg14[%c0_171, %c0_172], %500 {strides = array<i32>} : memref<8x128xf32, #tpu.memory_space<vmem>>, vector<8x128xf32>,
      %cst_173 = arith.constant 0.000000e+00 : f32
      %502 = vector.broadcast %cst_173 : f32 to vector<8x128xf32>
      %c0_174 = arith.constant 0 : index
      %c0_175 = arith.constant 0 : index
      %503 = vector.load %arg15[%c0_174, %c0_175] : memref<8x128xf32, #tpu.memory_space<vmem>>, vector<8x128xf32>
      tpu.vector_store %arg15[%c0_174, %c0_175], %502 {strides = array<i32>} : memref<8x128xf32, #tpu.memory_space<vmem>>, vector<8x128xf32>,
      %cst_176 = arith.constant 0.000000e+00 : f32
      %504 = vector.broadcast %cst_176 : f32 to vector<8x128xf32>
      %c0_177 = arith.constant 0 : index
      %c0_178 = arith.constant 0 : index
      %505 = vector.load %arg16[%c0_177, %c0_178] : memref<8x128xf32, #tpu.memory_space<vmem>>, vector<8x128xf32>
      tpu.vector_store %arg16[%c0_177, %c0_178], %504 {strides = array<i32>} : memref<8x128xf32, #tpu.memory_space<vmem>>, vector<8x128xf32>,
    } else {
    }
    %c0 = arith.constant 0 : index
    %c0_1 = arith.constant 0 : index
    %3 = vector.load %arg1[%c0, %c0_1] : memref<64x4xf32, #tpu.memory_space<vmem>>, vector<64x4xf32>
    %c0_2 = arith.constant 0 : index
    %c0_3 = arith.constant 0 : index
    %4 = vector.load %arg2[%c0_2, %c0_3] : memref<4x512xf32, #tpu.memory_space<vmem>>, vector<4x512xf32>
    %cst = arith.constant dense<0.000000e+00> : vector<64x512xf32>
    %5 = tpu.matmul %3, %4, %cst {dimension_numbers = #tpu.dot_dimension_numbers<[1], [0], [0], [1], [0, 0, 1, 1], [], []>} : vector<64x4xf32>, vector<4x512xf32>, vector<64x512xf32> -> vector<64x512xf32>
    %c0_4 = arith.constant 0 : index
    %c0_5 = arith.constant 0 : index
    %6 = vector.load %arg4[%c0_4, %c0_5] : memref<1x512xf32, #tpu.memory_space<vmem>>, vector<1x512xf32>
    %7 = vector.broadcast %6 : vector<1x512xf32> to vector<64x512xf32>
    %8 = arith.addf %5, %7 : vector<64x512xf32>
    %c0_6 = arith.constant 0 : index
    %c0_7 = arith.constant 0 : index
    %9 = vector.load %arg11[%c0_6, %c0_7] : memref<64x512xf32, #tpu.memory_space<vmem>>, vector<64x512xf32>
    tpu.vector_store %arg11[%c0_6, %c0_7], %8 {strides = array<i32>} : memref<64x512xf32, #tpu.memory_space<vmem>>, vector<64x512xf32>,
    %c0_8 = arith.constant 0 : index
    %c0_9 = arith.constant 0 : index
    %10 = vector.load %arg3[%c0_8, %c0_9] : memref<128x512xf32, #tpu.memory_space<vmem>>, vector<128x512xf32>
    %c0_10 = arith.constant 0 : index
    %c0_11 = arith.constant 0 : index
    %11 = vector.load %arg13[%c0_10, %c0_11] : memref<8x128xf32, #tpu.memory_space<vmem>>, vector<8x128xf32>
    %c0_12 = arith.constant 0 : index
    %c0_13 = arith.constant 0 : index
    %12 = vector.load %arg14[%c0_12, %c0_13] : memref<8x128xf32, #tpu.memory_space<vmem>>, vector<8x128xf32>
    %c0_14 = arith.constant 0 : index
    %c0_15 = arith.constant 0 : index
    %13 = vector.load %arg11[%c0_14, %c0_15] : memref<64x512xf32, #tpu.memory_space<vmem>>, vector<8x512xf32>
    %cst_16 = arith.constant dense<0.000000e+00> : vector<8x512xf32>
    %14 = tpu.matmul %11, %10, %cst_16 {dimension_numbers = #tpu.dot_dimension_numbers<[1], [0], [0], [1], [0, 0, 1, 1], [], []>} : vector<8x128xf32>, vector<128x512xf32>, vector<8x512xf32> -> vector<8x512xf32>
    %15 = arith.addf %13, %14 : vector<8x512xf32>
    %16 = vector.extract_strided_slice %15 {offsets = [0, 0], sizes = [8, 128], strides = [1, 1]} : vector<8x512xf32> to vector<8x128xf32>
    %17 = arith.negf %16 : vector<8x128xf32>
    %18 = math.exp %17 : vector<8x128xf32>
    %cst_17 = arith.constant 1.000000e+00 : f32
    %19 = vector.broadcast %cst_17 : f32 to vector<8x128xf32>
    %20 = arith.addf %19, %18 : vector<8x128xf32>
    %21 = arith.divf %19, %20 : vector<8x128xf32>
    %22 = vector.extract_strided_slice %15 {offsets = [0, 128], sizes = [8, 128], strides = [1, 1]} : vector<8x512xf32> to vector<8x128xf32>
    %23 = arith.negf %22 : vector<8x128xf32>
    %24 = math.exp %23 : vector<8x128xf32>
    %cst_18 = arith.constant 1.000000e+00 : f32
    %25 = vector.broadcast %cst_18 : f32 to vector<8x128xf32>
    %26 = arith.addf %25, %24 : vector<8x128xf32>
    %27 = arith.divf %25, %26 : vector<8x128xf32>
    %28 = vector.extract_strided_slice %15 {offsets = [0, 256], sizes = [8, 128], strides = [1, 1]} : vector<8x512xf32> to vector<8x128xf32>
    %29 = math.tanh %28 : vector<8x128xf32>
    %30 = vector.extract_strided_slice %15 {offsets = [0, 384], sizes = [8, 128], strides = [1, 1]} : vector<8x512xf32> to vector<8x128xf32>
    %31 = arith.negf %30 : vector<8x128xf32>
    %32 = math.exp %31 : vector<8x128xf32>
    %cst_19 = arith.constant 1.000000e+00 : f32
    %33 = vector.broadcast %cst_19 : f32 to vector<8x128xf32>
    %34 = arith.addf %33, %32 : vector<8x128xf32>
    %35 = arith.divf %33, %34 : vector<8x128xf32>
    %36 = arith.mulf %27, %12 : vector<8x128xf32>
    %37 = arith.mulf %21, %29 : vector<8x128xf32>
    %38 = arith.addf %36, %37 : vector<8x128xf32>
    %39 = math.tanh %38 : vector<8x128xf32>
    %40 = arith.mulf %35, %39 : vector<8x128xf32>
    %c0_20 = arith.constant 0 : index
    %c0_21 = arith.constant 0 : index
    %41 = vector.load %arg12[%c0_20, %c0_21] : memref<64x128xf32, #tpu.memory_space<vmem>>, vector<8x128xf32>
    tpu.vector_store %arg12[%c0_20, %c0_21], %40 {strides = array<i32>} : memref<64x128xf32, #tpu.memory_space<vmem>>, vector<8x128xf32>,
    %c8 = arith.constant 8 : index
    %c0_22 = arith.constant 0 : index
    %42 = vector.load %arg11[%c8, %c0_22] : memref<64x512xf32, #tpu.memory_space<vmem>>, vector<8x512xf32>
    %cst_23 = arith.constant dense<0.000000e+00> : vector<8x512xf32>
    %43 = tpu.matmul %40, %10, %cst_23 {dimension_numbers = #tpu.dot_dimension_numbers<[1], [0], [0], [1], [0, 0, 1, 1], [], []>} : vector<8x128xf32>, vector<128x512xf32>, vector<8x512xf32> -> vector<8x512xf32>
    %44 = arith.addf %42, %43 : vector<8x512xf32>
    %45 = vector.extract_strided_slice %44 {offsets = [0, 0], sizes = [8, 128], strides = [1, 1]} : vector<8x512xf32> to vector<8x128xf32>
    %46 = arith.negf %45 : vector<8x128xf32>
    %47 = math.exp %46 : vector<8x128xf32>
    %cst_24 = arith.constant 1.000000e+00 : f32
    %48 = vector.broadcast %cst_24 : f32 to vector<8x128xf32>
    %49 = arith.addf %48, %47 : vector<8x128xf32>
    %50 = arith.divf %48, %49 : vector<8x128xf32>
    %51 = vector.extract_strided_slice %44 {offsets = [0, 128], sizes = [8, 128], strides = [1, 1]} : vector<8x512xf32> to vector<8x128xf32>
    %52 = arith.negf %51 : vector<8x128xf32>
    %53 = math.exp %52 : vector<8x128xf32>
    %cst_25 = arith.constant 1.000000e+00 : f32
    %54 = vector.broadcast %cst_25 : f32 to vector<8x128xf32>
    %55 = arith.addf %54, %53 : vector<8x128xf32>
    %56 = arith.divf %54, %55 : vector<8x128xf32>
    %57 = vector.extract_strided_slice %44 {offsets = [0, 256], sizes = [8, 128], strides = [1, 1]} : vector<8x512xf32> to vector<8x128xf32>
    %58 = math.tanh %57 : vector<8x128xf32>
    %59 = vector.extract_strided_slice %44 {offsets = [0, 384], sizes = [8, 128], strides = [1, 1]} : vector<8x512xf32> to vector<8x128xf32>
    %60 = arith.negf %59 : vector<8x128xf32>
    %61 = math.exp %60 : vector<8x128xf32>
    %cst_26 = arith.constant 1.000000e+00 : f32
    %62 = vector.broadcast %cst_26 : f32 to vector<8x128xf32>
    %63 = arith.addf %62, %61 : vector<8x128xf32>
    %64 = arith.divf %62, %63 : vector<8x128xf32>
    %65 = arith.mulf %56, %38 : vector<8x128xf32>
    %66 = arith.mulf %50, %58 : vector<8x128xf32>
    %67 = arith.addf %65, %66 : vector<8x128xf32>
    %68 = math.tanh %67 : vector<8x128xf32>
    %69 = arith.mulf %64, %68 : vector<8x128xf32>
    %c8_27 = arith.constant 8 : index
    %c0_28 = arith.constant 0 : index
    %70 = vector.load %arg12[%c8_27, %c0_28] : memref<64x128xf32, #tpu.memory_space<vmem>>, vector<8x128xf32>
    tpu.vector_store %arg12[%c8_27, %c0_28], %69 {strides = array<i32>} : memref<64x128xf32, #tpu.memory_space<vmem>>, vector<8x128xf32>,
    %c16 = arith.constant 16 : index
    %c0_29 = arith.constant 0 : index
    %71 = vector.load %arg11[%c16, %c0_29] : memref<64x512xf32, #tpu.memory_space<vmem>>, vector<8x512xf32>
    %cst_30 = arith.constant dense<0.000000e+00> : vector<8x512xf32>
    %72 = tpu.matmul %69, %10, %cst_30 {dimension_numbers = #tpu.dot_dimension_numbers<[1], [0], [0], [1], [0, 0, 1, 1], [], []>} : vector<8x128xf32>, vector<128x512xf32>, vector<8x512xf32> -> vector<8x512xf32>
    %73 = arith.addf %71, %72 : vector<8x512xf32>
    %74 = vector.extract_strided_slice %73 {offsets = [0, 0], sizes = [8, 128], strides = [1, 1]} : vector<8x512xf32> to vector<8x128xf32>
    %75 = arith.negf %74 : vector<8x128xf32>
    %76 = math.exp %75 : vector<8x128xf32>
    %cst_31 = arith.constant 1.000000e+00 : f32
    %77 = vector.broadcast %cst_31 : f32 to vector<8x128xf32>
    %78 = arith.addf %77, %76 : vector<8x128xf32>
    %79 = arith.divf %77, %78 : vector<8x128xf32>
    %80 = vector.extract_strided_slice %73 {offsets = [0, 128], sizes = [8, 128], strides = [1, 1]} : vector<8x512xf32> to vector<8x128xf32>
    %81 = arith.negf %80 : vector<8x128xf32>
    %82 = math.exp %81 : vector<8x128xf32>
    %cst_32 = arith.constant 1.000000e+00 : f32
    %83 = vector.broadcast %cst_32 : f32 to vector<8x128xf32>
    %84 = arith.addf %83, %82 : vector<8x128xf32>
    %85 = arith.divf %83, %84 : vector<8x128xf32>
    %86 = vector.extract_strided_slice %73 {offsets = [0, 256], sizes = [8, 128], strides = [1, 1]} : vector<8x512xf32> to vector<8x128xf32>
    %87 = math.tanh %86 : vector<8x128xf32>
    %88 = vector.extract_strided_slice %73 {offsets = [0, 384], sizes = [8, 128], strides = [1, 1]} : vector<8x512xf32> to vector<8x128xf32>
    %89 = arith.negf %88 : vector<8x128xf32>
    %90 = math.exp %89 : vector<8x128xf32>
    %cst_33 = arith.constant 1.000000e+00 : f32
    %91 = vector.broadcast %cst_33 : f32 to vector<8x128xf32>
    %92 = arith.addf %91, %90 : vector<8x128xf32>
    %93 = arith.divf %91, %92 : vector<8x128xf32>
    %94 = arith.mulf %85, %67 : vector<8x128xf32>
    %95 = arith.mulf %79, %87 : vector<8x128xf32>
    %96 = arith.addf %94, %95 : vector<8x128xf32>
    %97 = math.tanh %96 : vector<8x128xf32>
    %98 = arith.mulf %93, %97 : vector<8x128xf32>
    %c16_34 = arith.constant 16 : index
    %c0_35 = arith.constant 0 : index
    %99 = vector.load %arg12[%c16_34, %c0_35] : memref<64x128xf32, #tpu.memory_space<vmem>>, vector<8x128xf32>
    tpu.vector_store %arg12[%c16_34, %c0_35], %98 {strides = array<i32>} : memref<64x128xf32, #tpu.memory_space<vmem>>, vector<8x128xf32>,
    %c24 = arith.constant 24 : index
    %c0_36 = arith.constant 0 : index
    %100 = vector.load %arg11[%c24, %c0_36] : memref<64x512xf32, #tpu.memory_space<vmem>>, vector<8x512xf32>
    %cst_37 = arith.constant dense<0.000000e+00> : vector<8x512xf32>
    %101 = tpu.matmul %98, %10, %cst_37 {dimension_numbers = #tpu.dot_dimension_numbers<[1], [0], [0], [1], [0, 0, 1, 1], [], []>} : vector<8x128xf32>, vector<128x512xf32>, vector<8x512xf32> -> vector<8x512xf32>
    %102 = arith.addf %100, %101 : vector<8x512xf32>
    %103 = vector.extract_strided_slice %102 {offsets = [0, 0], sizes = [8, 128], strides = [1, 1]} : vector<8x512xf32> to vector<8x128xf32>
    %104 = arith.negf %103 : vector<8x128xf32>
    %105 = math.exp %104 : vector<8x128xf32>
    %cst_38 = arith.constant 1.000000e+00 : f32
    %106 = vector.broadcast %cst_38 : f32 to vector<8x128xf32>
    %107 = arith.addf %106, %105 : vector<8x128xf32>
    %108 = arith.divf %106, %107 : vector<8x128xf32>
    %109 = vector.extract_strided_slice %102 {offsets = [0, 128], sizes = [8, 128], strides = [1, 1]} : vector<8x512xf32> to vector<8x128xf32>
    %110 = arith.negf %109 : vector<8x128xf32>
    %111 = math.exp %110 : vector<8x128xf32>
    %cst_39 = arith.constant 1.000000e+00 : f32
    %112 = vector.broadcast %cst_39 : f32 to vector<8x128xf32>
    %113 = arith.addf %112, %111 : vector<8x128xf32>
    %114 = arith.divf %112, %113 : vector<8x128xf32>
    %115 = vector.extract_strided_slice %102 {offsets = [0, 256], sizes = [8, 128], strides = [1, 1]} : vector<8x512xf32> to vector<8x128xf32>
    %116 = math.tanh %115 : vector<8x128xf32>
    %117 = vector.extract_strided_slice %102 {offsets = [0, 384], sizes = [8, 128], strides = [1, 1]} : vector<8x512xf32> to vector<8x128xf32>
    %118 = arith.negf %117 : vector<8x128xf32>
    %119 = math.exp %118 : vector<8x128xf32>
    %cst_40 = arith.constant 1.000000e+00 : f32
    %120 = vector.broadcast %cst_40 : f32 to vector<8x128xf32>
    %121 = arith.addf %120, %119 : vector<8x128xf32>
    %122 = arith.divf %120, %121 : vector<8x128xf32>
    %123 = arith.mulf %114, %96 : vector<8x128xf32>
    %124 = arith.mulf %108, %116 : vector<8x128xf32>
    %125 = arith.addf %123, %124 : vector<8x128xf32>
    %126 = math.tanh %125 : vector<8x128xf32>
    %127 = arith.mulf %122, %126 : vector<8x128xf32>
    %c24_41 = arith.constant 24 : index
    %c0_42 = arith.constant 0 : index
    %128 = vector.load %arg12[%c24_41, %c0_42] : memref<64x128xf32, #tpu.memory_space<vmem>>, vector<8x128xf32>
    tpu.vector_store %arg12[%c24_41, %c0_42], %127 {strides = array<i32>} : memref<64x128xf32, #tpu.memory_space<vmem>>, vector<8x128xf32>,
    %c32 = arith.constant 32 : index
    %c0_43 = arith.constant 0 : index
    %129 = vector.load %arg11[%c32, %c0_43] : memref<64x512xf32, #tpu.memory_space<vmem>>, vector<8x512xf32>
    %cst_44 = arith.constant dense<0.000000e+00> : vector<8x512xf32>
    %130 = tpu.matmul %127, %10, %cst_44 {dimension_numbers = #tpu.dot_dimension_numbers<[1], [0], [0], [1], [0, 0, 1, 1], [], []>} : vector<8x128xf32>, vector<128x512xf32>, vector<8x512xf32> -> vector<8x512xf32>
    %131 = arith.addf %129, %130 : vector<8x512xf32>
    %132 = vector.extract_strided_slice %131 {offsets = [0, 0], sizes = [8, 128], strides = [1, 1]} : vector<8x512xf32> to vector<8x128xf32>
    %133 = arith.negf %132 : vector<8x128xf32>
    %134 = math.exp %133 : vector<8x128xf32>
    %cst_45 = arith.constant 1.000000e+00 : f32
    %135 = vector.broadcast %cst_45 : f32 to vector<8x128xf32>
    %136 = arith.addf %135, %134 : vector<8x128xf32>
    %137 = arith.divf %135, %136 : vector<8x128xf32>
    %138 = vector.extract_strided_slice %131 {offsets = [0, 128], sizes = [8, 128], strides = [1, 1]} : vector<8x512xf32> to vector<8x128xf32>
    %139 = arith.negf %138 : vector<8x128xf32>
    %140 = math.exp %139 : vector<8x128xf32>
    %cst_46 = arith.constant 1.000000e+00 : f32
    %141 = vector.broadcast %cst_46 : f32 to vector<8x128xf32>
    %142 = arith.addf %141, %140 : vector<8x128xf32>
    %143 = arith.divf %141, %142 : vector<8x128xf32>
    %144 = vector.extract_strided_slice %131 {offsets = [0, 256], sizes = [8, 128], strides = [1, 1]} : vector<8x512xf32> to vector<8x128xf32>
    %145 = math.tanh %144 : vector<8x128xf32>
    %146 = vector.extract_strided_slice %131 {offsets = [0, 384], sizes = [8, 128], strides = [1, 1]} : vector<8x512xf32> to vector<8x128xf32>
    %147 = arith.negf %146 : vector<8x128xf32>
    %148 = math.exp %147 : vector<8x128xf32>
    %cst_47 = arith.constant 1.000000e+00 : f32
    %149 = vector.broadcast %cst_47 : f32 to vector<8x128xf32>
    %150 = arith.addf %149, %148 : vector<8x128xf32>
    %151 = arith.divf %149, %150 : vector<8x128xf32>
    %152 = arith.mulf %143, %125 : vector<8x128xf32>
    %153 = arith.mulf %137, %145 : vector<8x128xf32>
    %154 = arith.addf %152, %153 : vector<8x128xf32>
    %155 = math.tanh %154 : vector<8x128xf32>
    %156 = arith.mulf %151, %155 : vector<8x128xf32>
    %c32_48 = arith.constant 32 : index
    %c0_49 = arith.constant 0 : index
    %157 = vector.load %arg12[%c32_48, %c0_49] : memref<64x128xf32, #tpu.memory_space<vmem>>, vector<8x128xf32>
    tpu.vector_store %arg12[%c32_48, %c0_49], %156 {strides = array<i32>} : memref<64x128xf32, #tpu.memory_space<vmem>>, vector<8x128xf32>,
    %c40 = arith.constant 40 : index
    %c0_50 = arith.constant 0 : index
    %158 = vector.load %arg11[%c40, %c0_50] : memref<64x512xf32, #tpu.memory_space<vmem>>, vector<8x512xf32>
    %cst_51 = arith.constant dense<0.000000e+00> : vector<8x512xf32>
    %159 = tpu.matmul %156, %10, %cst_51 {dimension_numbers = #tpu.dot_dimension_numbers<[1], [0], [0], [1], [0, 0, 1, 1], [], []>} : vector<8x128xf32>, vector<128x512xf32>, vector<8x512xf32> -> vector<8x512xf32>
    %160 = arith.addf %158, %159 : vector<8x512xf32>
    %161 = vector.extract_strided_slice %160 {offsets = [0, 0], sizes = [8, 128], strides = [1, 1]} : vector<8x512xf32> to vector<8x128xf32>
    %162 = arith.negf %161 : vector<8x128xf32>
    %163 = math.exp %162 : vector<8x128xf32>
    %cst_52 = arith.constant 1.000000e+00 : f32
    %164 = vector.broadcast %cst_52 : f32 to vector<8x128xf32>
    %165 = arith.addf %164, %163 : vector<8x128xf32>
    %166 = arith.divf %164, %165 : vector<8x128xf32>
    %167 = vector.extract_strided_slice %160 {offsets = [0, 128], sizes = [8, 128], strides = [1, 1]} : vector<8x512xf32> to vector<8x128xf32>
    %168 = arith.negf %167 : vector<8x128xf32>
    %169 = math.exp %168 : vector<8x128xf32>
    %cst_53 = arith.constant 1.000000e+00 : f32
    %170 = vector.broadcast %cst_53 : f32 to vector<8x128xf32>
    %171 = arith.addf %170, %169 : vector<8x128xf32>
    %172 = arith.divf %170, %171 : vector<8x128xf32>
    %173 = vector.extract_strided_slice %160 {offsets = [0, 256], sizes = [8, 128], strides = [1, 1]} : vector<8x512xf32> to vector<8x128xf32>
    %174 = math.tanh %173 : vector<8x128xf32>
    %175 = vector.extract_strided_slice %160 {offsets = [0, 384], sizes = [8, 128], strides = [1, 1]} : vector<8x512xf32> to vector<8x128xf32>
    %176 = arith.negf %175 : vector<8x128xf32>
    %177 = math.exp %176 : vector<8x128xf32>
    %cst_54 = arith.constant 1.000000e+00 : f32
    %178 = vector.broadcast %cst_54 : f32 to vector<8x128xf32>
    %179 = arith.addf %178, %177 : vector<8x128xf32>
    %180 = arith.divf %178, %179 : vector<8x128xf32>
    %181 = arith.mulf %172, %154 : vector<8x128xf32>
    %182 = arith.mulf %166, %174 : vector<8x128xf32>
    %183 = arith.addf %181, %182 : vector<8x128xf32>
    %184 = math.tanh %183 : vector<8x128xf32>
    %185 = arith.mulf %180, %184 : vector<8x128xf32>
    %c40_55 = arith.constant 40 : index
    %c0_56 = arith.constant 0 : index
    %186 = vector.load %arg12[%c40_55, %c0_56] : memref<64x128xf32, #tpu.memory_space<vmem>>, vector<8x128xf32>
    tpu.vector_store %arg12[%c40_55, %c0_56], %185 {strides = array<i32>} : memref<64x128xf32, #tpu.memory_space<vmem>>, vector<8x128xf32>,
    %c48 = arith.constant 48 : index
    %c0_57 = arith.constant 0 : index
    %187 = vector.load %arg11[%c48, %c0_57] : memref<64x512xf32, #tpu.memory_space<vmem>>, vector<8x512xf32>
    %cst_58 = arith.constant dense<0.000000e+00> : vector<8x512xf32>
    %188 = tpu.matmul %185, %10, %cst_58 {dimension_numbers = #tpu.dot_dimension_numbers<[1], [0], [0], [1], [0, 0, 1, 1], [], []>} : vector<8x128xf32>, vector<128x512xf32>, vector<8x512xf32> -> vector<8x512xf32>
    %189 = arith.addf %187, %188 : vector<8x512xf32>
    %190 = vector.extract_strided_slice %189 {offsets = [0, 0], sizes = [8, 128], strides = [1, 1]} : vector<8x512xf32> to vector<8x128xf32>
    %191 = arith.negf %190 : vector<8x128xf32>
    %192 = math.exp %191 : vector<8x128xf32>
    %cst_59 = arith.constant 1.000000e+00 : f32
    %193 = vector.broadcast %cst_59 : f32 to vector<8x128xf32>
    %194 = arith.addf %193, %192 : vector<8x128xf32>
    %195 = arith.divf %193, %194 : vector<8x128xf32>
    %196 = vector.extract_strided_slice %189 {offsets = [0, 128], sizes = [8, 128], strides = [1, 1]} : vector<8x512xf32> to vector<8x128xf32>
    %197 = arith.negf %196 : vector<8x128xf32>
    %198 = math.exp %197 : vector<8x128xf32>
    %cst_60 = arith.constant 1.000000e+00 : f32
    %199 = vector.broadcast %cst_60 : f32 to vector<8x128xf32>
    %200 = arith.addf %199, %198 : vector<8x128xf32>
    %201 = arith.divf %199, %200 : vector<8x128xf32>
    %202 = vector.extract_strided_slice %189 {offsets = [0, 256], sizes = [8, 128], strides = [1, 1]} : vector<8x512xf32> to vector<8x128xf32>
    %203 = math.tanh %202 : vector<8x128xf32>
    %204 = vector.extract_strided_slice %189 {offsets = [0, 384], sizes = [8, 128], strides = [1, 1]} : vector<8x512xf32> to vector<8x128xf32>
    %205 = arith.negf %204 : vector<8x128xf32>
    %206 = math.exp %205 : vector<8x128xf32>
    %cst_61 = arith.constant 1.000000e+00 : f32
    %207 = vector.broadcast %cst_61 : f32 to vector<8x128xf32>
    %208 = arith.addf %207, %206 : vector<8x128xf32>
    %209 = arith.divf %207, %208 : vector<8x128xf32>
    %210 = arith.mulf %201, %183 : vector<8x128xf32>
    %211 = arith.mulf %195, %203 : vector<8x128xf32>
    %212 = arith.addf %210, %211 : vector<8x128xf32>
    %213 = math.tanh %212 : vector<8x128xf32>
    %214 = arith.mulf %209, %213 : vector<8x128xf32>
    %c48_62 = arith.constant 48 : index
    %c0_63 = arith.constant 0 : index
    %215 = vector.load %arg12[%c48_62, %c0_63] : memref<64x128xf32, #tpu.memory_space<vmem>>, vector<8x128xf32>
    tpu.vector_store %arg12[%c48_62, %c0_63], %214 {strides = array<i32>} : memref<64x128xf32, #tpu.memory_space<vmem>>, vector<8x128xf32>,
    %c56 = arith.constant 56 : index
    %c0_64 = arith.constant 0 : index
    %216 = vector.load %arg11[%c56, %c0_64] : memref<64x512xf32, #tpu.memory_space<vmem>>, vector<8x512xf32>
    %cst_65 = arith.constant dense<0.000000e+00> : vector<8x512xf32>
    %217 = tpu.matmul %214, %10, %cst_65 {dimension_numbers = #tpu.dot_dimension_numbers<[1], [0], [0], [1], [0, 0, 1, 1], [], []>} : vector<8x128xf32>, vector<128x512xf32>, vector<8x512xf32> -> vector<8x512xf32>
    %218 = arith.addf %216, %217 : vector<8x512xf32>
    %219 = vector.extract_strided_slice %218 {offsets = [0, 0], sizes = [8, 128], strides = [1, 1]} : vector<8x512xf32> to vector<8x128xf32>
    %220 = arith.negf %219 : vector<8x128xf32>
    %221 = math.exp %220 : vector<8x128xf32>
    %cst_66 = arith.constant 1.000000e+00 : f32
    %222 = vector.broadcast %cst_66 : f32 to vector<8x128xf32>
    %223 = arith.addf %222, %221 : vector<8x128xf32>
    %224 = arith.divf %222, %223 : vector<8x128xf32>
    %225 = vector.extract_strided_slice %218 {offsets = [0, 128], sizes = [8, 128], strides = [1, 1]} : vector<8x512xf32> to vector<8x128xf32>
    %226 = arith.negf %225 : vector<8x128xf32>
    %227 = math.exp %226 : vector<8x128xf32>
    %cst_67 = arith.constant 1.000000e+00 : f32
    %228 = vector.broadcast %cst_67 : f32 to vector<8x128xf32>
    %229 = arith.addf %228, %227 : vector<8x128xf32>
    %230 = arith.divf %228, %229 : vector<8x128xf32>
    %231 = vector.extract_strided_slice %218 {offsets = [0, 256], sizes = [8, 128], strides = [1, 1]} : vector<8x512xf32> to vector<8x128xf32>
    %232 = math.tanh %231 : vector<8x128xf32>
    %233 = vector.extract_strided_slice %218 {offsets = [0, 384], sizes = [8, 128], strides = [1, 1]} : vector<8x512xf32> to vector<8x128xf32>
    %234 = arith.negf %233 : vector<8x128xf32>
    %235 = math.exp %234 : vector<8x128xf32>
    %cst_68 = arith.constant 1.000000e+00 : f32
    %236 = vector.broadcast %cst_68 : f32 to vector<8x128xf32>
    %237 = arith.addf %236, %235 : vector<8x128xf32>
    %238 = arith.divf %236, %237 : vector<8x128xf32>
    %239 = arith.mulf %230, %212 : vector<8x128xf32>
    %240 = arith.mulf %224, %232 : vector<8x128xf32>
    %241 = arith.addf %239, %240 : vector<8x128xf32>
    %242 = math.tanh %241 : vector<8x128xf32>
    %243 = arith.mulf %238, %242 : vector<8x128xf32>
    %c56_69 = arith.constant 56 : index
    %c0_70 = arith.constant 0 : index
    %244 = vector.load %arg12[%c56_69, %c0_70] : memref<64x128xf32, #tpu.memory_space<vmem>>, vector<8x128xf32>
    tpu.vector_store %arg12[%c56_69, %c0_70], %243 {strides = array<i32>} : memref<64x128xf32, #tpu.memory_space<vmem>>, vector<8x128xf32>,
    %c0_71 = arith.constant 0 : index
    %c0_72 = arith.constant 0 : index
    %245 = vector.load %arg13[%c0_71, %c0_72] : memref<8x128xf32, #tpu.memory_space<vmem>>, vector<8x128xf32>
    tpu.vector_store %arg13[%c0_71, %c0_72], %243 {strides = array<i32>} : memref<8x128xf32, #tpu.memory_space<vmem>>, vector<8x128xf32>,
    %c0_73 = arith.constant 0 : index
    %c0_74 = arith.constant 0 : index
    %246 = vector.load %arg14[%c0_73, %c0_74] : memref<8x128xf32, #tpu.memory_space<vmem>>, vector<8x128xf32>
    tpu.vector_store %arg14[%c0_73, %c0_74], %241 {strides = array<i32>} : memref<8x128xf32, #tpu.memory_space<vmem>>, vector<8x128xf32>,
    %c0_75 = arith.constant 0 : index
    %c0_76 = arith.constant 0 : index
    %247 = vector.load %arg12[%c0_75, %c0_76] : memref<64x128xf32, #tpu.memory_space<vmem>>, vector<64x128xf32>
    %c0_77 = arith.constant 0 : index
    %c0_78 = arith.constant 0 : index
    %248 = vector.load %arg5[%c0_77, %c0_78] : memref<128x512xf32, #tpu.memory_space<vmem>>, vector<128x512xf32>
    %cst_79 = arith.constant dense<0.000000e+00> : vector<64x512xf32>
    %249 = tpu.matmul %247, %248, %cst_79 {dimension_numbers = #tpu.dot_dimension_numbers<[1], [0], [0], [1], [0, 0, 1, 1], [], []>} : vector<64x128xf32>, vector<128x512xf32>, vector<64x512xf32> -> vector<64x512xf32>
    %c0_80 = arith.constant 0 : index
    %c0_81 = arith.constant 0 : index
    %250 = vector.load %arg7[%c0_80, %c0_81] : memref<1x512xf32, #tpu.memory_space<vmem>>, vector<1x512xf32>
    %251 = vector.broadcast %250 : vector<1x512xf32> to vector<64x512xf32>
    %252 = arith.addf %249, %251 : vector<64x512xf32>
    %c0_82 = arith.constant 0 : index
    %c0_83 = arith.constant 0 : index
    %253 = vector.load %arg11[%c0_82, %c0_83] : memref<64x512xf32, #tpu.memory_space<vmem>>, vector<64x512xf32>
    tpu.vector_store %arg11[%c0_82, %c0_83], %252 {strides = array<i32>} : memref<64x512xf32, #tpu.memory_space<vmem>>, vector<64x512xf32>,
    %c0_84 = arith.constant 0 : index
    %c0_85 = arith.constant 0 : index
    %254 = vector.load %arg6[%c0_84, %c0_85] : memref<128x512xf32, #tpu.memory_space<vmem>>, vector<128x512xf32>
    %c0_86 = arith.constant 0 : index
    %c0_87 = arith.constant 0 : index
    %255 = vector.load %arg15[%c0_86, %c0_87] : memref<8x128xf32, #tpu.memory_space<vmem>>, vector<8x128xf32>
    %c0_88 = arith.constant 0 : index
    %c0_89 = arith.constant 0 : index
    %256 = vector.load %arg16[%c0_88, %c0_89] : memref<8x128xf32, #tpu.memory_space<vmem>>, vector<8x128xf32>
    %c0_90 = arith.constant 0 : index
    %c0_91 = arith.constant 0 : index
    %257 = vector.load %arg11[%c0_90, %c0_91] : memref<64x512xf32, #tpu.memory_space<vmem>>, vector<8x512xf32>
    %cst_92 = arith.constant dense<0.000000e+00> : vector<8x512xf32>
    %258 = tpu.matmul %255, %254, %cst_92 {dimension_numbers = #tpu.dot_dimension_numbers<[1], [0], [0], [1], [0, 0, 1, 1], [], []>} : vector<8x128xf32>, vector<128x512xf32>, vector<8x512xf32> -> vector<8x512xf32>
    %259 = arith.addf %257, %258 : vector<8x512xf32>
    %260 = vector.extract_strided_slice %259 {offsets = [0, 0], sizes = [8, 128], strides = [1, 1]} : vector<8x512xf32> to vector<8x128xf32>
    %261 = arith.negf %260 : vector<8x128xf32>
    %262 = math.exp %261 : vector<8x128xf32>
    %cst_93 = arith.constant 1.000000e+00 : f32
    %263 = vector.broadcast %cst_93 : f32 to vector<8x128xf32>
    %264 = arith.addf %263, %262 : vector<8x128xf32>
    %265 = arith.divf %263, %264 : vector<8x128xf32>
    %266 = vector.extract_strided_slice %259 {offsets = [0, 128], sizes = [8, 128], strides = [1, 1]} : vector<8x512xf32> to vector<8x128xf32>
    %267 = arith.negf %266 : vector<8x128xf32>
    %268 = math.exp %267 : vector<8x128xf32>
    %cst_94 = arith.constant 1.000000e+00 : f32
    %269 = vector.broadcast %cst_94 : f32 to vector<8x128xf32>
    %270 = arith.addf %269, %268 : vector<8x128xf32>
    %271 = arith.divf %269, %270 : vector<8x128xf32>
    %272 = vector.extract_strided_slice %259 {offsets = [0, 256], sizes = [8, 128], strides = [1, 1]} : vector<8x512xf32> to vector<8x128xf32>
    %273 = math.tanh %272 : vector<8x128xf32>
    %274 = vector.extract_strided_slice %259 {offsets = [0, 384], sizes = [8, 128], strides = [1, 1]} : vector<8x512xf32> to vector<8x128xf32>
    %275 = arith.negf %274 : vector<8x128xf32>
    %276 = math.exp %275 : vector<8x128xf32>
    %cst_95 = arith.constant 1.000000e+00 : f32
    %277 = vector.broadcast %cst_95 : f32 to vector<8x128xf32>
    %278 = arith.addf %277, %276 : vector<8x128xf32>
    %279 = arith.divf %277, %278 : vector<8x128xf32>
    %280 = arith.mulf %271, %256 : vector<8x128xf32>
    %281 = arith.mulf %265, %273 : vector<8x128xf32>
    %282 = arith.addf %280, %281 : vector<8x128xf32>
    %283 = math.tanh %282 : vector<8x128xf32>
    %284 = arith.mulf %279, %283 : vector<8x128xf32>
    %c0_96 = arith.constant 0 : index
    %c0_97 = arith.constant 0 : index
    %285 = vector.load %arg12[%c0_96, %c0_97] : memref<64x128xf32, #tpu.memory_space<vmem>>, vector<8x128xf32>
    tpu.vector_store %arg12[%c0_96, %c0_97], %284 {strides = array<i32>} : memref<64x128xf32, #tpu.memory_space<vmem>>, vector<8x128xf32>,
    %c8_98 = arith.constant 8 : index
    %c0_99 = arith.constant 0 : index
    %286 = vector.load %arg11[%c8_98, %c0_99] : memref<64x512xf32, #tpu.memory_space<vmem>>, vector<8x512xf32>
    %cst_100 = arith.constant dense<0.000000e+00> : vector<8x512xf32>
    %287 = tpu.matmul %284, %254, %cst_100 {dimension_numbers = #tpu.dot_dimension_numbers<[1], [0], [0], [1], [0, 0, 1, 1], [], []>} : vector<8x128xf32>, vector<128x512xf32>, vector<8x512xf32> -> vector<8x512xf32>
    %288 = arith.addf %286, %287 : vector<8x512xf32>
    %289 = vector.extract_strided_slice %288 {offsets = [0, 0], sizes = [8, 128], strides = [1, 1]} : vector<8x512xf32> to vector<8x128xf32>
    %290 = arith.negf %289 : vector<8x128xf32>
    %291 = math.exp %290 : vector<8x128xf32>
    %cst_101 = arith.constant 1.000000e+00 : f32
    %292 = vector.broadcast %cst_101 : f32 to vector<8x128xf32>
    %293 = arith.addf %292, %291 : vector<8x128xf32>
    %294 = arith.divf %292, %293 : vector<8x128xf32>
    %295 = vector.extract_strided_slice %288 {offsets = [0, 128], sizes = [8, 128], strides = [1, 1]} : vector<8x512xf32> to vector<8x128xf32>
    %296 = arith.negf %295 : vector<8x128xf32>
    %297 = math.exp %296 : vector<8x128xf32>
    %cst_102 = arith.constant 1.000000e+00 : f32
    %298 = vector.broadcast %cst_102 : f32 to vector<8x128xf32>
    %299 = arith.addf %298, %297 : vector<8x128xf32>
    %300 = arith.divf %298, %299 : vector<8x128xf32>
    %301 = vector.extract_strided_slice %288 {offsets = [0, 256], sizes = [8, 128], strides = [1, 1]} : vector<8x512xf32> to vector<8x128xf32>
    %302 = math.tanh %301 : vector<8x128xf32>
    %303 = vector.extract_strided_slice %288 {offsets = [0, 384], sizes = [8, 128], strides = [1, 1]} : vector<8x512xf32> to vector<8x128xf32>
    %304 = arith.negf %303 : vector<8x128xf32>
    %305 = math.exp %304 : vector<8x128xf32>
    %cst_103 = arith.constant 1.000000e+00 : f32
    %306 = vector.broadcast %cst_103 : f32 to vector<8x128xf32>
    %307 = arith.addf %306, %305 : vector<8x128xf32>
    %308 = arith.divf %306, %307 : vector<8x128xf32>
    %309 = arith.mulf %300, %282 : vector<8x128xf32>
    %310 = arith.mulf %294, %302 : vector<8x128xf32>
    %311 = arith.addf %309, %310 : vector<8x128xf32>
    %312 = math.tanh %311 : vector<8x128xf32>
    %313 = arith.mulf %308, %312 : vector<8x128xf32>
    %c8_104 = arith.constant 8 : index
    %c0_105 = arith.constant 0 : index
    %314 = vector.load %arg12[%c8_104, %c0_105] : memref<64x128xf32, #tpu.memory_space<vmem>>, vector<8x128xf32>
    tpu.vector_store %arg12[%c8_104, %c0_105], %313 {strides = array<i32>} : memref<64x128xf32, #tpu.memory_space<vmem>>, vector<8x128xf32>,
    %c16_106 = arith.constant 16 : index
    %c0_107 = arith.constant 0 : index
    %315 = vector.load %arg11[%c16_106, %c0_107] : memref<64x512xf32, #tpu.memory_space<vmem>>, vector<8x512xf32>
    %cst_108 = arith.constant dense<0.000000e+00> : vector<8x512xf32>
    %316 = tpu.matmul %313, %254, %cst_108 {dimension_numbers = #tpu.dot_dimension_numbers<[1], [0], [0], [1], [0, 0, 1, 1], [], []>} : vector<8x128xf32>, vector<128x512xf32>, vector<8x512xf32> -> vector<8x512xf32>
    %317 = arith.addf %315, %316 : vector<8x512xf32>
    %318 = vector.extract_strided_slice %317 {offsets = [0, 0], sizes = [8, 128], strides = [1, 1]} : vector<8x512xf32> to vector<8x128xf32>
    %319 = arith.negf %318 : vector<8x128xf32>
    %320 = math.exp %319 : vector<8x128xf32>
    %cst_109 = arith.constant 1.000000e+00 : f32
    %321 = vector.broadcast %cst_109 : f32 to vector<8x128xf32>
    %322 = arith.addf %321, %320 : vector<8x128xf32>
    %323 = arith.divf %321, %322 : vector<8x128xf32>
    %324 = vector.extract_strided_slice %317 {offsets = [0, 128], sizes = [8, 128], strides = [1, 1]} : vector<8x512xf32> to vector<8x128xf32>
    %325 = arith.negf %324 : vector<8x128xf32>
    %326 = math.exp %325 : vector<8x128xf32>
    %cst_110 = arith.constant 1.000000e+00 : f32
    %327 = vector.broadcast %cst_110 : f32 to vector<8x128xf32>
    %328 = arith.addf %327, %326 : vector<8x128xf32>
    %329 = arith.divf %327, %328 : vector<8x128xf32>
    %330 = vector.extract_strided_slice %317 {offsets = [0, 256], sizes = [8, 128], strides = [1, 1]} : vector<8x512xf32> to vector<8x128xf32>
    %331 = math.tanh %330 : vector<8x128xf32>
    %332 = vector.extract_strided_slice %317 {offsets = [0, 384], sizes = [8, 128], strides = [1, 1]} : vector<8x512xf32> to vector<8x128xf32>
    %333 = arith.negf %332 : vector<8x128xf32>
    %334 = math.exp %333 : vector<8x128xf32>
    %cst_111 = arith.constant 1.000000e+00 : f32
    %335 = vector.broadcast %cst_111 : f32 to vector<8x128xf32>
    %336 = arith.addf %335, %334 : vector<8x128xf32>
    %337 = arith.divf %335, %336 : vector<8x128xf32>
    %338 = arith.mulf %329, %311 : vector<8x128xf32>
    %339 = arith.mulf %323, %331 : vector<8x128xf32>
    %340 = arith.addf %338, %339 : vector<8x128xf32>
    %341 = math.tanh %340 : vector<8x128xf32>
    %342 = arith.mulf %337, %341 : vector<8x128xf32>
    %c16_112 = arith.constant 16 : index
    %c0_113 = arith.constant 0 : index
    %343 = vector.load %arg12[%c16_112, %c0_113] : memref<64x128xf32, #tpu.memory_space<vmem>>, vector<8x128xf32>
    tpu.vector_store %arg12[%c16_112, %c0_113], %342 {strides = array<i32>} : memref<64x128xf32, #tpu.memory_space<vmem>>, vector<8x128xf32>,
    %c24_114 = arith.constant 24 : index
    %c0_115 = arith.constant 0 : index
    %344 = vector.load %arg11[%c24_114, %c0_115] : memref<64x512xf32, #tpu.memory_space<vmem>>, vector<8x512xf32>
    %cst_116 = arith.constant dense<0.000000e+00> : vector<8x512xf32>
    %345 = tpu.matmul %342, %254, %cst_116 {dimension_numbers = #tpu.dot_dimension_numbers<[1], [0], [0], [1], [0, 0, 1, 1], [], []>} : vector<8x128xf32>, vector<128x512xf32>, vector<8x512xf32> -> vector<8x512xf32>
    %346 = arith.addf %344, %345 : vector<8x512xf32>
    %347 = vector.extract_strided_slice %346 {offsets = [0, 0], sizes = [8, 128], strides = [1, 1]} : vector<8x512xf32> to vector<8x128xf32>
    %348 = arith.negf %347 : vector<8x128xf32>
    %349 = math.exp %348 : vector<8x128xf32>
    %cst_117 = arith.constant 1.000000e+00 : f32
    %350 = vector.broadcast %cst_117 : f32 to vector<8x128xf32>
    %351 = arith.addf %350, %349 : vector<8x128xf32>
    %352 = arith.divf %350, %351 : vector<8x128xf32>
    %353 = vector.extract_strided_slice %346 {offsets = [0, 128], sizes = [8, 128], strides = [1, 1]} : vector<8x512xf32> to vector<8x128xf32>
    %354 = arith.negf %353 : vector<8x128xf32>
    %355 = math.exp %354 : vector<8x128xf32>
    %cst_118 = arith.constant 1.000000e+00 : f32
    %356 = vector.broadcast %cst_118 : f32 to vector<8x128xf32>
    %357 = arith.addf %356, %355 : vector<8x128xf32>
    %358 = arith.divf %356, %357 : vector<8x128xf32>
    %359 = vector.extract_strided_slice %346 {offsets = [0, 256], sizes = [8, 128], strides = [1, 1]} : vector<8x512xf32> to vector<8x128xf32>
    %360 = math.tanh %359 : vector<8x128xf32>
    %361 = vector.extract_strided_slice %346 {offsets = [0, 384], sizes = [8, 128], strides = [1, 1]} : vector<8x512xf32> to vector<8x128xf32>
    %362 = arith.negf %361 : vector<8x128xf32>
    %363 = math.exp %362 : vector<8x128xf32>
    %cst_119 = arith.constant 1.000000e+00 : f32
    %364 = vector.broadcast %cst_119 : f32 to vector<8x128xf32>
    %365 = arith.addf %364, %363 : vector<8x128xf32>
    %366 = arith.divf %364, %365 : vector<8x128xf32>
    %367 = arith.mulf %358, %340 : vector<8x128xf32>
    %368 = arith.mulf %352, %360 : vector<8x128xf32>
    %369 = arith.addf %367, %368 : vector<8x128xf32>
    %370 = math.tanh %369 : vector<8x128xf32>
    %371 = arith.mulf %366, %370 : vector<8x128xf32>
    %c24_120 = arith.constant 24 : index
    %c0_121 = arith.constant 0 : index
    %372 = vector.load %arg12[%c24_120, %c0_121] : memref<64x128xf32, #tpu.memory_space<vmem>>, vector<8x128xf32>
    tpu.vector_store %arg12[%c24_120, %c0_121], %371 {strides = array<i32>} : memref<64x128xf32, #tpu.memory_space<vmem>>, vector<8x128xf32>,
    %c32_122 = arith.constant 32 : index
    %c0_123 = arith.constant 0 : index
    %373 = vector.load %arg11[%c32_122, %c0_123] : memref<64x512xf32, #tpu.memory_space<vmem>>, vector<8x512xf32>
    %cst_124 = arith.constant dense<0.000000e+00> : vector<8x512xf32>
    %374 = tpu.matmul %371, %254, %cst_124 {dimension_numbers = #tpu.dot_dimension_numbers<[1], [0], [0], [1], [0, 0, 1, 1], [], []>} : vector<8x128xf32>, vector<128x512xf32>, vector<8x512xf32> -> vector<8x512xf32>
    %375 = arith.addf %373, %374 : vector<8x512xf32>
    %376 = vector.extract_strided_slice %375 {offsets = [0, 0], sizes = [8, 128], strides = [1, 1]} : vector<8x512xf32> to vector<8x128xf32>
    %377 = arith.negf %376 : vector<8x128xf32>
    %378 = math.exp %377 : vector<8x128xf32>
    %cst_125 = arith.constant 1.000000e+00 : f32
    %379 = vector.broadcast %cst_125 : f32 to vector<8x128xf32>
    %380 = arith.addf %379, %378 : vector<8x128xf32>
    %381 = arith.divf %379, %380 : vector<8x128xf32>
    %382 = vector.extract_strided_slice %375 {offsets = [0, 128], sizes = [8, 128], strides = [1, 1]} : vector<8x512xf32> to vector<8x128xf32>
    %383 = arith.negf %382 : vector<8x128xf32>
    %384 = math.exp %383 : vector<8x128xf32>
    %cst_126 = arith.constant 1.000000e+00 : f32
    %385 = vector.broadcast %cst_126 : f32 to vector<8x128xf32>
    %386 = arith.addf %385, %384 : vector<8x128xf32>
    %387 = arith.divf %385, %386 : vector<8x128xf32>
    %388 = vector.extract_strided_slice %375 {offsets = [0, 256], sizes = [8, 128], strides = [1, 1]} : vector<8x512xf32> to vector<8x128xf32>
    %389 = math.tanh %388 : vector<8x128xf32>
    %390 = vector.extract_strided_slice %375 {offsets = [0, 384], sizes = [8, 128], strides = [1, 1]} : vector<8x512xf32> to vector<8x128xf32>
    %391 = arith.negf %390 : vector<8x128xf32>
    %392 = math.exp %391 : vector<8x128xf32>
    %cst_127 = arith.constant 1.000000e+00 : f32
    %393 = vector.broadcast %cst_127 : f32 to vector<8x128xf32>
    %394 = arith.addf %393, %392 : vector<8x128xf32>
    %395 = arith.divf %393, %394 : vector<8x128xf32>
    %396 = arith.mulf %387, %369 : vector<8x128xf32>
    %397 = arith.mulf %381, %389 : vector<8x128xf32>
    %398 = arith.addf %396, %397 : vector<8x128xf32>
    %399 = math.tanh %398 : vector<8x128xf32>
    %400 = arith.mulf %395, %399 : vector<8x128xf32>
    %c32_128 = arith.constant 32 : index
    %c0_129 = arith.constant 0 : index
    %401 = vector.load %arg12[%c32_128, %c0_129] : memref<64x128xf32, #tpu.memory_space<vmem>>, vector<8x128xf32>
    tpu.vector_store %arg12[%c32_128, %c0_129], %400 {strides = array<i32>} : memref<64x128xf32, #tpu.memory_space<vmem>>, vector<8x128xf32>,
    %c40_130 = arith.constant 40 : index
    %c0_131 = arith.constant 0 : index
    %402 = vector.load %arg11[%c40_130, %c0_131] : memref<64x512xf32, #tpu.memory_space<vmem>>, vector<8x512xf32>
    %cst_132 = arith.constant dense<0.000000e+00> : vector<8x512xf32>
    %403 = tpu.matmul %400, %254, %cst_132 {dimension_numbers = #tpu.dot_dimension_numbers<[1], [0], [0], [1], [0, 0, 1, 1], [], []>} : vector<8x128xf32>, vector<128x512xf32>, vector<8x512xf32> -> vector<8x512xf32>
    %404 = arith.addf %402, %403 : vector<8x512xf32>
    %405 = vector.extract_strided_slice %404 {offsets = [0, 0], sizes = [8, 128], strides = [1, 1]} : vector<8x512xf32> to vector<8x128xf32>
    %406 = arith.negf %405 : vector<8x128xf32>
    %407 = math.exp %406 : vector<8x128xf32>
    %cst_133 = arith.constant 1.000000e+00 : f32
    %408 = vector.broadcast %cst_133 : f32 to vector<8x128xf32>
    %409 = arith.addf %408, %407 : vector<8x128xf32>
    %410 = arith.divf %408, %409 : vector<8x128xf32>
    %411 = vector.extract_strided_slice %404 {offsets = [0, 128], sizes = [8, 128], strides = [1, 1]} : vector<8x512xf32> to vector<8x128xf32>
    %412 = arith.negf %411 : vector<8x128xf32>
    %413 = math.exp %412 : vector<8x128xf32>
    %cst_134 = arith.constant 1.000000e+00 : f32
    %414 = vector.broadcast %cst_134 : f32 to vector<8x128xf32>
    %415 = arith.addf %414, %413 : vector<8x128xf32>
    %416 = arith.divf %414, %415 : vector<8x128xf32>
    %417 = vector.extract_strided_slice %404 {offsets = [0, 256], sizes = [8, 128], strides = [1, 1]} : vector<8x512xf32> to vector<8x128xf32>
    %418 = math.tanh %417 : vector<8x128xf32>
    %419 = vector.extract_strided_slice %404 {offsets = [0, 384], sizes = [8, 128], strides = [1, 1]} : vector<8x512xf32> to vector<8x128xf32>
    %420 = arith.negf %419 : vector<8x128xf32>
    %421 = math.exp %420 : vector<8x128xf32>
    %cst_135 = arith.constant 1.000000e+00 : f32
    %422 = vector.broadcast %cst_135 : f32 to vector<8x128xf32>
    %423 = arith.addf %422, %421 : vector<8x128xf32>
    %424 = arith.divf %422, %423 : vector<8x128xf32>
    %425 = arith.mulf %416, %398 : vector<8x128xf32>
    %426 = arith.mulf %410, %418 : vector<8x128xf32>
    %427 = arith.addf %425, %426 : vector<8x128xf32>
    %428 = math.tanh %427 : vector<8x128xf32>
    %429 = arith.mulf %424, %428 : vector<8x128xf32>
    %c40_136 = arith.constant 40 : index
    %c0_137 = arith.constant 0 : index
    %430 = vector.load %arg12[%c40_136, %c0_137] : memref<64x128xf32, #tpu.memory_space<vmem>>, vector<8x128xf32>
    tpu.vector_store %arg12[%c40_136, %c0_137], %429 {strides = array<i32>} : memref<64x128xf32, #tpu.memory_space<vmem>>, vector<8x128xf32>,
    %c48_138 = arith.constant 48 : index
    %c0_139 = arith.constant 0 : index
    %431 = vector.load %arg11[%c48_138, %c0_139] : memref<64x512xf32, #tpu.memory_space<vmem>>, vector<8x512xf32>
    %cst_140 = arith.constant dense<0.000000e+00> : vector<8x512xf32>
    %432 = tpu.matmul %429, %254, %cst_140 {dimension_numbers = #tpu.dot_dimension_numbers<[1], [0], [0], [1], [0, 0, 1, 1], [], []>} : vector<8x128xf32>, vector<128x512xf32>, vector<8x512xf32> -> vector<8x512xf32>
    %433 = arith.addf %431, %432 : vector<8x512xf32>
    %434 = vector.extract_strided_slice %433 {offsets = [0, 0], sizes = [8, 128], strides = [1, 1]} : vector<8x512xf32> to vector<8x128xf32>
    %435 = arith.negf %434 : vector<8x128xf32>
    %436 = math.exp %435 : vector<8x128xf32>
    %cst_141 = arith.constant 1.000000e+00 : f32
    %437 = vector.broadcast %cst_141 : f32 to vector<8x128xf32>
    %438 = arith.addf %437, %436 : vector<8x128xf32>
    %439 = arith.divf %437, %438 : vector<8x128xf32>
    %440 = vector.extract_strided_slice %433 {offsets = [0, 128], sizes = [8, 128], strides = [1, 1]} : vector<8x512xf32> to vector<8x128xf32>
    %441 = arith.negf %440 : vector<8x128xf32>
    %442 = math.exp %441 : vector<8x128xf32>
    %cst_142 = arith.constant 1.000000e+00 : f32
    %443 = vector.broadcast %cst_142 : f32 to vector<8x128xf32>
    %444 = arith.addf %443, %442 : vector<8x128xf32>
    %445 = arith.divf %443, %444 : vector<8x128xf32>
    %446 = vector.extract_strided_slice %433 {offsets = [0, 256], sizes = [8, 128], strides = [1, 1]} : vector<8x512xf32> to vector<8x128xf32>
    %447 = math.tanh %446 : vector<8x128xf32>
    %448 = vector.extract_strided_slice %433 {offsets = [0, 384], sizes = [8, 128], strides = [1, 1]} : vector<8x512xf32> to vector<8x128xf32>
    %449 = arith.negf %448 : vector<8x128xf32>
    %450 = math.exp %449 : vector<8x128xf32>
    %cst_143 = arith.constant 1.000000e+00 : f32
    %451 = vector.broadcast %cst_143 : f32 to vector<8x128xf32>
    %452 = arith.addf %451, %450 : vector<8x128xf32>
    %453 = arith.divf %451, %452 : vector<8x128xf32>
    %454 = arith.mulf %445, %427 : vector<8x128xf32>
    %455 = arith.mulf %439, %447 : vector<8x128xf32>
    %456 = arith.addf %454, %455 : vector<8x128xf32>
    %457 = math.tanh %456 : vector<8x128xf32>
    %458 = arith.mulf %453, %457 : vector<8x128xf32>
    %c48_144 = arith.constant 48 : index
    %c0_145 = arith.constant 0 : index
    %459 = vector.load %arg12[%c48_144, %c0_145] : memref<64x128xf32, #tpu.memory_space<vmem>>, vector<8x128xf32>
    tpu.vector_store %arg12[%c48_144, %c0_145], %458 {strides = array<i32>} : memref<64x128xf32, #tpu.memory_space<vmem>>, vector<8x128xf32>,
    %c56_146 = arith.constant 56 : index
    %c0_147 = arith.constant 0 : index
    %460 = vector.load %arg11[%c56_146, %c0_147] : memref<64x512xf32, #tpu.memory_space<vmem>>, vector<8x512xf32>
    %cst_148 = arith.constant dense<0.000000e+00> : vector<8x512xf32>
    %461 = tpu.matmul %458, %254, %cst_148 {dimension_numbers = #tpu.dot_dimension_numbers<[1], [0], [0], [1], [0, 0, 1, 1], [], []>} : vector<8x128xf32>, vector<128x512xf32>, vector<8x512xf32> -> vector<8x512xf32>
    %462 = arith.addf %460, %461 : vector<8x512xf32>
    %463 = vector.extract_strided_slice %462 {offsets = [0, 0], sizes = [8, 128], strides = [1, 1]} : vector<8x512xf32> to vector<8x128xf32>
    %464 = arith.negf %463 : vector<8x128xf32>
    %465 = math.exp %464 : vector<8x128xf32>
    %cst_149 = arith.constant 1.000000e+00 : f32
    %466 = vector.broadcast %cst_149 : f32 to vector<8x128xf32>
    %467 = arith.addf %466, %465 : vector<8x128xf32>
    %468 = arith.divf %466, %467 : vector<8x128xf32>
    %469 = vector.extract_strided_slice %462 {offsets = [0, 128], sizes = [8, 128], strides = [1, 1]} : vector<8x512xf32> to vector<8x128xf32>
    %470 = arith.negf %469 : vector<8x128xf32>
    %471 = math.exp %470 : vector<8x128xf32>
    %cst_150 = arith.constant 1.000000e+00 : f32
    %472 = vector.broadcast %cst_150 : f32 to vector<8x128xf32>
    %473 = arith.addf %472, %471 : vector<8x128xf32>
    %474 = arith.divf %472, %473 : vector<8x128xf32>
    %475 = vector.extract_strided_slice %462 {offsets = [0, 256], sizes = [8, 128], strides = [1, 1]} : vector<8x512xf32> to vector<8x128xf32>
    %476 = math.tanh %475 : vector<8x128xf32>
    %477 = vector.extract_strided_slice %462 {offsets = [0, 384], sizes = [8, 128], strides = [1, 1]} : vector<8x512xf32> to vector<8x128xf32>
    %478 = arith.negf %477 : vector<8x128xf32>
    %479 = math.exp %478 : vector<8x128xf32>
    %cst_151 = arith.constant 1.000000e+00 : f32
    %480 = vector.broadcast %cst_151 : f32 to vector<8x128xf32>
    %481 = arith.addf %480, %479 : vector<8x128xf32>
    %482 = arith.divf %480, %481 : vector<8x128xf32>
    %483 = arith.mulf %474, %456 : vector<8x128xf32>
    %484 = arith.mulf %468, %476 : vector<8x128xf32>
    %485 = arith.addf %483, %484 : vector<8x128xf32>
    %486 = math.tanh %485 : vector<8x128xf32>
    %487 = arith.mulf %482, %486 : vector<8x128xf32>
    %c56_152 = arith.constant 56 : index
    %c0_153 = arith.constant 0 : index
    %488 = vector.load %arg12[%c56_152, %c0_153] : memref<64x128xf32, #tpu.memory_space<vmem>>, vector<8x128xf32>
    tpu.vector_store %arg12[%c56_152, %c0_153], %487 {strides = array<i32>} : memref<64x128xf32, #tpu.memory_space<vmem>>, vector<8x128xf32>,
    %c0_154 = arith.constant 0 : index
    %c0_155 = arith.constant 0 : index
    %489 = vector.load %arg15[%c0_154, %c0_155] : memref<8x128xf32, #tpu.memory_space<vmem>>, vector<8x128xf32>
    tpu.vector_store %arg15[%c0_154, %c0_155], %487 {strides = array<i32>} : memref<8x128xf32, #tpu.memory_space<vmem>>, vector<8x128xf32>,
    %c0_156 = arith.constant 0 : index
    %c0_157 = arith.constant 0 : index
    %490 = vector.load %arg16[%c0_156, %c0_157] : memref<8x128xf32, #tpu.memory_space<vmem>>, vector<8x128xf32>
    tpu.vector_store %arg16[%c0_156, %c0_157], %485 {strides = array<i32>} : memref<8x128xf32, #tpu.memory_space<vmem>>, vector<8x128xf32>,
    %c0_158 = arith.constant 0 : index
    %c0_159 = arith.constant 0 : index
    %491 = vector.load %arg12[%c0_158, %c0_159] : memref<64x128xf32, #tpu.memory_space<vmem>>, vector<64x128xf32>
    %c0_160 = arith.constant 0 : index
    %c0_161 = arith.constant 0 : index
    %492 = vector.load %arg8[%c0_160, %c0_161] : memref<128x1xf32, #tpu.memory_space<vmem>>, vector<128x1xf32>
    %cst_162 = arith.constant dense<0.000000e+00> : vector<64x1xf32>
    %493 = tpu.matmul %491, %492, %cst_162 {dimension_numbers = #tpu.dot_dimension_numbers<[1], [0], [0], [1], [0, 0, 1, 1], [], []>} : vector<64x128xf32>, vector<128x1xf32>, vector<64x1xf32> -> vector<64x1xf32>
    %c0_163 = arith.constant 0 : index
    %c0_164 = arith.constant 0 : index
    %494 = vector.load %arg9[%c0_163, %c0_164] : memref<1x1xf32, #tpu.memory_space<vmem>>, vector<1x1xf32>
    %495 = vector.broadcast %494 : vector<1x1xf32> to vector<64x1xf32>
    %496 = arith.addf %493, %495 : vector<64x1xf32>
    %c0_165 = arith.constant 0 : index
    %c0_166 = arith.constant 0 : index
    %497 = vector.load %arg10[%c0_165, %c0_166] : memref<64x1xf32, #tpu.memory_space<vmem>>, vector<64x1xf32>
    tpu.vector_store %arg10[%c0_165, %c0_166], %496 {strides = array<i32>} : memref<64x1xf32, #tpu.memory_space<vmem>>, vector<64x1xf32>,
    return
  }
  func.func @transform_0(%arg0: i32) -> (i32, i32) {
    %c0_i32 = arith.constant 0 : i32
    %c0_i32_0 = arith.constant 0 : i32
    return %arg0, %c0_i32 : i32, i32
  }
  func.func @transform_1(%arg0: i32) -> (i32, i32) {
    %c0_i32 = arith.constant 0 : i32
    %c0_i32_0 = arith.constant 0 : i32
    %c0_i32_1 = arith.constant 0 : i32
    return %c0_i32, %c0_i32_0 : i32, i32
  }
  func.func @transform_2(%arg0: i32) -> (i32, i32) {
    %c0_i32 = arith.constant 0 : i32
    %c0_i32_0 = arith.constant 0 : i32
    %c0_i32_1 = arith.constant 0 : i32
    return %c0_i32, %c0_i32_0 : i32, i32
  }
  func.func @transform_3(%arg0: i32) -> (i32, i32) {
    %c0_i32 = arith.constant 0 : i32
    %c0_i32_0 = arith.constant 0 : i32
    %c0_i32_1 = arith.constant 0 : i32
    return %c0_i32, %c0_i32_0 : i32, i32
  }
  func.func @transform_4(%arg0: i32) -> (i32, i32) {
    %c0_i32 = arith.constant 0 : i32
    %c0_i32_0 = arith.constant 0 : i32
    %c0_i32_1 = arith.constant 0 : i32
    return %c0_i32, %c0_i32_0 : i32, i32
  }
  func.func @transform_5(%arg0: i32) -> (i32, i32) {
    %c0_i32 = arith.constant 0 : i32
    %c0_i32_0 = arith.constant 0 : i32
    %c0_i32_1 = arith.constant 0 : i32
    return %c0_i32, %c0_i32_0 : i32, i32
  }
  func.func @transform_6(%arg0: i32) -> (i32, i32) {
    %c0_i32 = arith.constant 0 : i32
    %c0_i32_0 = arith.constant 0 : i32
    %c0_i32_1 = arith.constant 0 : i32
    return %c0_i32, %c0_i32_0 : i32, i32
  }
  func.func @transform_7(%arg0: i32) -> (i32, i32) {
    %c0_i32 = arith.constant 0 : i32
    %c0_i32_0 = arith.constant 0 : i32
    %c0_i32_1 = arith.constant 0 : i32
    return %c0_i32, %c0_i32_0 : i32, i32
  }
  func.func @transform_8(%arg0: i32) -> (i32, i32) {
    %c0_i32 = arith.constant 0 : i32
    %c0_i32_0 = arith.constant 0 : i32
    %c0_i32_1 = arith.constant 0 : i32
    return %c0_i32, %c0_i32_0 : i32, i32
  }
  func.func @transform_9(%arg0: i32) -> (i32, i32) {
    %c0_i32 = arith.constant 0 : i32
    %c0_i32_0 = arith.constant 0 : i32
    return %arg0, %c0_i32 : i32, i32
  }
}

</mosaic_0001>

<llo_original>
// kernel: tpu_custom_call.1
$region0: #{tpu_custom_call.1}
  #allocation0 [shape = 'u32[]', space=smem, size = 0x4, offset = 0x4, fixed_abs, tag = 'smem constant byte address 0x4 - core index']
  #allocation1 [shape = 'u32[144,128]{1,0:T(1,128)}', space=vmem, size = 0x12000, scoped, tag = 'internal scratch']
  #allocation2 [shape = 'f32[64,512]{1,0:T(8,128)}', space=vmem, size = 0x20000, scoped, tag = 'scratch operand']
  #allocation3 [shape = 'f32[64,128]{1,0:T(8,128)}', space=vmem, size = 0x8000, scoped, tag = 'scratch operand']
  #allocation4 [shape = 'f32[8,128]{1,0:T(8,128)}', space=vmem, size = 0x1000, scoped, tag = 'scratch operand']
  #allocation5 [shape = 'f32[8,128]{1,0:T(8,128)}', space=vmem, size = 0x1000, scoped, tag = 'scratch operand']
  #allocation6 [shape = 'f32[8,128]{1,0:T(8,128)}', space=vmem, size = 0x1000, scoped, tag = 'scratch operand']
  #allocation7 [shape = 'f32[8,128]{1,0:T(8,128)}', space=vmem, size = 0x1000, scoped, tag = 'scratch operand']
  #allocation8 [shape = 'f32[1,1]{1,0:T(1,128)S(1)}', space=vmem, size = 0x200, scoped, tag = 'scoped memory for tpu_custom_call.1']
  %s0 = inlined_call_operand.vmem [shape: f32[64,4], index: 0, kind: input, shape index: {}]
  %s1 = inlined_call_operand.vmem [shape: f32[4,512], index: 1, kind: input, shape index: {}]
  %s2 = inlined_call_operand.hbm [shape: f32[128,512], index: 2, kind: input, shape index: {}]
  %s3 = inlined_call_operand.vmem [shape: f32[1,512], index: 3, kind: input, shape index: {}]
  %s4 = inlined_call_operand.hbm [shape: f32[128,512], index: 4, kind: input, shape index: {}]
  %s5 = inlined_call_operand.hbm [shape: f32[128,512], index: 5, kind: input, shape index: {}]
  %s6 = inlined_call_operand.vmem [shape: f32[1,512], index: 6, kind: input, shape index: {}]
  %s7 = inlined_call_operand.vmem [shape: f32[128,1], index: 7, kind: input, shape index: {}]
  %s8 = inlined_call_operand.<no memory space> [shape: f32[1,1], index: 8, kind: input, shape index: {}]
  %s9 = inlined_call_operand.vmem [shape: f32[64,1], index: 9, kind: output, shape index: {}]
  %s10 = sld [smem:[#allocation0]]
  $region62: #{tpu_custom_call.1} parent=0
    _
  %s12 = ssub.s32 1, %s10
  %s13 = scalar_select 0, %s12, %s10
  %v14 = vstv %s8
  %15 = vst [vmem:[#allocation8] sm:$0x1] %v14
  $region1: #{tpu_custom_call.1} parent=0
    #allocation9 [shape = 'u8[262144]{0}', space=vmem, size = 0x40000, scoped, tag = 'input window, operand 2, single buffered']
    #allocation10 [shape = 's32[1]{0}', space=sflag, size = 0x4, scoped, tag = 'scoped memory for tpu_custom_call.1']
    #allocation11 [shape = 'u8[262144]{0}', space=vmem, size = 0x40000, scoped, tag = 'input window, operand 4, single buffered']
    #allocation12 [shape = 's32[1]{0}', space=sflag, size = 0x4, scoped, tag = 'scoped memory for tpu_custom_call.1']
    #allocation13 [shape = 'u8[262144]{0}', space=vmem, size = 0x40000, scoped, tag = 'input window, operand 5, single buffered']
    %16 = vsyncpa [#allocation10], 0
    %17 = vsyncpa [#allocation12], 0
    // Predicated region
    $region2: #{tpu_custom_call.1} parent=1 // pred_check
      _
    $region3: #{tpu_custom_call.1} parent=1 // pred_check_branch
      %19 = sbr.rel (0) target = $region5
    $region4: #{tpu_custom_call.1} parent=1 // pred_region
      _
    $region5: #{tpu_custom_call.1} parent=1 // pred_fallthru
      _
    // Predicated region
    $region6: #{tpu_custom_call.1} parent=1 // pred_check
      _
    $region7: #{tpu_custom_call.1} parent=1 // pred_check_branch
      %21 = sbr.rel (0) target = $region9
    $region8: #{tpu_custom_call.1} parent=1 // pred_region
      _
    $region9: #{tpu_custom_call.1} parent=1 // pred_fallthru
      _
    // Predicated region
    $region10: #{tpu_custom_call.1} parent=1 // pred_check
      _
    $region11: #{tpu_custom_call.1} parent=1 // pred_check_branch
      %23 = sbr.rel (0) target = $region13
    $region12: #{tpu_custom_call.1} parent=1 // pred_region
      %s25 = ssub.s32 8192, 8192
      %26 = vsyncadd [#allocation10], %s25
      %s27 = sshll.u32 [#allocation9], 4
      %s28 = int_to_ptr.vmem [resolvable:$true] %s27
      %33 = dma.hbm_to_vmem [thread:$0]  %s2, 8192, %s28, [#allocation10], 512, 512, 32
    $region13: #{tpu_custom_call.1} parent=1 // pred_fallthru
      _
    // Predicated region
    $region14: #{tpu_custom_call.1} parent=1 // pred_check
      _
    $region15: #{tpu_custom_call.1} parent=1 // pred_check_branch
      %35 = sbr.rel (0) target = $region17
    $region16: #{tpu_custom_call.1} parent=1 // pred_region
      _
    $region17: #{tpu_custom_call.1} parent=1 // pred_fallthru
      _
    // Predicated region
    $region18: #{tpu_custom_call.1} parent=1 // pred_check
      _
    $region19: #{tpu_custom_call.1} parent=1 // pred_check_branch
      %37 = sbr.rel (0) target = $region21
    $region20: #{tpu_custom_call.1} parent=1 // pred_region
      %s39 = ssub.s32 8192, 8192
      %40 = vsyncadd [#allocation12], %s39
      %s41 = sshll.u32 [#allocation11], 4
      %s42 = int_to_ptr.vmem [resolvable:$true] %s41
      %47 = dma.hbm_to_vmem [thread:$0]  %s4, 8192, %s42, [#allocation12], 512, 512, 32
    $region21: #{tpu_custom_call.1} parent=1 // pred_fallthru
      _
    // Predicated region
    $region22: #{tpu_custom_call.1} parent=1 // pred_check
      _
    $region23: #{tpu_custom_call.1} parent=1 // pred_check_branch
      %49 = sbr.rel (0) target = $region25
    $region24: #{tpu_custom_call.1} parent=1 // pred_region
      %s51 = ssub.s32 8192, 8192
      %52 = vsyncadd [#allocation12], %s51
      %s53 = sshll.u32 [#allocation13], 4
      %s54 = int_to_ptr.vmem [resolvable:$true] %s53
      %59 = dma.hbm_to_vmem [thread:$0]  %s5, 8192, %s54, [#allocation12], 512, 512, 32
    $region25: #{tpu_custom_call.1} parent=1 // pred_fallthru
      _
    // Predicated region
    $region26: #{tpu_custom_call.1} parent=1 // pred_check
      _
    $region27: #{tpu_custom_call.1} parent=1 // pred_check_branch
      %61 = sbr.rel (0) target = $region29
    $region28: #{tpu_custom_call.1} parent=1 // pred_region
      _
    $region29: #{tpu_custom_call.1} parent=1 // pred_fallthru
      _
    // Predicated region
    $region30: #{tpu_custom_call.1} parent=1 // pred_check
      _
    $region31: #{tpu_custom_call.1} parent=1 // pred_check_branch
      %63 = sbr.rel (0) target = $region33
    $region32: #{tpu_custom_call.1} parent=1 // pred_region
      _
    $region33: #{tpu_custom_call.1} parent=1 // pred_fallthru
      _
    // Predicated region
    $region34: #{tpu_custom_call.1} parent=1 // pred_check
      _
    $region35: #{tpu_custom_call.1} parent=1 // pred_check_branch
      %65 = sbr.rel (0) target = $region37
    $region36: #{tpu_custom_call.1} parent=1 // pred_region
      _
    $region37: #{tpu_custom_call.1} parent=1 // pred_fallthru
      _
    // Predicated region
    $region38: #{tpu_custom_call.1} parent=1 // pred_check
      _
    $region39: #{tpu_custom_call.1} parent=1 // pred_check_branch
      %67 = sbr.rel (0) target = $region41
    $region40: #{tpu_custom_call.1} parent=1 // pred_region
      %68 = dma.done [#allocation10], 8192
    $region41: #{tpu_custom_call.1} parent=1 // pred_fallthru
      _
    // Predicated region
    $region42: #{tpu_custom_call.1} parent=1 // pred_check
      _
    $region43: #{tpu_custom_call.1} parent=1 // pred_check_branch
      %70 = sbr.rel (0) target = $region45
    $region44: #{tpu_custom_call.1} parent=1 // pred_region
      %71 = dma.done [#allocation12], 8192
    $region45: #{tpu_custom_call.1} parent=1 // pred_fallthru
      _
    // Predicated region
    $region46: #{tpu_custom_call.1} parent=1 // pred_check
      _
    $region47: #{tpu_custom_call.1} parent=1 // pred_check_branch
      %73 = sbr.rel (0) target = $region49
    $region48: #{tpu_custom_call.1} parent=1 // pred_region
      %74 = dma.done [#allocation12], 8192
    $region49: #{tpu_custom_call.1} parent=1 // pred_fallthru
      _
    %p75 = scmp.eq.s32.totalorder 0, 0
    // Predicated region
    $region50: #{tpu_custom_call.1} parent=1 // pred_check
      %p76 = pneg %p75
    $region51: #{tpu_custom_call.1} parent=1 // pred_check_branch
      %78 = sbr.rel (%p76) target = $region53
    $region52: #{tpu_custom_call.1} parent=1 // pred_region
      %79 = vst [vmem:[#allocation4] sm:$0xff] 0.0
      %80 = vst [vmem:[#allocation5] sm:$0xff] 0.0
      %81 = vst [vmem:[#allocation6] sm:$0xff] 0.0
      %82 = vst [vmem:[#allocation7] sm:$0xff] 0.0
    $region53: #{tpu_custom_call.1} parent=1 // pred_fallthru
      _
    %v83 = vld [vmem:[%s0] sm:$0xff]
    %v84 = vld [vmem:[%s0 + $0x8] sm:$0xff]
    %v85 = vld [vmem:[%s0 + $0x10] sm:$0xff]
    %v86 = vld [vmem:[%s0 + $0x18] sm:$0xff]
    %v87 = vld [vmem:[%s0 + $0x20] sm:$0xff]
    %v88 = vld [vmem:[%s0 + $0x28] sm:$0xff]
    %v89 = vld [vmem:[%s0 + $0x30] sm:$0xff]
    %v90 = vld [vmem:[%s0 + $0x38] sm:$0xff]
    %v91 = vld [vmem:[%s1] sm:$0xff]
    %v92 = vld [vmem:[%s1 + $0x8] sm:$0xff]
    %v93 = vld [vmem:[%s3] sm:$0xf]
    %v95 = vlaneseq
    %v96 = vshrl.u32 %v95, 7
    %v97 = vsub.s32 0, %v96
    %v98 = vrot.slane %v93, %v97
    %v99 = vlaneseq
    %v100 = vshrl.u32 %v99, 7
    %v101 = vsub.s32 1, %v100
    %v102 = vrot.slane %v93, %v101
    %v103 = vlaneseq
    %v104 = vshrl.u32 %v103, 7
    %v105 = vsub.s32 2, %v104
    %v106 = vrot.slane %v93, %v105
    %v107 = vlaneseq
    %v108 = vshrl.u32 %v107, 7
    %v109 = vsub.s32 3, %v108
    %v110 = vrot.slane %v93, %v109
    %v117 = vcombine.high %v91, %v91
    %v118 = vcombine.high %v92, %v92
    %vm119 = vcmask 31744
    %v121 = vsel %vm119, %v83, 0
    %v124 = vsel %vm119, %v84, 0
    %v127 = vsel %vm119, %v85, 0
    %v130 = vsel %vm119, %v86, 0
    %v133 = vsel %vm119, %v87, 0
    %v136 = vsel %vm119, %v88, 0
    %v139 = vsel %vm119, %v89, 0
    %v142 = vsel %vm119, %v90, 0
    %vm144 = vcmask 1043456
    %v145 = vsel %vm144, %v91, 0
    %v147 = vsel %vm144, %v117, 0
    %v149 = vsel %vm144, %v92, 0
    %v151 = vsel %vm144, %v118, 0
    %153 = vmatprep.subr.mxu0 %v147
    %154 = vmatpush1.msra.mxu0 %v145
    %155 = vmatprep.subr.mxu0 0.0
    %156 = vmatpush1.msra.mxu0 0.0
    %157 = vmatprep.subr.mxu0 0.0
    %158 = vmatpush1.msra.mxu0 0.0
    %159 = vmatprep.subr.mxu0 0.0
    %160 = vmatpush1.msra.mxu0 0.0
    %161 = vmatprep.subr.mxu0 0.0
    %162 = vmatpush1.msra.mxu0 0.0
    %163 = vmatprep.subr.mxu0 0.0
    %164 = vmatpush1.msra.mxu0 0.0
    %165 = vmatprep.subr.mxu0 0.0
    %166 = vmatpush1.msra.mxu0 0.0
    %167 = vmatprep.subr.mxu0 0.0
    %168 = vmatpush1.msra.mxu0 0.0
    %169 = vmatprep.subr.mxu0 0.0
    %170 = vmatpush1.msra.mxu0 0.0
    %171 = vmatprep.subr.mxu0 0.0
    %172 = vmatpush1.msra.mxu0 0.0
    %173 = vmatprep.subr.mxu0 0.0
    %174 = vmatpush1.msra.mxu0 0.0
    %175 = vmatprep.subr.mxu0 0.0
    %176 = vmatpush1.msra.mxu0 0.0
    %177 = vmatprep.subr.mxu0 0.0
    %178 = vmatpush1.msra.mxu0 0.0
    %179 = vmatprep.subr.mxu0 0.0
    %180 = vmatpush1.msra.mxu0 0.0
    %181 = vmatprep.subr.mxu0 0.0
    %182 = vmatpush1.msra.mxu0 0.0
    %183 = vmatprep.subr.mxu0 0.0
    %184 = vmatpush1.msra.mxu0 0.0
    %185 = vmatprep.subr.mxu0 0.0
    %186 = vmatpush1.msra.mxu0 0.0
    %187 = vmatprep.subr.mxu0 0.0
    %188 = vmatpush1.msra.mxu0 0.0
    %189 = vmatprep.subr.mxu0 0.0
    %190 = vmatpush1.msra.mxu0 0.0
    %191 = vmatprep.subr.mxu0 0.0
    %192 = vmatpush1.msra.mxu0 0.0
    %193 = vmatprep.subr.mxu0 0.0
    %194 = vmatpush1.msra.mxu0 0.0
    %195 = vmatprep.subr.mxu0 0.0
    %196 = vmatpush1.msra.mxu0 0.0
    %197 = vmatprep.subr.mxu0 0.0
    %198 = vmatpush1.msra.mxu0 0.0
    %199 = vmatprep.subr.mxu0 0.0
    %200 = vmatpush1.msra.mxu0 0.0
    %201 = vmatprep.subr.mxu0 0.0
    %202 = vmatpush1.msra.mxu0 0.0
    %203 = vmatprep.subr.mxu0 0.0
    %204 = vmatpush1.msra.mxu0 0.0
    %205 = vmatprep.subr.mxu0 0.0
    %206 = vmatpush1.msra.mxu0 0.0
    %207 = vmatprep.subr.mxu0 0.0
    %208 = vmatpush1.msra.mxu0 0.0
    %209 = vmatprep.subr.mxu0 0.0
    %210 = vmatpush1.msra.mxu0 0.0
    %211 = vmatprep.subr.mxu0 0.0
    %212 = vmatpush1.msra.mxu0 0.0
    %213 = vmatprep.subr.mxu0 0.0
    %214 = vmatpush1.msra.mxu0 0.0
    %215 = vmatprep.subr.mxu0 0.0
    %216 = vmatpush1.msra.mxu0 0.0
    %217 = vmatprep.mubr.f32.mxu0 0.0
    %218 = vmatmul.mubr.f32.gmra.mrb[0].mxu0 %v121
    %v219 = vpop.f32.mrb[0].mxu0
    %v220 = vadd.f32 %v98, %v219
    %v221 = vpop.f32.mrb[0].mxu0
    %v222 = vadd.f32 %v102, %v221
    %223 = vmatprep.mubr.f32.mxu0 0.0
    %224 = vmatmul.mubr.f32.gmra.mrb[0].mxu0 %v124
    %v225 = vpop.f32.mrb[0].mxu0
    %v226 = vadd.f32 %v98, %v225
    %v227 = vpop.f32.mrb[0].mxu0
    %v228 = vadd.f32 %v102, %v227
    %229 = vmatprep.mubr.f32.mxu0 0.0
    %230 = vmatmul.mubr.f32.gmra.mrb[0].mxu0 %v127
    %v231 = vpop.f32.mrb[0].mxu0
    %v232 = vadd.f32 %v98, %v231
    %v233 = vpop.f32.mrb[0].mxu0
    %v234 = vadd.f32 %v102, %v233
    %235 = vmatprep.mubr.f32.mxu0 0.0
    %236 = vmatmul.mubr.f32.gmra.mrb[0].mxu0 %v130
    %v237 = vpop.f32.mrb[0].mxu0
    %v238 = vadd.f32 %v98, %v237
    %v239 = vpop.f32.mrb[0].mxu0
    %v240 = vadd.f32 %v102, %v239
    %241 = vmatprep.mubr.f32.mxu0 0.0
    %242 = vmatmul.mubr.f32.gmra.mrb[0].mxu0 %v133
    %v243 = vpop.f32.mrb[0].mxu0
    %v244 = vadd.f32 %v98, %v243
    %v245 = vpop.f32.mrb[0].mxu0
    %v246 = vadd.f32 %v102, %v245
    %247 = vmatprep.mubr.f32.mxu0 0.0
    %248 = vmatmul.mubr.f32.gmra.mrb[0].mxu0 %v136
    %v249 = vpop.f32.mrb[0].mxu0
    %v250 = vadd.f32 %v98, %v249
    %v251 = vpop.f32.mrb[0].mxu0
    %v252 = vadd.f32 %v102, %v251
    %253 = vmatprep.mubr.f32.mxu0 0.0
    %254 = vmatmul.mubr.f32.gmra.mrb[0].mxu0 %v139
    %v255 = vpop.f32.mrb[0].mxu0
    %v256 = vadd.f32 %v98, %v255
    %v257 = vpop.f32.mrb[0].mxu0
    %v258 = vadd.f32 %v102, %v257
    %259 = vmatprep.mubr.f32.mxu0 0.0
    %260 = vmatmul.mubr.f32.gmra.mrb[0].mxu0 %v142
    %v261 = vpop.f32.mrb[0].mxu0
    %v262 = vadd.f32 %v98, %v261
    %v263 = vpop.f32.mrb[0].mxu0
    %v264 = vadd.f32 %v102, %v263
    %265 = vdwg.mxu0
    %266 = vmatprep.subr.mxu0 %v151
    %267 = vmatpush1.msra.mxu0 %v149
    %268 = vmatprep.subr.mxu0 0.0
    %269 = vmatpush1.msra.mxu0 0.0
    %270 = vmatprep.subr.mxu0 0.0
    %271 = vmatpush1.msra.mxu0 0.0
    %272 = vmatprep.subr.mxu0 0.0
    %273 = vmatpush1.msra.mxu0 0.0
    %274 = vmatprep.subr.mxu0 0.0
    %275 = vmatpush1.msra.mxu0 0.0
    %276 = vmatprep.subr.mxu0 0.0
    %277 = vmatpush1.msra.mxu0 0.0
    %278 = vmatprep.subr.mxu0 0.0
    %279 = vmatpush1.msra.mxu0 0.0
    %280 = vmatprep.subr.mxu0 0.0
    %281 = vmatpush1.msra.mxu0 0.0
    %282 = vmatprep.subr.mxu0 0.0
    %283 = vmatpush1.msra.mxu0 0.0
    %284 = vmatprep.subr.mxu0 0.0
    %285 = vmatpush1.msra.mxu0 0.0
    %286 = vmatprep.subr.mxu0 0.0
    %287 = vmatpush1.msra.mxu0 0.0
    %288 = vmatprep.subr.mxu0 0.0
    %289 = vmatpush1.msra.mxu0 0.0
    %290 = vmatprep.subr.mxu0 0.0
    %291 = vmatpush1.msra.mxu0 0.0
    %292 = vmatprep.subr.mxu0 0.0
    %293 = vmatpush1.msra.mxu0 0.0
    %294 = vmatprep.subr.mxu0 0.0
    %295 = vmatpush1.msra.mxu0 0.0
    %296 = vmatprep.subr.mxu0 0.0
    %297 = vmatpush1.msra.mxu0 0.0
    %298 = vmatprep.subr.mxu0 0.0
    %299 = vmatpush1.msra.mxu0 0.0
    %300 = vmatprep.subr.mxu0 0.0
    %301 = vmatpush1.msra.mxu0 0.0
    %302 = vmatprep.subr.mxu0 0.0
    %303 = vmatpush1.msra.mxu0 0.0
    %304 = vmatprep.subr.mxu0 0.0
    %305 = vmatpush1.msra.mxu0 0.0
    %306 = vmatprep.subr.mxu0 0.0
    %307 = vmatpush1.msra.mxu0 0.0
    %308 = vmatprep.subr.mxu0 0.0
    %309 = vmatpush1.msra.mxu0 0.0
    %310 = vmatprep.subr.mxu0 0.0
    %311 = vmatpush1.msra.mxu0 0.0
    %312 = vmatprep.subr.mxu0 0.0
    %313 = vmatpush1.msra.mxu0 0.0
    %314 = vmatprep.subr.mxu0 0.0
    %315 = vmatpush1.msra.mxu0 0.0
    %316 = vmatprep.subr.mxu0 0.0
    %317 = vmatpush1.msra.mxu0 0.0
    %318 = vmatprep.subr.mxu0 0.0
    %319 = vmatpush1.msra.mxu0 0.0
    %320 = vmatprep.subr.mxu0 0.0
    %321 = vmatpush1.msra.mxu0 0.0
    %322 = vmatprep.subr.mxu0 0.0
    %323 = vmatpush1.msra.mxu0 0.0
    %324 = vmatprep.subr.mxu0 0.0
    %325 = vmatpush1.msra.mxu0 0.0
    %326 = vmatprep.subr.mxu0 0.0
    %327 = vmatpush1.msra.mxu0 0.0
    %328 = vmatprep.subr.mxu0 0.0
    %329 = vmatpush1.msra.mxu0 0.0
    %330 = vmatprep.mubr.f32.mxu0 0.0
    %331 = vmatmul.mubr.f32.gmra.mrb[0].mxu0 %v121
    %v332 = vpop.f32.mrb[0].mxu0
    %v333 = vadd.f32 %v106, %v332
    %v334 = vpop.f32.mrb[0].mxu0
    %v335 = vadd.f32 %v110, %v334
    %336 = vmatprep.mubr.f32.mxu0 0.0
    %337 = vmatmul.mubr.f32.gmra.mrb[0].mxu0 %v124
    %v338 = vpop.f32.mrb[0].mxu0
    %v339 = vadd.f32 %v106, %v338
    %v340 = vpop.f32.mrb[0].mxu0
    %v341 = vadd.f32 %v110, %v340
    %342 = vmatprep.mubr.f32.mxu0 0.0
    %343 = vmatmul.mubr.f32.gmra.mrb[0].mxu0 %v127
    %v344 = vpop.f32.mrb[0].mxu0
    %v345 = vadd.f32 %v106, %v344
    %v346 = vpop.f32.mrb[0].mxu0
    %v347 = vadd.f32 %v110, %v346
    %348 = vmatprep.mubr.f32.mxu0 0.0
    %349 = vmatmul.mubr.f32.gmra.mrb[0].mxu0 %v130
    %v350 = vpop.f32.mrb[0].mxu0
    %v351 = vadd.f32 %v106, %v350
    %v352 = vpop.f32.mrb[0].mxu0
    %v353 = vadd.f32 %v110, %v352
    %354 = vmatprep.mubr.f32.mxu0 0.0
    %355 = vmatmul.mubr.f32.gmra.mrb[0].mxu0 %v133
    %v356 = vpop.f32.mrb[0].mxu0
    %v357 = vadd.f32 %v106, %v356
    %v358 = vpop.f32.mrb[0].mxu0
    %v359 = vadd.f32 %v110, %v358
    %360 = vmatprep.mubr.f32.mxu0 0.0
    %361 = vmatmul.mubr.f32.gmra.mrb[0].mxu0 %v136
    %v362 = vpop.f32.mrb[0].mxu0
    %v363 = vadd.f32 %v106, %v362
    %v364 = vpop.f32.mrb[0].mxu0
    %v365 = vadd.f32 %v110, %v364
    %366 = vmatprep.mubr.f32.mxu0 0.0
    %367 = vmatmul.mubr.f32.gmra.mrb[0].mxu0 %v139
    %v368 = vpop.f32.mrb[0].mxu0
    %v369 = vadd.f32 %v106, %v368
    %v370 = vpop.f32.mrb[0].mxu0
    %v371 = vadd.f32 %v110, %v370
    %372 = vmatprep.mubr.f32.mxu0 0.0
    %373 = vmatmul.mubr.f32.gmra.mrb[0].mxu0 %v142
    %v374 = vpop.f32.mrb[0].mxu0
    %v375 = vadd.f32 %v106, %v374
    %v376 = vpop.f32.mrb[0].mxu0
    %v377 = vadd.f32 %v110, %v376
    %378 = vdwg.mxu0
    %379 = vst [vmem:[#allocation2] sm:$0xff] %v220
    %380 = vst [vmem:[#allocation2 + $0x8] sm:$0xff] %v222
    %381 = vst [vmem:[#allocation2 + $0x10] sm:$0xff] %v333
    %382 = vst [vmem:[#allocation2 + $0x18] sm:$0xff] %v335
    %383 = vst [vmem:[#allocation2 + $0x20] sm:$0xff] %v226
    %384 = vst [vmem:[#allocation2 + $0x28] sm:$0xff] %v228
    %385 = vst [vmem:[#allocation2 + $0x30] sm:$0xff] %v339
    %386 = vst [vmem:[#allocation2 + $0x38] sm:$0xff] %v341
    %387 = vst [vmem:[#allocation2 + $0x40] sm:$0xff] %v232
    %388 = vst [vmem:[#allocation2 + $0x48] sm:$0xff] %v234
    %389 = vst [vmem:[#allocation2 + $0x50] sm:$0xff] %v345
    %390 = vst [vmem:[#allocation2 + $0x58] sm:$0xff] %v347
    %391 = vst [vmem:[#allocation2 + $0x60] sm:$0xff] %v238
    %392 = vst [vmem:[#allocation2 + $0x68] sm:$0xff] %v240
    %393 = vst [vmem:[#allocation2 + $0x70] sm:$0xff] %v351
    %394 = vst [vmem:[#allocation2 + $0x78] sm:$0xff] %v353
    %395 = vst [vmem:[#allocation2 + $0x80] sm:$0xff] %v244
    %396 = vst [vmem:[#allocation2 + $0x88] sm:$0xff] %v246
    %397 = vst [vmem:[#allocation2 + $0x90] sm:$0xff] %v357
    %398 = vst [vmem:[#allocation2 + $0x98] sm:$0xff] %v359
    %399 = vst [vmem:[#allocation2 + $0xa0] sm:$0xff] %v250
    %400 = vst [vmem:[#allocation2 + $0xa8] sm:$0xff] %v252
    %401 = vst [vmem:[#allocation2 + $0xb0] sm:$0xff] %v363
    %402 = vst [vmem:[#allocation2 + $0xb8] sm:$0xff] %v365
    %403 = vst [vmem:[#allocation2 + $0xc0] sm:$0xff] %v256
    %404 = vst [vmem:[#allocation2 + $0xc8] sm:$0xff] %v258
    %405 = vst [vmem:[#allocation2 + $0xd0] sm:$0xff] %v369
    %406 = vst [vmem:[#allocation2 + $0xd8] sm:$0xff] %v371
    %407 = vst [vmem:[#allocation2 + $0xe0] sm:$0xff] %v262
    %408 = vst [vmem:[#allocation2 + $0xe8] sm:$0xff] %v264
    %409 = vst [vmem:[#allocation2 + $0xf0] sm:$0xff] %v375
    %410 = vst [vmem:[#allocation2 + $0xf8] sm:$0xff] %v377
    %v411 = vld [vmem:[#allocation9] sm:$0xff]
    %v412 = vld [vmem:[#allocation9 + $0x8] sm:$0xff]
    %v413 = vld [vmem:[#allocation9 + $0x10] sm:$0xff]
    %v414 = vld [vmem:[#allocation9 + $0x18] sm:$0xff]
    %v415 = vld [vmem:[#allocation9 + $0x20] sm:$0xff]
    %v416 = vld [vmem:[#allocation9 + $0x28] sm:$0xff]
    %v417 = vld [vmem:[#allocation9 + $0x30] sm:$0xff]
    %v418 = vld [vmem:[#allocation9 + $0x38] sm:$0xff]
    %v419 = vld [vmem:[#allocation9 + $0x40] sm:$0xff]
    %v420 = vld [vmem:[#allocation9 + $0x48] sm:$0xff]
    %v421 = vld [vmem:[#allocation9 + $0x50] sm:$0xff]
    %v422 = vld [vmem:[#allocation9 + $0x58] sm:$0xff]
    %v423 = vld [vmem:[#allocation9 + $0x60] sm:$0xff]
    %v424 = vld [vmem:[#allocation9 + $0x68] sm:$0xff]
    %v425 = vld [vmem:[#allocation9 + $0x70] sm:$0xff]
    %v426 = vld [vmem:[#allocation9 + $0x78] sm:$0xff]
    %v427 = vld [vmem:[#allocation9 + $0x80] sm:$0xff]
    %v428 = vld [vmem:[#allocation9 + $0x88] sm:$0xff]
    %v429 = vld [vmem:[#allocation9 + $0x90] sm:$0xff]
    %v430 = vld [vmem:[#allocation9 + $0x98] sm:$0xff]
    %v431 = vld [vmem:[#allocation9 + $0xa0] sm:$0xff]
    %v432 = vld [vmem:[#allocation9 + $0xa8] sm:$0xff]
    %v433 = vld [vmem:[#allocation9 + $0xb0] sm:$0xff]
    %v434 = vld [vmem:[#allocation9 + $0xb8] sm:$0xff]
    %v435 = vld [vmem:[#allocation9 + $0xc0] sm:$0xff]
    %v436 = vld [vmem:[#allocation9 + $0xc8] sm:$0xff]
    %v437 = vld [vmem:[#allocation9 + $0xd0] sm:$0xff]
    %v438 = vld [vmem:[#allocation9 + $0xd8] sm:$0xff]
    %v439 = vld [vmem:[#allocation9 + $0xe0] sm:$0xff]
    %v440 = vld [vmem:[#allocation9 + $0xe8] sm:$0xff]
    %v441 = vld [vmem:[#allocation9 + $0xf0] sm:$0xff]
    %v442 = vld [vmem:[#allocation9 + $0xf8] sm:$0xff]
    %v443 = vld [vmem:[#allocation9 + $0x100] sm:$0xff]
    %v444 = vld [vmem:[#allocation9 + $0x108] sm:$0xff]
    %v445 = vld [vmem:[#allocation9 + $0x110] sm:$0xff]
    %v446 = vld [vmem:[#allocation9 + $0x118] sm:$0xff]
    %v447 = vld [vmem:[#allocation9 + $0x120] sm:$0xff]
    %v448 = vld [vmem:[#allocation9 + $0x128] sm:$0xff]
    %v449 = vld [vmem:[#allocation9 + $0x130] sm:$0xff]
    %v450 = vld [vmem:[#allocation9 + $0x138] sm:$0xff]
    %v451 = vld [vmem:[#allocation9 + $0x140] sm:$0xff]
    %v452 = vld [vmem:[#allocation9 + $0x148] sm:$0xff]
    %v453 = vld [vmem:[#allocation9 + $0x150] sm:$0xff]
    %v454 = vld [vmem:[#allocation9 + $0x158] sm:$0xff]
    %v455 = vld [vmem:[#allocation9 + $0x160] sm:$0xff]
    %v456 = vld [vmem:[#allocation9 + $0x168] sm:$0xff]
    %v457 = vld [vmem:[#allocation9 + $0x170] sm:$0xff]
    %v458 = vld [vmem:[#allocation9 + $0x178] sm:$0xff]
    %v459 = vld [vmem:[#allocation9 + $0x180] sm:$0xff]
    %v460 = vld [vmem:[#allocation9 + $0x188] sm:$0xff]
    %v461 = vld [vmem:[#allocation9 + $0x190] sm:$0xff]
    %v462 = vld [vmem:[#allocation9 + $0x198] sm:$0xff]
    %v463 = vld [vmem:[#allocation9 + $0x1a0] sm:$0xff]
    %v464 = vld [vmem:[#allocation9 + $0x1a8] sm:$0xff]
    %v465 = vld [vmem:[#allocation9 + $0x1b0] sm:$0xff]
    %v466 = vld [vmem:[#allocation9 + $0x1b8] sm:$0xff]
    %v467 = vld [vmem:[#allocation9 + $0x1c0] sm:$0xff]
    %v468 = vld [vmem:[#allocation9 + $0x1c8] sm:$0xff]
    %v469 = vld [vmem:[#allocation9 + $0x1d0] sm:$0xff]
    %v470 = vld [vmem:[#allocation9 + $0x1d8] sm:$0xff]
    %v471 = vld [vmem:[#allocation9 + $0x1e0] sm:$0xff]
    %v472 = vld [vmem:[#allocation9 + $0x1e8] sm:$0xff]
    %v473 = vld [vmem:[#allocation9 + $0x1f0] sm:$0xff]
    %v474 = vld [vmem:[#allocation9 + $0x1f8] sm:$0xff]
    %v475 = vld [vmem:[#allocation4] sm:$0xff]
    %v476 = vld [vmem:[#allocation5] sm:$0xff]
    %v477 = vld [vmem:[#allocation2] sm:$0xff]
    %v478 = vld [vmem:[#allocation2 + $0x8] sm:$0xff]
    %v479 = vld [vmem:[#allocation2 + $0x10] sm:$0xff]
    %v480 = vld [vmem:[#allocation2 + $0x18] sm:$0xff]
    %481 = vmatprep.subr.mxu0 %v412
    %482 = vmatpush1.msra.mxu0 %v411
    %483 = vmatprep.subr.mxu0 %v416
    %484 = vmatpush1.msra.mxu0 %v415
    %485 = vmatprep.subr.mxu0 %v420
    %486 = vmatpush1.msra.mxu0 %v419
    %487 = vmatprep.subr.mxu0 %v424
    %488 = vmatpush1.msra.mxu0 %v423
    %489 = vmatprep.subr.mxu0 %v428
    %490 = vmatpush1.msra.mxu0 %v427
    %491 = vmatprep.subr.mxu0 %v432
    %492 = vmatpush1.msra.mxu0 %v431
    %493 = vmatprep.subr.mxu0 %v436
    %494 = vmatpush1.msra.mxu0 %v435
    %495 = vmatprep.subr.mxu0 %v440
    %496 = vmatpush1.msra.mxu0 %v439
    %497 = vmatprep.subr.mxu0 %v444
    %498 = vmatpush1.msra.mxu0 %v443
    %499 = vmatprep.subr.mxu0 %v448
    %500 = vmatpush1.msra.mxu0 %v447
    %501 = vmatprep.subr.mxu0 %v452
    %502 = vmatpush1.msra.mxu0 %v451
    %503 = vmatprep.subr.mxu0 %v456
    %504 = vmatpush1.msra.mxu0 %v455
    %505 = vmatprep.subr.mxu0 %v460
    %506 = vmatpush1.msra.mxu0 %v459
    %507 = vmatprep.subr.mxu0 %v464
    %508 = vmatpush1.msra.mxu0 %v463
    %509 = vmatprep.subr.mxu0 %v468
    %510 = vmatpush1.msra.mxu0 %v467
    %511 = vmatprep.subr.mxu0 %v472
    %512 = vmatpush1.msra.mxu0 %v471
    %513 = vmatprep.subr.mxu0 0.0
    %514 = vmatpush1.msra.mxu0 0.0
    %515 = vmatprep.subr.mxu0 0.0
    %516 = vmatpush1.msra.mxu0 0.0
    %517 = vmatprep.subr.mxu0 0.0
    %518 = vmatpush1.msra.mxu0 0.0
    %519 = vmatprep.subr.mxu0 0.0
    %520 = vmatpush1.msra.mxu0 0.0
    %521 = vmatprep.subr.mxu0 0.0
    %522 = vmatpush1.msra.mxu0 0.0
    %523 = vmatprep.subr.mxu0 0.0
    %524 = vmatpush1.msra.mxu0 0.0
    %525 = vmatprep.subr.mxu0 0.0
    %526 = vmatpush1.msra.mxu0 0.0
    %527 = vmatprep.subr.mxu0 0.0
    %528 = vmatpush1.msra.mxu0 0.0
    %529 = vmatprep.subr.mxu0 0.0
    %530 = vmatpush1.msra.mxu0 0.0
    %531 = vmatprep.subr.mxu0 0.0
    %532 = vmatpush1.msra.mxu0 0.0
    %533 = vmatprep.subr.mxu0 0.0
    %534 = vmatpush1.msra.mxu0 0.0
    %535 = vmatprep.subr.mxu0 0.0
    %536 = vmatpush1.msra.mxu0 0.0
    %537 = vmatprep.subr.mxu0 0.0
    %538 = vmatpush1.msra.mxu0 0.0
    %539 = vmatprep.subr.mxu0 0.0
    %540 = vmatpush1.msra.mxu0 0.0
    %541 = vmatprep.subr.mxu0 0.0
    %542 = vmatpush1.msra.mxu0 0.0
    %543 = vmatprep.subr.mxu0 0.0
    %544 = vmatpush1.msra.mxu0 0.0
    %545 = vmatprep.mubr.f32.mxu0 0.0
    %546 = vmatmul.mubr.f32.gmra.mrb[0].mxu0 %v475
    %v547 = vpop.f32.mrb[0].mxu0
    %v548 = vadd.f32 0.0, %v547
    %v549 = vpop.f32.mrb[0].mxu0
    %v550 = vadd.f32 0.0, %v549
    %551 = vdwg.mxu0
    %552 = vmatprep.subr.mxu0 %v414
    %553 = vmatpush1.msra.mxu0 %v413
    %554 = vmatprep.subr.mxu0 %v418
    %555 = vmatpush1.msra.mxu0 %v417
    %556 = vmatprep.subr.mxu0 %v422
    %557 = vmatpush1.msra.mxu0 %v421
    %558 = vmatprep.subr.mxu0 %v426
    %559 = vmatpush1.msra.mxu0 %v425
    %560 = vmatprep.subr.mxu0 %v430
    %561 = vmatpush1.msra.mxu0 %v429
    %562 = vmatprep.subr.mxu0 %v434
    %563 = vmatpush1.msra.mxu0 %v433
    %564 = vmatprep.subr.mxu0 %v438
    %565 = vmatpush1.msra.mxu0 %v437
    %566 = vmatprep.subr.mxu0 %v442
    %567 = vmatpush1.msra.mxu0 %v441
    %568 = vmatprep.subr.mxu0 %v446
    %569 = vmatpush1.msra.mxu0 %v445
    %570 = vmatprep.subr.mxu0 %v450
    %571 = vmatpush1.msra.mxu0 %v449
    %572 = vmatprep.subr.mxu0 %v454
    %573 = vmatpush1.msra.mxu0 %v453
    %574 = vmatprep.subr.mxu0 %v458
    %575 = vmatpush1.msra.mxu0 %v457
    %576 = vmatprep.subr.mxu0 %v462
    %577 = vmatpush1.msra.mxu0 %v461
    %578 = vmatprep.subr.mxu0 %v466
    %579 = vmatpush1.msra.mxu0 %v465
    %580 = vmatprep.subr.mxu0 %v470
    %581 = vmatpush1.msra.mxu0 %v469
    %582 = vmatprep.subr.mxu0 %v474
    %583 = vmatpush1.msra.mxu0 %v473
    %584 = vmatprep.subr.mxu0 0.0
    %585 = vmatpush1.msra.mxu0 0.0
    %586 = vmatprep.subr.mxu0 0.0
    %587 = vmatpush1.msra.mxu0 0.0
    %588 = vmatprep.subr.mxu0 0.0
    %589 = vmatpush1.msra.mxu0 0.0
    %590 = vmatprep.subr.mxu0 0.0
    %591 = vmatpush1.msra.mxu0 0.0
    %592 = vmatprep.subr.mxu0 0.0
    %593 = vmatpush1.msra.mxu0 0.0
    %594 = vmatprep.subr.mxu0 0.0
    %595 = vmatpush1.msra.mxu0 0.0
    %596 = vmatprep.subr.mxu0 0.0
    %597 = vmatpush1.msra.mxu0 0.0
    %598 = vmatprep.subr.mxu0 0.0
    %599 = vmatpush1.msra.mxu0 0.0
    %600 = vmatprep.subr.mxu0 0.0
    %601 = vmatpush1.msra.mxu0 0.0
    %602 = vmatprep.subr.mxu0 0.0
    %603 = vmatpush1.msra.mxu0 0.0
    %604 = vmatprep.subr.mxu0 0.0
    %605 = vmatpush1.msra.mxu0 0.0
    %606 = vmatprep.subr.mxu0 0.0
    %607 = vmatpush1.msra.mxu0 0.0
    %608 = vmatprep.subr.mxu0 0.0
    %609 = vmatpush1.msra.mxu0 0.0
    %610 = vmatprep.subr.mxu0 0.0
    %611 = vmatpush1.msra.mxu0 0.0
    %612 = vmatprep.subr.mxu0 0.0
    %613 = vmatpush1.msra.mxu0 0.0
    %614 = vmatprep.subr.mxu0 0.0
    %615 = vmatpush1.msra.mxu0 0.0
    %616 = vmatprep.mubr.f32.mxu0 0.0
    %617 = vmatmul.mubr.f32.gmra.mrb[0].mxu0 %v475
    %v618 = vpop.f32.mrb[0].mxu0
    %v619 = vadd.f32 0.0, %v618
    %v620 = vpop.f32.mrb[0].mxu0
    %v621 = vadd.f32 0.0, %v620
    %622 = vdwg.mxu0
    %v623 = vadd.f32 %v477, %v548
    %v624 = vadd.f32 %v478, %v550
    %v625 = vadd.f32 %v479, %v619
    %v626 = vadd.f32 %v480, %v621
    %v627 = vxor.u32 %v623, 2147483648
    %v628 = vmul.f32 %v627, 1.442695
    %v629 = vpow.pop %v628
    %v630 = vadd.f32 %v629, 1.0
    %v631 = vrcp.pop %v630
    %v632 = vmul.f32 1.0, %v631
    %v633 = vxor.u32 %v624, 2147483648
    %v634 = vmul.f32 %v633, 1.442695
    %v635 = vpow.pop %v634
    %v636 = vadd.f32 %v635, 1.0
    %v637 = vrcp.pop %v636
    %v638 = vmul.f32 1.0, %v637
    %v639 = vtanh.pop %v625
    %v640 = vxor.u32 %v626, 2147483648
    %v641 = vmul.f32 %v640, 1.442695
    %v642 = vpow.pop %v641
    %v643 = vadd.f32 %v642, 1.0
    %v644 = vrcp.pop %v643
    %v645 = vmul.f32 1.0, %v644
    %v646 = vmul.f32 %v638, %v476
    %v647 = vmul.f32 %v632, %v639
    %v648 = vadd.f32 %v646, %v647
    %v649 = vtanh.pop %v648
    %v650 = vmul.f32 %v645, %v649
    %651 = vst [vmem:[#allocation3] sm:$0xff] %v650
    %v652 = vld [vmem:[#allocation2 + $0x20] sm:$0xff]
    %v653 = vld [vmem:[#allocation2 + $0x28] sm:$0xff]
    %v654 = vld [vmem:[#allocation2 + $0x30] sm:$0xff]
    %v655 = vld [vmem:[#allocation2 + $0x38] sm:$0xff]
    %656 = vmatprep.subr.mxu0 %v412
    %657 = vmatpush1.msra.mxu0 %v411
    %658 = vmatprep.subr.mxu0 %v416
    %659 = vmatpush1.msra.mxu0 %v415
    %660 = vmatprep.subr.mxu0 %v420
    %661 = vmatpush1.msra.mxu0 %v419
    %662 = vmatprep.subr.mxu0 %v424
    %663 = vmatpush1.msra.mxu0 %v423
    %664 = vmatprep.subr.mxu0 %v428
    %665 = vmatpush1.msra.mxu0 %v427
    %666 = vmatprep.subr.mxu0 %v432
    %667 = vmatpush1.msra.mxu0 %v431
    %668 = vmatprep.subr.mxu0 %v436
    %669 = vmatpush1.msra.mxu0 %v435
    %670 = vmatprep.subr.mxu0 %v440
    %671 = vmatpush1.msra.mxu0 %v439
    %672 = vmatprep.subr.mxu0 %v444
    %673 = vmatpush1.msra.mxu0 %v443
    %674 = vmatprep.subr.mxu0 %v448
    %675 = vmatpush1.msra.mxu0 %v447
    %676 = vmatprep.subr.mxu0 %v452
    %677 = vmatpush1.msra.mxu0 %v451
    %678 = vmatprep.subr.mxu0 %v456
    %679 = vmatpush1.msra.mxu0 %v455
    %680 = vmatprep.subr.mxu0 %v460
    %681 = vmatpush1.msra.mxu0 %v459
    %682 = vmatprep.subr.mxu0 %v464
    %683 = vmatpush1.msra.mxu0 %v463
    %684 = vmatprep.subr.mxu0 %v468
    %685 = vmatpush1.msra.mxu0 %v467
    %686 = vmatprep.subr.mxu0 %v472
    %687 = vmatpush1.msra.mxu0 %v471
    %688 = vmatprep.subr.mxu0 0.0
    %689 = vmatpush1.msra.mxu0 0.0
    %690 = vmatprep.subr.mxu0 0.0
    %691 = vmatpush1.msra.mxu0 0.0
    %692 = vmatprep.subr.mxu0 0.0
    %693 = vmatpush1.msra.mxu0 0.0
    %694 = vmatprep.subr.mxu0 0.0
    %695 = vmatpush1.msra.mxu0 0.0
    %696 = vmatprep.subr.mxu0 0.0
    %697 = vmatpush1.msra.mxu0 0.0
    %698 = vmatprep.subr.mxu0 0.0
    %699 = vmatpush1.msra.mxu0 0.0
    %700 = vmatprep.subr.mxu0 0.0
    %701 = vmatpush1.msra.mxu0 0.0
    %702 = vmatprep.subr.mxu0 0.0
    %703 = vmatpush1.msra.mxu0 0.0
    %704 = vmatprep.subr.mxu0 0.0
    %705 = vmatpush1.msra.mxu0 0.0
    %706 = vmatprep.subr.mxu0 0.0
    %707 = vmatpush1.msra.mxu0 0.0
    %708 = vmatprep.subr.mxu0 0.0
    %709 = vmatpush1.msra.mxu0 0.0
    %710 = vmatprep.subr.mxu0 0.0
    %711 = vmatpush1.msra.mxu0 0.0
    %712 = vmatprep.subr.mxu0 0.0
    %713 = vmatpush1.msra.mxu0 0.0
    %714 = vmatprep.subr.mxu0 0.0
    %715 = vmatpush1.msra.mxu0 0.0
    %716 = vmatprep.subr.mxu0 0.0
    %717 = vmatpush1.msra.mxu0 0.0
    %718 = vmatprep.subr.mxu0 0.0
    %719 = vmatpush1.msra.mxu0 0.0
    %720 = vmatprep.mubr.f32.mxu0 0.0
    %721 = vmatmul.mubr.f32.gmra.mrb[0].mxu0 %v650
    %v722 = vpop.f32.mrb[0].mxu0
    %v723 = vadd.f32 0.0, %v722
    %v724 = vpop.f32.mrb[0].mxu0
    %v725 = vadd.f32 0.0, %v724
    %726 = vdwg.mxu0
    %727 = vmatprep.subr.mxu0 %v414
    %728 = vmatpush1.msra.mxu0 %v413
    %729 = vmatprep.subr.mxu0 %v418
    %730 = vmatpush1.msra.mxu0 %v417
    %731 = vmatprep.subr.mxu0 %v422
    %732 = vmatpush1.msra.mxu0 %v421
    %733 = vmatprep.subr.mxu0 %v426
    %734 = vmatpush1.msra.mxu0 %v425
    %735 = vmatprep.subr.mxu0 %v430
    %736 = vmatpush1.msra.mxu0 %v429
    %737 = vmatprep.subr.mxu0 %v434
    %738 = vmatpush1.msra.mxu0 %v433
    %739 = vmatprep.subr.mxu0 %v438
    %740 = vmatpush1.msra.mxu0 %v437
    %741 = vmatprep.subr.mxu0 %v442
    %742 = vmatpush1.msra.mxu0 %v441
    %743 = vmatprep.subr.mxu0 %v446
    %744 = vmatpush1.msra.mxu0 %v445
    %745 = vmatprep.subr.mxu0 %v450
    %746 = vmatpush1.msra.mxu0 %v449
    %747 = vmatprep.subr.mxu0 %v454
    %748 = vmatpush1.msra.mxu0 %v453
    %749 = vmatprep.subr.mxu0 %v458
    %750 = vmatpush1.msra.mxu0 %v457
    %751 = vmatprep.subr.mxu0 %v462
    %752 = vmatpush1.msra.mxu0 %v461
    %753 = vmatprep.subr.mxu0 %v466
    %754 = vmatpush1.msra.mxu0 %v465
    %755 = vmatprep.subr.mxu0 %v470
    %756 = vmatpush1.msra.mxu0 %v469
    %757 = vmatprep.subr.mxu0 %v474
    %758 = vmatpush1.msra.mxu0 %v473
    %759 = vmatprep.subr.mxu0 0.0
    %760 = vmatpush1.msra.mxu0 0.0
    %761 = vmatprep.subr.mxu0 0.0
    %762 = vmatpush1.msra.mxu0 0.0
    %763 = vmatprep.subr.mxu0 0.0
    %764 = vmatpush1.msra.mxu0 0.0
    %765 = vmatprep.subr.mxu0 0.0
    %766 = vmatpush1.msra.mxu0 0.0
    %767 = vmatprep.subr.mxu0 0.0
    %768 = vmatpush1.msra.mxu0 0.0
    %769 = vmatprep.subr.mxu0 0.0
    %770 = vmatpush1.msra.mxu0 0.0
    %771 = vmatprep.subr.mxu0 0.0
    %772 = vmatpush1.msra.mxu0 0.0
    %773 = vmatprep.subr.mxu0 0.0
    %774 = vmatpush1.msra.mxu0 0.0
    %775 = vmatprep.subr.mxu0 0.0
    %776 = vmatpush1.msra.mxu0 0.0
    %777 = vmatprep.subr.mxu0 0.0
    %778 = vmatpush1.msra.mxu0 0.0
    %779 = vmatprep.subr.mxu0 0.0
    %780 = vmatpush1.msra.mxu0 0.0
    %781 = vmatprep.subr.mxu0 0.0
    %782 = vmatpush1.msra.mxu0 0.0
    %783 = vmatprep.subr.mxu0 0.0
    %784 = vmatpush1.msra.mxu0 0.0
    %785 = vmatprep.subr.mxu0 0.0
    %786 = vmatpush1.msra.mxu0 0.0
    %787 = vmatprep.subr.mxu0 0.0
    %788 = vmatpush1.msra.mxu0 0.0
    %789 = vmatprep.subr.mxu0 0.0
    %790 = vmatpush1.msra.mxu0 0.0
    %791 = vmatprep.mubr.f32.mxu0 0.0
    %792 = vmatmul.mubr.f32.gmra.mrb[0].mxu0 %v650
    %v793 = vpop.f32.mrb[0].mxu0
    %v794 = vadd.f32 0.0, %v793
    %v795 = vpop.f32.mrb[0].mxu0
    %v796 = vadd.f32 0.0, %v795
    %797 = vdwg.mxu0
    %v798 = vadd.f32 %v652, %v723
    %v799 = vadd.f32 %v653, %v725
    %v800 = vadd.f32 %v654, %v794
    %v801 = vadd.f32 %v655, %v796
    %v802 = vxor.u32 %v798, 2147483648
    %v803 = vmul.f32 %v802, 1.442695
    %v804 = vpow.pop %v803
    %v805 = vadd.f32 %v804, 1.0
    %v806 = vrcp.pop %v805
    %v807 = vmul.f32 1.0, %v806
    %v808 = vxor.u32 %v799, 2147483648
    %v809 = vmul.f32 %v808, 1.442695
    %v810 = vpow.pop %v809
    %v811 = vadd.f32 %v810, 1.0
    %v812 = vrcp.pop %v811
    %v813 = vmul.f32 1.0, %v812
    %v814 = vtanh.pop %v800
    %v815 = vxor.u32 %v801, 2147483648
    %v816 = vmul.f32 %v815, 1.442695
    %v817 = vpow.pop %v816
    %v818 = vadd.f32 %v817, 1.0
    %v819 = vrcp.pop %v818
    %v820 = vmul.f32 1.0, %v819
    %v821 = vmul.f32 %v813, %v648
    %v822 = vmul.f32 %v807, %v814
    %v823 = vadd.f32 %v821, %v822
    %v824 = vtanh.pop %v823
    %v825 = vmul.f32 %v820, %v824
    %826 = vst [vmem:[#allocation3 + $0x8] sm:$0xff] %v825
    %v827 = vld [vmem:[#allocation2 + $0x40] sm:$0xff]
    %v828 = vld [vmem:[#allocation2 + $0x48] sm:$0xff]
    %v829 = vld [vmem:[#allocation2 + $0x50] sm:$0xff]
    %v830 = vld [vmem:[#allocation2 + $0x58] sm:$0xff]
    %831 = vmatprep.subr.mxu0 %v412
    %832 = vmatpush1.msra.mxu0 %v411
    %833 = vmatprep.subr.mxu0 %v416
    %834 = vmatpush1.msra.mxu0 %v415
    %835 = vmatprep.subr.mxu0 %v420
    %836 = vmatpush1.msra.mxu0 %v419
    %837 = vmatprep.subr.mxu0 %v424
    %838 = vmatpush1.msra.mxu0 %v423
    %839 = vmatprep.subr.mxu0 %v428
    %840 = vmatpush1.msra.mxu0 %v427
    %841 = vmatprep.subr.mxu0 %v432
    %842 = vmatpush1.msra.mxu0 %v431
    %843 = vmatprep.subr.mxu0 %v436
    %844 = vmatpush1.msra.mxu0 %v435
    %845 = vmatprep.subr.mxu0 %v440
    %846 = vmatpush1.msra.mxu0 %v439
    %847 = vmatprep.subr.mxu0 %v444
    %848 = vmatpush1.msra.mxu0 %v443
    %849 = vmatprep.subr.mxu0 %v448
    %850 = vmatpush1.msra.mxu0 %v447
    %851 = vmatprep.subr.mxu0 %v452
    %852 = vmatpush1.msra.mxu0 %v451
    %853 = vmatprep.subr.mxu0 %v456
    %854 = vmatpush1.msra.mxu0 %v455
    %855 = vmatprep.subr.mxu0 %v460
    %856 = vmatpush1.msra.mxu0 %v459
    %857 = vmatprep.subr.mxu0 %v464
    %858 = vmatpush1.msra.mxu0 %v463
    %859 = vmatprep.subr.mxu0 %v468
    %860 = vmatpush1.msra.mxu0 %v467
    %861 = vmatprep.subr.mxu0 %v472
    %862 = vmatpush1.msra.mxu0 %v471
    %863 = vmatprep.subr.mxu0 0.0
    %864 = vmatpush1.msra.mxu0 0.0
    %865 = vmatprep.subr.mxu0 0.0
    %866 = vmatpush1.msra.mxu0 0.0
    %867 = vmatprep.subr.mxu0 0.0
    %868 = vmatpush1.msra.mxu0 0.0
    %869 = vmatprep.subr.mxu0 0.0
    %870 = vmatpush1.msra.mxu0 0.0
    %871 = vmatprep.subr.mxu0 0.0
    %872 = vmatpush1.msra.mxu0 0.0
    %873 = vmatprep.subr.mxu0 0.0
    %874 = vmatpush1.msra.mxu0 0.0
    %875 = vmatprep.subr.mxu0 0.0
    %876 = vmatpush1.msra.mxu0 0.0
    %877 = vmatprep.subr.mxu0 0.0
    %878 = vmatpush1.msra.mxu0 0.0
    %879 = vmatprep.subr.mxu0 0.0
    %880 = vmatpush1.msra.mxu0 0.0
    %881 = vmatprep.subr.mxu0 0.0
    %882 = vmatpush1.msra.mxu0 0.0
    %883 = vmatprep.subr.mxu0 0.0
    %884 = vmatpush1.msra.mxu0 0.0
    %885 = vmatprep.subr.mxu0 0.0
    %886 = vmatpush1.msra.mxu0 0.0
    %887 = vmatprep.subr.mxu0 0.0
    %888 = vmatpush1.msra.mxu0 0.0
    %889 = vmatprep.subr.mxu0 0.0
    %890 = vmatpush1.msra.mxu0 0.0
    %891 = vmatprep.subr.mxu0 0.0
    %892 = vmatpush1.msra.mxu0 0.0
    %893 = vmatprep.subr.mxu0 0.0
    %894 = vmatpush1.msra.mxu0 0.0
    %895 = vmatprep.mubr.f32.mxu0 0.0
    %896 = vmatmul.mubr.f32.gmra.mrb[0].mxu0 %v825
    %v897 = vpop.f32.mrb[0].mxu0
    %v898 = vadd.f32 0.0, %v897
    %v899 = vpop.f32.mrb[0].mxu0
    %v900 = vadd.f32 0.0, %v899
    %901 = vdwg.mxu0
    %902 = vmatprep.subr.mxu0 %v414
    %903 = vmatpush1.msra.mxu0 %v413
    %904 = vmatprep.subr.mxu0 %v418
    %905 = vmatpush1.msra.mxu0 %v417
    %906 = vmatprep.subr.mxu0 %v422
    %907 = vmatpush1.msra.mxu0 %v421
    %908 = vmatprep.subr.mxu0 %v426
    %909 = vmatpush1.msra.mxu0 %v425
    %910 = vmatprep.subr.mxu0 %v430
    %911 = vmatpush1.msra.mxu0 %v429
    %912 = vmatprep.subr.mxu0 %v434
    %913 = vmatpush1.msra.mxu0 %v433
    %914 = vmatprep.subr.mxu0 %v438
    %915 = vmatpush1.msra.mxu0 %v437
    %916 = vmatprep.subr.mxu0 %v442
    %917 = vmatpush1.msra.mxu0 %v441
    %918 = vmatprep.subr.mxu0 %v446
    %919 = vmatpush1.msra.mxu0 %v445
    %920 = vmatprep.subr.mxu0 %v450
    %921 = vmatpush1.msra.mxu0 %v449
    %922 = vmatprep.subr.mxu0 %v454
    %923 = vmatpush1.msra.mxu0 %v453
    %924 = vmatprep.subr.mxu0 %v458
    %925 = vmatpush1.msra.mxu0 %v457
    %926 = vmatprep.subr.mxu0 %v462
    %927 = vmatpush1.msra.mxu0 %v461
    %928 = vmatprep.subr.mxu0 %v466
    %929 = vmatpush1.msra.mxu0 %v465
    %930 = vmatprep.subr.mxu0 %v470
    %931 = vmatpush1.msra.mxu0 %v469
    %932 = vmatprep.subr.mxu0 %v474
    %933 = vmatpush1.msra.mxu0 %v473
    %934 = vmatprep.subr.mxu0 0.0
    %935 = vmatpush1.msra.mxu0 0.0
    %936 = vmatprep.subr.mxu0 0.0
    %937 = vmatpush1.msra.mxu0 0.0
    %938 = vmatprep.subr.mxu0 0.0
    %939 = vmatpush1.msra.mxu0 0.0
    %940 = vmatprep.subr.mxu0 0.0
    %941 = vmatpush1.msra.mxu0 0.0
    %942 = vmatprep.subr.mxu0 0.0
    %943 = vmatpush1.msra.mxu0 0.0
    %944 = vmatprep.subr.mxu0 0.0
    %945 = vmatpush1.msra.mxu0 0.0
    %946 = vmatprep.subr.mxu0 0.0
    %947 = vmatpush1.msra.mxu0 0.0
    %948 = vmatprep.subr.mxu0 0.0
    %949 = vmatpush1.msra.mxu0 0.0
    %950 = vmatprep.subr.mxu0 0.0
    %951 = vmatpush1.msra.mxu0 0.0
    %952 = vmatprep.subr.mxu0 0.0
    %953 = vmatpush1.msra.mxu0 0.0
    %954 = vmatprep.subr.mxu0 0.0
    %955 = vmatpush1.msra.mxu0 0.0
    %956 = vmatprep.subr.mxu0 0.0
    %957 = vmatpush1.msra.mxu0 0.0
    %958 = vmatprep.subr.mxu0 0.0
    %959 = vmatpush1.msra.mxu0 0.0
    %960 = vmatprep.subr.mxu0 0.0
    %961 = vmatpush1.msra.mxu0 0.0
    %962 = vmatprep.subr.mxu0 0.0
    %963 = vmatpush1.msra.mxu0 0.0
    %964 = vmatprep.subr.mxu0 0.0
    %965 = vmatpush1.msra.mxu0 0.0
    %966 = vmatprep.mubr.f32.mxu0 0.0
    %967 = vmatmul.mubr.f32.gmra.mrb[0].mxu0 %v825
    %v968 = vpop.f32.mrb[0].mxu0
    %v969 = vadd.f32 0.0, %v968
    %v970 = vpop.f32.mrb[0].mxu0
    %v971 = vadd.f32 0.0, %v970
    %972 = vdwg.mxu0
    %v973 = vadd.f32 %v827, %v898
    %v974 = vadd.f32 %v828, %v900
    %v975 = vadd.f32 %v829, %v969
    %v976 = vadd.f32 %v830, %v971
    %v977 = vxor.u32 %v973, 2147483648
    %v978 = vmul.f32 %v977, 1.442695
    %v979 = vpow.pop %v978
    %v980 = vadd.f32 %v979, 1.0
    %v981 = vrcp.pop %v980
    %v982 = vmul.f32 1.0, %v981
    %v983 = vxor.u32 %v974, 2147483648
    %v984 = vmul.f32 %v983, 1.442695
    %v985 = vpow.pop %v984
    %v986 = vadd.f32 %v985, 1.0
    %v987 = vrcp.pop %v986
    %v988 = vmul.f32 1.0, %v987
    %v989 = vtanh.pop %v975
    %v990 = vxor.u32 %v976, 2147483648
    %v991 = vmul.f32 %v990, 1.442695
    %v992 = vpow.pop %v991
    %v993 = vadd.f32 %v992, 1.0
    %v994 = vrcp.pop %v993
    %v995 = vmul.f32 1.0, %v994
    %v996 = vmul.f32 %v988, %v823
    %v997 = vmul.f32 %v982, %v989
    %v998 = vadd.f32 %v996, %v997
    %v999 = vtanh.pop %v998
    %v1000 = vmul.f32 %v995, %v999
    %1001 = vst [vmem:[#allocation3 + $0x10] sm:$0xff] %v1000
    %v1002 = vld [vmem:[#allocation2 + $0x60] sm:$0xff]
    %v1003 = vld [vmem:[#allocation2 + $0x68] sm:$0xff]
    %v1004 = vld [vmem:[#allocation2 + $0x70] sm:$0xff]
    %v1005 = vld [vmem:[#allocation2 + $0x78] sm:$0xff]
    %1006 = vmatprep.subr.mxu0 %v412
    %1007 = vmatpush1.msra.mxu0 %v411
    %1008 = vmatprep.subr.mxu0 %v416
    %1009 = vmatpush1.msra.mxu0 %v415
    %1010 = vmatprep.subr.mxu0 %v420
    %1011 = vmatpush1.msra.mxu0 %v419
    %1012 = vmatprep.subr.mxu0 %v424
    %1013 = vmatpush1.msra.mxu0 %v423
    %1014 = vmatprep.subr.mxu0 %v428
    %1015 = vmatpush1.msra.mxu0 %v427
    %1016 = vmatprep.subr.mxu0 %v432
    %1017 = vmatpush1.msra.mxu0 %v431
    %1018 = vmatprep.subr.mxu0 %v436
    %1019 = vmatpush1.msra.mxu0 %v435
    %1020 = vmatprep.subr.mxu0 %v440
    %1021 = vmatpush1.msra.mxu0 %v439
    %1022 = vmatprep.subr.mxu0 %v444
    %1023 = vmatpush1.msra.mxu0 %v443
    %1024 = vmatprep.subr.mxu0 %v448
    %1025 = vmatpush1.msra.mxu0 %v447
    %1026 = vmatprep.subr.mxu0 %v452
    %1027 = vmatpush1.msra.mxu0 %v451
    %1028 = vmatprep.subr.mxu0 %v456
    %1029 = vmatpush1.msra.mxu0 %v455
    %1030 = vmatprep.subr.mxu0 %v460
    %1031 = vmatpush1.msra.mxu0 %v459
    %1032 = vmatprep.subr.mxu0 %v464
    %1033 = vmatpush1.msra.mxu0 %v463
    %1034 = vmatprep.subr.mxu0 %v468
    %1035 = vmatpush1.msra.mxu0 %v467
    %1036 = vmatprep.subr.mxu0 %v472
    %1037 = vmatpush1.msra.mxu0 %v471
    %1038 = vmatprep.subr.mxu0 0.0
    %1039 = vmatpush1.msra.mxu0 0.0
    %1040 = vmatprep.subr.mxu0 0.0
    %1041 = vmatpush1.msra.mxu0 0.0
    %1042 = vmatprep.subr.mxu0 0.0
    %1043 = vmatpush1.msra.mxu0 0.0
    %1044 = vmatprep.subr.mxu0 0.0
    %1045 = vmatpush1.msra.mxu0 0.0
    %1046 = vmatprep.subr.mxu0 0.0
    %1047 = vmatpush1.msra.mxu0 0.0
    %1048 = vmatprep.subr.mxu0 0.0
    %1049 = vmatpush1.msra.mxu0 0.0
    %1050 = vmatprep.subr.mxu0 0.0
    %1051 = vmatpush1.msra.mxu0 0.0
    %1052 = vmatprep.subr.mxu0 0.0
    %1053 = vmatpush1.msra.mxu0 0.0
    %1054 = vmatprep.subr.mxu0 0.0
    %1055 = vmatpush1.msra.mxu0 0.0
    %1056 = vmatprep.subr.mxu0 0.0
    %1057 = vmatpush1.msra.mxu0 0.0
    %1058 = vmatprep.subr.mxu0 0.0
    %1059 = vmatpush1.msra.mxu0 0.0
    %1060 = vmatprep.subr.mxu0 0.0
    %1061 = vmatpush1.msra.mxu0 0.0
    %1062 = vmatprep.subr.mxu0 0.0
    %1063 = vmatpush1.msra.mxu0 0.0
    %1064 = vmatprep.subr.mxu0 0.0
    %1065 = vmatpush1.msra.mxu0 0.0
    %1066 = vmatprep.subr.mxu0 0.0
    %1067 = vmatpush1.msra.mxu0 0.0
    %1068 = vmatprep.subr.mxu0 0.0
    %1069 = vmatpush1.msra.mxu0 0.0
    %1070 = vmatprep.mubr.f32.mxu0 0.0
    %1071 = vmatmul.mubr.f32.gmra.mrb[0].mxu0 %v1000
    %v1072 = vpop.f32.mrb[0].mxu0
    %v1073 = vadd.f32 0.0, %v1072
    %v1074 = vpop.f32.mrb[0].mxu0
    %v1075 = vadd.f32 0.0, %v1074
    %1076 = vdwg.mxu0
    %1077 = vmatprep.subr.mxu0 %v414
    %1078 = vmatpush1.msra.mxu0 %v413
    %1079 = vmatprep.subr.mxu0 %v418
    %1080 = vmatpush1.msra.mxu0 %v417
    %1081 = vmatprep.subr.mxu0 %v422
    %1082 = vmatpush1.msra.mxu0 %v421
    %1083 = vmatprep.subr.mxu0 %v426
    %1084 = vmatpush1.msra.mxu0 %v425
    %1085 = vmatprep.subr.mxu0 %v430
    %1086 = vmatpush1.msra.mxu0 %v429
    %1087 = vmatprep.subr.mxu0 %v434
    %1088 = vmatpush1.msra.mxu0 %v433
    %1089 = vmatprep.subr.mxu0 %v438
    %1090 = vmatpush1.msra.mxu0 %v437
    %1091 = vmatprep.subr.mxu0 %v442
    %1092 = vmatpush1.msra.mxu0 %v441
    %1093 = vmatprep.subr.mxu0 %v446
    %1094 = vmatpush1.msra.mxu0 %v445
    %1095 = vmatprep.subr.mxu0 %v450
    %1096 = vmatpush1.msra.mxu0 %v449
    %1097 = vmatprep.subr.mxu0 %v454
    %1098 = vmatpush1.msra.mxu0 %v453
    %1099 = vmatprep.subr.mxu0 %v458
    %1100 = vmatpush1.msra.mxu0 %v457
    %1101 = vmatprep.subr.mxu0 %v462
    %1102 = vmatpush1.msra.mxu0 %v461
    %1103 = vmatprep.subr.mxu0 %v466
    %1104 = vmatpush1.msra.mxu0 %v465
    %1105 = vmatprep.subr.mxu0 %v470
    %1106 = vmatpush1.msra.mxu0 %v469
    %1107 = vmatprep.subr.mxu0 %v474
    %1108 = vmatpush1.msra.mxu0 %v473
    %1109 = vmatprep.subr.mxu0 0.0
    %1110 = vmatpush1.msra.mxu0 0.0
    %1111 = vmatprep.subr.mxu0 0.0
    %1112 = vmatpush1.msra.mxu0 0.0
    %1113 = vmatprep.subr.mxu0 0.0
    %1114 = vmatpush1.msra.mxu0 0.0
    %1115 = vmatprep.subr.mxu0 0.0
    %1116 = vmatpush1.msra.mxu0 0.0
    %1117 = vmatprep.subr.mxu0 0.0
    %1118 = vmatpush1.msra.mxu0 0.0
    %1119 = vmatprep.subr.mxu0 0.0
    %1120 = vmatpush1.msra.mxu0 0.0
    %1121 = vmatprep.subr.mxu0 0.0
    %1122 = vmatpush1.msra.mxu0 0.0
    %1123 = vmatprep.subr.mxu0 0.0
    %1124 = vmatpush1.msra.mxu0 0.0
    %1125 = vmatprep.subr.mxu0 0.0
    %1126 = vmatpush1.msra.mxu0 0.0
    %1127 = vmatprep.subr.mxu0 0.0
    %1128 = vmatpush1.msra.mxu0 0.0
    %1129 = vmatprep.subr.mxu0 0.0
    %1130 = vmatpush1.msra.mxu0 0.0
    %1131 = vmatprep.subr.mxu0 0.0
    %1132 = vmatpush1.msra.mxu0 0.0
    %1133 = vmatprep.subr.mxu0 0.0
    %1134 = vmatpush1.msra.mxu0 0.0
    %1135 = vmatprep.subr.mxu0 0.0
    %1136 = vmatpush1.msra.mxu0 0.0
    %1137 = vmatprep.subr.mxu0 0.0
    %1138 = vmatpush1.msra.mxu0 0.0
    %1139 = vmatprep.subr.mxu0 0.0
    %1140 = vmatpush1.msra.mxu0 0.0
    %1141 = vmatprep.mubr.f32.mxu0 0.0
    %1142 = vmatmul.mubr.f32.gmra.mrb[0].mxu0 %v1000
    %v1143 = vpop.f32.mrb[0].mxu0
    %v1144 = vadd.f32 0.0, %v1143
    %v1145 = vpop.f32.mrb[0].mxu0
    %v1146 = vadd.f32 0.0, %v1145
    %1147 = vdwg.mxu0
    %v1148 = vadd.f32 %v1002, %v1073
    %v1149 = vadd.f32 %v1003, %v1075
    %v1150 = vadd.f32 %v1004, %v1144
    %v1151 = vadd.f32 %v1005, %v1146
    %v1152 = vxor.u32 %v1148, 2147483648
    %v1153 = vmul.f32 %v1152, 1.442695
    %v1154 = vpow.pop %v1153
    %v1155 = vadd.f32 %v1154, 1.0
    %v1156 = vrcp.pop %v1155
    %v1157 = vmul.f32 1.0, %v1156
    %v1158 = vxor.u32 %v1149, 2147483648
    %v1159 = vmul.f32 %v1158, 1.442695
    %v1160 = vpow.pop %v1159
    %v1161 = vadd.f32 %v1160, 1.0
    %v1162 = vrcp.pop %v1161
    %v1163 = vmul.f32 1.0, %v1162
    %v1164 = vtanh.pop %v1150
    %v1165 = vxor.u32 %v1151, 2147483648
    %v1166 = vmul.f32 %v1165, 1.442695
    %v1167 = vpow.pop %v1166
    %v1168 = vadd.f32 %v1167, 1.0
    %v1169 = vrcp.pop %v1168
    %v1170 = vmul.f32 1.0, %v1169
    %v1171 = vmul.f32 %v1163, %v998
    %v1172 = vmul.f32 %v1157, %v1164
    %v1173 = vadd.f32 %v1171, %v1172
    %v1174 = vtanh.pop %v1173
    %v1175 = vmul.f32 %v1170, %v1174
    %1176 = vst [vmem:[#allocation3 + $0x18] sm:$0xff] %v1175
    %v1177 = vld [vmem:[#allocation2 + $0x80] sm:$0xff]
    %v1178 = vld [vmem:[#allocation2 + $0x88] sm:$0xff]
    %v1179 = vld [vmem:[#allocation2 + $0x90] sm:$0xff]
    %v1180 = vld [vmem:[#allocation2 + $0x98] sm:$0xff]
    %1181 = vmatprep.subr.mxu0 %v412
    %1182 = vmatpush1.msra.mxu0 %v411
    %1183 = vmatprep.subr.mxu0 %v416
    %1184 = vmatpush1.msra.mxu0 %v415
    %1185 = vmatprep.subr.mxu0 %v420
    %1186 = vmatpush1.msra.mxu0 %v419
    %1187 = vmatprep.subr.mxu0 %v424
    %1188 = vmatpush1.msra.mxu0 %v423
    %1189 = vmatprep.subr.mxu0 %v428
    %1190 = vmatpush1.msra.mxu0 %v427
    %1191 = vmatprep.subr.mxu0 %v432
    %1192 = vmatpush1.msra.mxu0 %v431
    %1193 = vmatprep.subr.mxu0 %v436
    %1194 = vmatpush1.msra.mxu0 %v435
    %1195 = vmatprep.subr.mxu0 %v440
    %1196 = vmatpush1.msra.mxu0 %v439
    %1197 = vmatprep.subr.mxu0 %v444
    %1198 = vmatpush1.msra.mxu0 %v443
    %1199 = vmatprep.subr.mxu0 %v448
    %1200 = vmatpush1.msra.mxu0 %v447
    %1201 = vmatprep.subr.mxu0 %v452
    %1202 = vmatpush1.msra.mxu0 %v451
    %1203 = vmatprep.subr.mxu0 %v456
    %1204 = vmatpush1.msra.mxu0 %v455
    %1205 = vmatprep.subr.mxu0 %v460
    %1206 = vmatpush1.msra.mxu0 %v459
    %1207 = vmatprep.subr.mxu0 %v464
    %1208 = vmatpush1.msra.mxu0 %v463
    %1209 = vmatprep.subr.mxu0 %v468
    %1210 = vmatpush1.msra.mxu0 %v467
    %1211 = vmatprep.subr.mxu0 %v472
    %1212 = vmatpush1.msra.mxu0 %v471
    %1213 = vmatprep.subr.mxu0 0.0
    %1214 = vmatpush1.msra.mxu0 0.0
    %1215 = vmatprep.subr.mxu0 0.0
    %1216 = vmatpush1.msra.mxu0 0.0
    %1217 = vmatprep.subr.mxu0 0.0
    %1218 = vmatpush1.msra.mxu0 0.0
    %1219 = vmatprep.subr.mxu0 0.0
    %1220 = vmatpush1.msra.mxu0 0.0
    %1221 = vmatprep.subr.mxu0 0.0
    %1222 = vmatpush1.msra.mxu0 0.0
    %1223 = vmatprep.subr.mxu0 0.0
    %1224 = vmatpush1.msra.mxu0 0.0
    %1225 = vmatprep.subr.mxu0 0.0
    %1226 = vmatpush1.msra.mxu0 0.0
    %1227 = vmatprep.subr.mxu0 0.0
    %1228 = vmatpush1.msra.mxu0 0.0
    %1229 = vmatprep.subr.mxu0 0.0
    %1230 = vmatpush1.msra.mxu0 0.0
    %1231 = vmatprep.subr.mxu0 0.0
    %1232 = vmatpush1.msra.mxu0 0.0
    %1233 = vmatprep.subr.mxu0 0.0
    %1234 = vmatpush1.msra.mxu0 0.0
    %1235 = vmatprep.subr.mxu0 0.0
    %1236 = vmatpush1.msra.mxu0 0.0
    %1237 = vmatprep.subr.mxu0 0.0
    %1238 = vmatpush1.msra.mxu0 0.0
    %1239 = vmatprep.subr.mxu0 0.0
    %1240 = vmatpush1.msra.mxu0 0.0
    %1241 = vmatprep.subr.mxu0 0.0
    %1242 = vmatpush1.msra.mxu0 0.0
    %1243 = vmatprep.subr.mxu0 0.0
    %1244 = vmatpush1.msra.mxu0 0.0
    %1245 = vmatprep.mubr.f32.mxu0 0.0
    %1246 = vmatmul.mubr.f32.gmra.mrb[0].mxu0 %v1175
    %v1247 = vpop.f32.mrb[0].mxu0
    %v1248 = vadd.f32 0.0, %v1247
    %v1249 = vpop.f32.mrb[0].mxu0
    %v1250 = vadd.f32 0.0, %v1249
    %1251 = vdwg.mxu0
    %1252 = vmatprep.subr.mxu0 %v414
    %1253 = vmatpush1.msra.mxu0 %v413
    %1254 = vmatprep.subr.mxu0 %v418
    %1255 = vmatpush1.msra.mxu0 %v417
    %1256 = vmatprep.subr.mxu0 %v422
    %1257 = vmatpush1.msra.mxu0 %v421
    %1258 = vmatprep.subr.mxu0 %v426
    %1259 = vmatpush1.msra.mxu0 %v425
    %1260 = vmatprep.subr.mxu0 %v430
    %1261 = vmatpush1.msra.mxu0 %v429
    %1262 = vmatprep.subr.mxu0 %v434
    %1263 = vmatpush1.msra.mxu0 %v433
    %1264 = vmatprep.subr.mxu0 %v438
    %1265 = vmatpush1.msra.mxu0 %v437
    %1266 = vmatprep.subr.mxu0 %v442
    %1267 = vmatpush1.msra.mxu0 %v441
    %1268 = vmatprep.subr.mxu0 %v446
    %1269 = vmatpush1.msra.mxu0 %v445
    %1270 = vmatprep.subr.mxu0 %v450
    %1271 = vmatpush1.msra.mxu0 %v449
    %1272 = vmatprep.subr.mxu0 %v454
    %1273 = vmatpush1.msra.mxu0 %v453
    %1274 = vmatprep.subr.mxu0 %v458
    %1275 = vmatpush1.msra.mxu0 %v457
    %1276 = vmatprep.subr.mxu0 %v462
    %1277 = vmatpush1.msra.mxu0 %v461
    %1278 = vmatprep.subr.mxu0 %v466
    %1279 = vmatpush1.msra.mxu0 %v465
    %1280 = vmatprep.subr.mxu0 %v470
    %1281 = vmatpush1.msra.mxu0 %v469
    %1282 = vmatprep.subr.mxu0 %v474
    %1283 = vmatpush1.msra.mxu0 %v473
    %1284 = vmatprep.subr.mxu0 0.0
    %1285 = vmatpush1.msra.mxu0 0.0
    %1286 = vmatprep.subr.mxu0 0.0
    %1287 = vmatpush1.msra.mxu0 0.0
    %1288 = vmatprep.subr.mxu0 0.0
    %1289 = vmatpush1.msra.mxu0 0.0
    %1290 = vmatprep.subr.mxu0 0.0
    %1291 = vmatpush1.msra.mxu0 0.0
    %1292 = vmatprep.subr.mxu0 0.0
    %1293 = vmatpush1.msra.mxu0 0.0
    %1294 = vmatprep.subr.mxu0 0.0
    %1295 = vmatpush1.msra.mxu0 0.0
    %1296 = vmatprep.subr.mxu0 0.0
    %1297 = vmatpush1.msra.mxu0 0.0
    %1298 = vmatprep.subr.mxu0 0.0
    %1299 = vmatpush1.msra.mxu0 0.0
    %1300 = vmatprep.subr.mxu0 0.0
    %1301 = vmatpush1.msra.mxu0 0.0
    %1302 = vmatprep.subr.mxu0 0.0
    %1303 = vmatpush1.msra.mxu0 0.0
    %1304 = vmatprep.subr.mxu0 0.0
    %1305 = vmatpush1.msra.mxu0 0.0
    %1306 = vmatprep.subr.mxu0 0.0
    %1307 = vmatpush1.msra.mxu0 0.0
    %1308 = vmatprep.subr.mxu0 0.0
    %1309 = vmatpush1.msra.mxu0 0.0
    %1310 = vmatprep.subr.mxu0 0.0
    %1311 = vmatpush1.msra.mxu0 0.0
    %1312 = vmatprep.subr.mxu0 0.0
    %1313 = vmatpush1.msra.mxu0 0.0
    %1314 = vmatprep.subr.mxu0 0.0
    %1315 = vmatpush1.msra.mxu0 0.0
    %1316 = vmatprep.mubr.f32.mxu0 0.0
    %1317 = vmatmul.mubr.f32.gmra.mrb[0].mxu0 %v1175
    %v1318 = vpop.f32.mrb[0].mxu0
    %v1319 = vadd.f32 0.0, %v1318
    %v1320 = vpop.f32.mrb[0].mxu0
    %v1321 = vadd.f32 0.0, %v1320
    %1322 = vdwg.mxu0
    %v1323 = vadd.f32 %v1177, %v1248
    %v1324 = vadd.f32 %v1178, %v1250
    %v1325 = vadd.f32 %v1179, %v1319
    %v1326 = vadd.f32 %v1180, %v1321
    %v1327 = vxor.u32 %v1323, 2147483648
    %v1328 = vmul.f32 %v1327, 1.442695
    %v1329 = vpow.pop %v1328
    %v1330 = vadd.f32 %v1329, 1.0
    %v1331 = vrcp.pop %v1330
    %v1332 = vmul.f32 1.0, %v1331
    %v1333 = vxor.u32 %v1324, 2147483648
    %v1334 = vmul.f32 %v1333, 1.442695
    %v1335 = vpow.pop %v1334
    %v1336 = vadd.f32 %v1335, 1.0
    %v1337 = vrcp.pop %v1336
    %v1338 = vmul.f32 1.0, %v1337
    %v1339 = vtanh.pop %v1325
    %v1340 = vxor.u32 %v1326, 2147483648
    %v1341 = vmul.f32 %v1340, 1.442695
    %v1342 = vpow.pop %v1341
    %v1343 = vadd.f32 %v1342, 1.0
    %v1344 = vrcp.pop %v1343
    %v1345 = vmul.f32 1.0, %v1344
    %v1346 = vmul.f32 %v1338, %v1173
    %v1347 = vmul.f32 %v1332, %v1339
    %v1348 = vadd.f32 %v1346, %v1347
    %v1349 = vtanh.pop %v1348
    %v1350 = vmul.f32 %v1345, %v1349
    %1351 = vst [vmem:[#allocation3 + $0x20] sm:$0xff] %v1350
    %v1352 = vld [vmem:[#allocation2 + $0xa0] sm:$0xff]
    %v1353 = vld [vmem:[#allocation2 + $0xa8] sm:$0xff]
    %v1354 = vld [vmem:[#allocation2 + $0xb0] sm:$0xff]
    %v1355 = vld [vmem:[#allocation2 + $0xb8] sm:$0xff]
    %1356 = vmatprep.subr.mxu0 %v412
    %1357 = vmatpush1.msra.mxu0 %v411
    %1358 = vmatprep.subr.mxu0 %v416
    %1359 = vmatpush1.msra.mxu0 %v415
    %1360 = vmatprep.subr.mxu0 %v420
    %1361 = vmatpush1.msra.mxu0 %v419
    %1362 = vmatprep.subr.mxu0 %v424
    %1363 = vmatpush1.msra.mxu0 %v423
    %1364 = vmatprep.subr.mxu0 %v428
    %1365 = vmatpush1.msra.mxu0 %v427
    %1366 = vmatprep.subr.mxu0 %v432
    %1367 = vmatpush1.msra.mxu0 %v431
    %1368 = vmatprep.subr.mxu0 %v436
    %1369 = vmatpush1.msra.mxu0 %v435
    %1370 = vmatprep.subr.mxu0 %v440
    %1371 = vmatpush1.msra.mxu0 %v439
    %1372 = vmatprep.subr.mxu0 %v444
    %1373 = vmatpush1.msra.mxu0 %v443
    %1374 = vmatprep.subr.mxu0 %v448
    %1375 = vmatpush1.msra.mxu0 %v447
    %1376 = vmatprep.subr.mxu0 %v452
    %1377 = vmatpush1.msra.mxu0 %v451
    %1378 = vmatprep.subr.mxu0 %v456
    %1379 = vmatpush1.msra.mxu0 %v455
    %1380 = vmatprep.subr.mxu0 %v460
    %1381 = vmatpush1.msra.mxu0 %v459
    %1382 = vmatprep.subr.mxu0 %v464
    %1383 = vmatpush1.msra.mxu0 %v463
    %1384 = vmatprep.subr.mxu0 %v468
    %1385 = vmatpush1.msra.mxu0 %v467
    %1386 = vmatprep.subr.mxu0 %v472
    %1387 = vmatpush1.msra.mxu0 %v471
    %1388 = vmatprep.subr.mxu0 0.0
    %1389 = vmatpush1.msra.mxu0 0.0
    %1390 = vmatprep.subr.mxu0 0.0
    %1391 = vmatpush1.msra.mxu0 0.0
    %1392 = vmatprep.subr.mxu0 0.0
    %1393 = vmatpush1.msra.mxu0 0.0
    %1394 = vmatprep.subr.mxu0 0.0
    %1395 = vmatpush1.msra.mxu0 0.0
    %1396 = vmatprep.subr.mxu0 0.0
    %1397 = vmatpush1.msra.mxu0 0.0
    %1398 = vmatprep.subr.mxu0 0.0
    %1399 = vmatpush1.msra.mxu0 0.0
    %1400 = vmatprep.subr.mxu0 0.0
    %1401 = vmatpush1.msra.mxu0 0.0
    %1402 = vmatprep.subr.mxu0 0.0
    %1403 = vmatpush1.msra.mxu0 0.0
    %1404 = vmatprep.subr.mxu0 0.0
    %1405 = vmatpush1.msra.mxu0 0.0
    %1406 = vmatprep.subr.mxu0 0.0
    %1407 = vmatpush1.msra.mxu0 0.0
    %1408 = vmatprep.subr.mxu0 0.0
    %1409 = vmatpush1.msra.mxu0 0.0
    %1410 = vmatprep.subr.mxu0 0.0
    %1411 = vmatpush1.msra.mxu0 0.0
    %1412 = vmatprep.subr.mxu0 0.0
    %1413 = vmatpush1.msra.mxu0 0.0
    %1414 = vmatprep.subr.mxu0 0.0
    %1415 = vmatpush1.msra.mxu0 0.0
    %1416 = vmatprep.subr.mxu0 0.0
    %1417 = vmatpush1.msra.mxu0 0.0
    %1418 = vmatprep.subr.mxu0 0.0
    %1419 = vmatpush1.msra.mxu0 0.0
    %1420 = vmatprep.mubr.f32.mxu0 0.0
    %1421 = vmatmul.mubr.f32.gmra.mrb[0].mxu0 %v1350
    %v1422 = vpop.f32.mrb[0].mxu0
    %v1423 = vadd.f32 0.0, %v1422
    %v1424 = vpop.f32.mrb[0].mxu0
    %v1425 = vadd.f32 0.0, %v1424
    %1426 = vdwg.mxu0
    %1427 = vmatprep.subr.mxu0 %v414
    %1428 = vmatpush1.msra.mxu0 %v413
    %1429 = vmatprep.subr.mxu0 %v418
    %1430 = vmatpush1.msra.mxu0 %v417
    %1431 = vmatprep.subr.mxu0 %v422
    %1432 = vmatpush1.msra.mxu0 %v421
    %1433 = vmatprep.subr.mxu0 %v426
    %1434 = vmatpush1.msra.mxu0 %v425
    %1435 = vmatprep.subr.mxu0 %v430
    %1436 = vmatpush1.msra.mxu0 %v429
    %1437 = vmatprep.subr.mxu0 %v434
    %1438 = vmatpush1.msra.mxu0 %v433
    %1439 = vmatprep.subr.mxu0 %v438
    %1440 = vmatpush1.msra.mxu0 %v437
    %1441 = vmatprep.subr.mxu0 %v442
    %1442 = vmatpush1.msra.mxu0 %v441
    %1443 = vmatprep.subr.mxu0 %v446
    %1444 = vmatpush1.msra.mxu0 %v445
    %1445 = vmatprep.subr.mxu0 %v450
    %1446 = vmatpush1.msra.mxu0 %v449
    %1447 = vmatprep.subr.mxu0 %v454
    %1448 = vmatpush1.msra.mxu0 %v453
    %1449 = vmatprep.subr.mxu0 %v458
    %1450 = vmatpush1.msra.mxu0 %v457
    %1451 = vmatprep.subr.mxu0 %v462
    %1452 = vmatpush1.msra.mxu0 %v461
    %1453 = vmatprep.subr.mxu0 %v466
    %1454 = vmatpush1.msra.mxu0 %v465
    %1455 = vmatprep.subr.mxu0 %v470
    %1456 = vmatpush1.msra.mxu0 %v469
    %1457 = vmatprep.subr.mxu0 %v474
    %1458 = vmatpush1.msra.mxu0 %v473
    %1459 = vmatprep.subr.mxu0 0.0
    %1460 = vmatpush1.msra.mxu0 0.0
    %1461 = vmatprep.subr.mxu0 0.0
    %1462 = vmatpush1.msra.mxu0 0.0
    %1463 = vmatprep.subr.mxu0 0.0
    %1464 = vmatpush1.msra.mxu0 0.0
    %1465 = vmatprep.subr.mxu0 0.0
    %1466 = vmatpush1.msra.mxu0 0.0
    %1467 = vmatprep.subr.mxu0 0.0
    %1468 = vmatpush1.msra.mxu0 0.0
    %1469 = vmatprep.subr.mxu0 0.0
    %1470 = vmatpush1.msra.mxu0 0.0
    %1471 = vmatprep.subr.mxu0 0.0
    %1472 = vmatpush1.msra.mxu0 0.0
    %1473 = vmatprep.subr.mxu0 0.0
    %1474 = vmatpush1.msra.mxu0 0.0
    %1475 = vmatprep.subr.mxu0 0.0
    %1476 = vmatpush1.msra.mxu0 0.0
    %1477 = vmatprep.subr.mxu0 0.0
    %1478 = vmatpush1.msra.mxu0 0.0
    %1479 = vmatprep.subr.mxu0 0.0
    %1480 = vmatpush1.msra.mxu0 0.0
    %1481 = vmatprep.subr.mxu0 0.0
    %1482 = vmatpush1.msra.mxu0 0.0
    %1483 = vmatprep.subr.mxu0 0.0
    %1484 = vmatpush1.msra.mxu0 0.0
    %1485 = vmatprep.subr.mxu0 0.0
    %1486 = vmatpush1.msra.mxu0 0.0
    %1487 = vmatprep.subr.mxu0 0.0
    %1488 = vmatpush1.msra.mxu0 0.0
    %1489 = vmatprep.subr.mxu0 0.0
    %1490 = vmatpush1.msra.mxu0 0.0
    %1491 = vmatprep.mubr.f32.mxu0 0.0
    %1492 = vmatmul.mubr.f32.gmra.mrb[0].mxu0 %v1350
    %v1493 = vpop.f32.mrb[0].mxu0
    %v1494 = vadd.f32 0.0, %v1493
    %v1495 = vpop.f32.mrb[0].mxu0
    %v1496 = vadd.f32 0.0, %v1495
    %1497 = vdwg.mxu0
    %v1498 = vadd.f32 %v1352, %v1423
    %v1499 = vadd.f32 %v1353, %v1425
    %v1500 = vadd.f32 %v1354, %v1494
    %v1501 = vadd.f32 %v1355, %v1496
    %v1502 = vxor.u32 %v1498, 2147483648
    %v1503 = vmul.f32 %v1502, 1.442695
    %v1504 = vpow.pop %v1503
    %v1505 = vadd.f32 %v1504, 1.0
    %v1506 = vrcp.pop %v1505
    %v1507 = vmul.f32 1.0, %v1506
    %v1508 = vxor.u32 %v1499, 2147483648
    %v1509 = vmul.f32 %v1508, 1.442695
    %v1510 = vpow.pop %v1509
    %v1511 = vadd.f32 %v1510, 1.0
    %v1512 = vrcp.pop %v1511
    %v1513 = vmul.f32 1.0, %v1512
    %v1514 = vtanh.pop %v1500
    %v1515 = vxor.u32 %v1501, 2147483648
    %v1516 = vmul.f32 %v1515, 1.442695
    %v1517 = vpow.pop %v1516
    %v1518 = vadd.f32 %v1517, 1.0
    %v1519 = vrcp.pop %v1518
    %v1520 = vmul.f32 1.0, %v1519
    %v1521 = vmul.f32 %v1513, %v1348
    %v1522 = vmul.f32 %v1507, %v1514
    %v1523 = vadd.f32 %v1521, %v1522
    %v1524 = vtanh.pop %v1523
    %v1525 = vmul.f32 %v1520, %v1524
    %1526 = vst [vmem:[#allocation3 + $0x28] sm:$0xff] %v1525
    %v1527 = vld [vmem:[#allocation2 + $0xc0] sm:$0xff]
    %v1528 = vld [vmem:[#allocation2 + $0xc8] sm:$0xff]
    %v1529 = vld [vmem:[#allocation2 + $0xd0] sm:$0xff]
    %v1530 = vld [vmem:[#allocation2 + $0xd8] sm:$0xff]
    %1531 = vmatprep.subr.mxu0 %v412
    %1532 = vmatpush1.msra.mxu0 %v411
    %1533 = vmatprep.subr.mxu0 %v416
    %1534 = vmatpush1.msra.mxu0 %v415
    %1535 = vmatprep.subr.mxu0 %v420
    %1536 = vmatpush1.msra.mxu0 %v419
    %1537 = vmatprep.subr.mxu0 %v424
    %1538 = vmatpush1.msra.mxu0 %v423
    %1539 = vmatprep.subr.mxu0 %v428
    %1540 = vmatpush1.msra.mxu0 %v427
    %1541 = vmatprep.subr.mxu0 %v432
    %1542 = vmatpush1.msra.mxu0 %v431
    %1543 = vmatprep.subr.mxu0 %v436
    %1544 = vmatpush1.msra.mxu0 %v435
    %1545 = vmatprep.subr.mxu0 %v440
    %1546 = vmatpush1.msra.mxu0 %v439
    %1547 = vmatprep.subr.mxu0 %v444
    %1548 = vmatpush1.msra.mxu0 %v443
    %1549 = vmatprep.subr.mxu0 %v448
    %1550 = vmatpush1.msra.mxu0 %v447
    %1551 = vmatprep.subr.mxu0 %v452
    %1552 = vmatpush1.msra.mxu0 %v451
    %1553 = vmatprep.subr.mxu0 %v456
    %1554 = vmatpush1.msra.mxu0 %v455
    %1555 = vmatprep.subr.mxu0 %v460
    %1556 = vmatpush1.msra.mxu0 %v459
    %1557 = vmatprep.subr.mxu0 %v464
    %1558 = vmatpush1.msra.mxu0 %v463
    %1559 = vmatprep.subr.mxu0 %v468
    %1560 = vmatpush1.msra.mxu0 %v467
    %1561 = vmatprep.subr.mxu0 %v472
    %1562 = vmatpush1.msra.mxu0 %v471
    %1563 = vmatprep.subr.mxu0 0.0
    %1564 = vmatpush1.msra.mxu0 0.0
    %1565 = vmatprep.subr.mxu0 0.0
    %1566 = vmatpush1.msra.mxu0 0.0
    %1567 = vmatprep.subr.mxu0 0.0
    %1568 = vmatpush1.msra.mxu0 0.0
    %1569 = vmatprep.subr.mxu0 0.0
    %1570 = vmatpush1.msra.mxu0 0.0
    %1571 = vmatprep.subr.mxu0 0.0
    %1572 = vmatpush1.msra.mxu0 0.0
    %1573 = vmatprep.subr.mxu0 0.0
    %1574 = vmatpush1.msra.mxu0 0.0
    %1575 = vmatprep.subr.mxu0 0.0
    %1576 = vmatpush1.msra.mxu0 0.0
    %1577 = vmatprep.subr.mxu0 0.0
    %1578 = vmatpush1.msra.mxu0 0.0
    %1579 = vmatprep.subr.mxu0 0.0
    %1580 = vmatpush1.msra.mxu0 0.0
    %1581 = vmatprep.subr.mxu0 0.0
    %1582 = vmatpush1.msra.mxu0 0.0
    %1583 = vmatprep.subr.mxu0 0.0
    %1584 = vmatpush1.msra.mxu0 0.0
    %1585 = vmatprep.subr.mxu0 0.0
    %1586 = vmatpush1.msra.mxu0 0.0
    %1587 = vmatprep.subr.mxu0 0.0
    %1588 = vmatpush1.msra.mxu0 0.0
    %1589 = vmatprep.subr.mxu0 0.0
    %1590 = vmatpush1.msra.mxu0 0.0
    %1591 = vmatprep.subr.mxu0 0.0
    %1592 = vmatpush1.msra.mxu0 0.0
    %1593 = vmatprep.subr.mxu0 0.0
    %1594 = vmatpush1.msra.mxu0 0.0
    %1595 = vmatprep.mubr.f32.mxu0 0.0
    %1596 = vmatmul.mubr.f32.gmra.mrb[0].mxu0 %v1525
    %v1597 = vpop.f32.mrb[0].mxu0
    %v1598 = vadd.f32 0.0, %v1597
    %v1599 = vpop.f32.mrb[0].mxu0
    %v1600 = vadd.f32 0.0, %v1599
    %1601 = vdwg.mxu0
    %1602 = vmatprep.subr.mxu0 %v414
    %1603 = vmatpush1.msra.mxu0 %v413
    %1604 = vmatprep.subr.mxu0 %v418
    %1605 = vmatpush1.msra.mxu0 %v417
    %1606 = vmatprep.subr.mxu0 %v422
    %1607 = vmatpush1.msra.mxu0 %v421
    %1608 = vmatprep.subr.mxu0 %v426
    %1609 = vmatpush1.msra.mxu0 %v425
    %1610 = vmatprep.subr.mxu0 %v430
    %1611 = vmatpush1.msra.mxu0 %v429
    %1612 = vmatprep.subr.mxu0 %v434
    %1613 = vmatpush1.msra.mxu0 %v433
    %1614 = vmatprep.subr.mxu0 %v438
    %1615 = vmatpush1.msra.mxu0 %v437
    %1616 = vmatprep.subr.mxu0 %v442
    %1617 = vmatpush1.msra.mxu0 %v441
    %1618 = vmatprep.subr.mxu0 %v446
    %1619 = vmatpush1.msra.mxu0 %v445
    %1620 = vmatprep.subr.mxu0 %v450
    %1621 = vmatpush1.msra.mxu0 %v449
    %1622 = vmatprep.subr.mxu0 %v454
    %1623 = vmatpush1.msra.mxu0 %v453
    %1624 = vmatprep.subr.mxu0 %v458
    %1625 = vmatpush1.msra.mxu0 %v457
    %1626 = vmatprep.subr.mxu0 %v462
    %1627 = vmatpush1.msra.mxu0 %v461
    %1628 = vmatprep.subr.mxu0 %v466
    %1629 = vmatpush1.msra.mxu0 %v465
    %1630 = vmatprep.subr.mxu0 %v470
    %1631 = vmatpush1.msra.mxu0 %v469
    %1632 = vmatprep.subr.mxu0 %v474
    %1633 = vmatpush1.msra.mxu0 %v473
    %1634 = vmatprep.subr.mxu0 0.0
    %1635 = vmatpush1.msra.mxu0 0.0
    %1636 = vmatprep.subr.mxu0 0.0
    %1637 = vmatpush1.msra.mxu0 0.0
    %1638 = vmatprep.subr.mxu0 0.0
    %1639 = vmatpush1.msra.mxu0 0.0
    %1640 = vmatprep.subr.mxu0 0.0
    %1641 = vmatpush1.msra.mxu0 0.0
    %1642 = vmatprep.subr.mxu0 0.0
    %1643 = vmatpush1.msra.mxu0 0.0
    %1644 = vmatprep.subr.mxu0 0.0
    %1645 = vmatpush1.msra.mxu0 0.0
    %1646 = vmatprep.subr.mxu0 0.0
    %1647 = vmatpush1.msra.mxu0 0.0
    %1648 = vmatprep.subr.mxu0 0.0
    %1649 = vmatpush1.msra.mxu0 0.0
    %1650 = vmatprep.subr.mxu0 0.0
    %1651 = vmatpush1.msra.mxu0 0.0
    %1652 = vmatprep.subr.mxu0 0.0
    %1653 = vmatpush1.msra.mxu0 0.0
    %1654 = vmatprep.subr.mxu0 0.0
    %1655 = vmatpush1.msra.mxu0 0.0
    %1656 = vmatprep.subr.mxu0 0.0
    %1657 = vmatpush1.msra.mxu0 0.0
    %1658 = vmatprep.subr.mxu0 0.0
    %1659 = vmatpush1.msra.mxu0 0.0
    %1660 = vmatprep.subr.mxu0 0.0
    %1661 = vmatpush1.msra.mxu0 0.0
    %1662 = vmatprep.subr.mxu0 0.0
    %1663 = vmatpush1.msra.mxu0 0.0
    %1664 = vmatprep.subr.mxu0 0.0
    %1665 = vmatpush1.msra.mxu0 0.0
    %1666 = vmatprep.mubr.f32.mxu0 0.0
    %1667 = vmatmul.mubr.f32.gmra.mrb[0].mxu0 %v1525
    %v1668 = vpop.f32.mrb[0].mxu0
    %v1669 = vadd.f32 0.0, %v1668
    %v1670 = vpop.f32.mrb[0].mxu0
    %v1671 = vadd.f32 0.0, %v1670
    %1672 = vdwg.mxu0
    %v1673 = vadd.f32 %v1527, %v1598
    %v1674 = vadd.f32 %v1528, %v1600
    %v1675 = vadd.f32 %v1529, %v1669
    %v1676 = vadd.f32 %v1530, %v1671
    %v1677 = vxor.u32 %v1673, 2147483648
    %v1678 = vmul.f32 %v1677, 1.442695
    %v1679 = vpow.pop %v1678
    %v1680 = vadd.f32 %v1679, 1.0
    %v1681 = vrcp.pop %v1680
    %v1682 = vmul.f32 1.0, %v1681
    %v1683 = vxor.u32 %v1674, 2147483648
    %v1684 = vmul.f32 %v1683, 1.442695
    %v1685 = vpow.pop %v1684
    %v1686 = vadd.f32 %v1685, 1.0
    %v1687 = vrcp.pop %v1686
    %v1688 = vmul.f32 1.0, %v1687
    %v1689 = vtanh.pop %v1675
    %v1690 = vxor.u32 %v1676, 2147483648
    %v1691 = vmul.f32 %v1690, 1.442695
    %v1692 = vpow.pop %v1691
    %v1693 = vadd.f32 %v1692, 1.0
    %v1694 = vrcp.pop %v1693
    %v1695 = vmul.f32 1.0, %v1694
    %v1696 = vmul.f32 %v1688, %v1523
    %v1697 = vmul.f32 %v1682, %v1689
    %v1698 = vadd.f32 %v1696, %v1697
    %v1699 = vtanh.pop %v1698
    %v1700 = vmul.f32 %v1695, %v1699
    %1701 = vst [vmem:[#allocation3 + $0x30] sm:$0xff] %v1700
    %v1702 = vld [vmem:[#allocation2 + $0xe0] sm:$0xff]
    %v1703 = vld [vmem:[#allocation2 + $0xe8] sm:$0xff]
    %v1704 = vld [vmem:[#allocation2 + $0xf0] sm:$0xff]
    %v1705 = vld [vmem:[#allocation2 + $0xf8] sm:$0xff]
    %1706 = vmatprep.subr.mxu0 %v412
    %1707 = vmatpush1.msra.mxu0 %v411
    %1708 = vmatprep.subr.mxu0 %v416
    %1709 = vmatpush1.msra.mxu0 %v415
    %1710 = vmatprep.subr.mxu0 %v420
    %1711 = vmatpush1.msra.mxu0 %v419
    %1712 = vmatprep.subr.mxu0 %v424
    %1713 = vmatpush1.msra.mxu0 %v423
    %1714 = vmatprep.subr.mxu0 %v428
    %1715 = vmatpush1.msra.mxu0 %v427
    %1716 = vmatprep.subr.mxu0 %v432
    %1717 = vmatpush1.msra.mxu0 %v431
    %1718 = vmatprep.subr.mxu0 %v436
    %1719 = vmatpush1.msra.mxu0 %v435
    %1720 = vmatprep.subr.mxu0 %v440
    %1721 = vmatpush1.msra.mxu0 %v439
    %1722 = vmatprep.subr.mxu0 %v444
    %1723 = vmatpush1.msra.mxu0 %v443
    %1724 = vmatprep.subr.mxu0 %v448
    %1725 = vmatpush1.msra.mxu0 %v447
    %1726 = vmatprep.subr.mxu0 %v452
    %1727 = vmatpush1.msra.mxu0 %v451
    %1728 = vmatprep.subr.mxu0 %v456
    %1729 = vmatpush1.msra.mxu0 %v455
    %1730 = vmatprep.subr.mxu0 %v460
    %1731 = vmatpush1.msra.mxu0 %v459
    %1732 = vmatprep.subr.mxu0 %v464
    %1733 = vmatpush1.msra.mxu0 %v463
    %1734 = vmatprep.subr.mxu0 %v468
    %1735 = vmatpush1.msra.mxu0 %v467
    %1736 = vmatprep.subr.mxu0 %v472
    %1737 = vmatpush1.msra.mxu0 %v471
    %1738 = vmatprep.subr.mxu0 0.0
    %1739 = vmatpush1.msra.mxu0 0.0
    %1740 = vmatprep.subr.mxu0 0.0
    %1741 = vmatpush1.msra.mxu0 0.0
    %1742 = vmatprep.subr.mxu0 0.0
    %1743 = vmatpush1.msra.mxu0 0.0
    %1744 = vmatprep.subr.mxu0 0.0
    %1745 = vmatpush1.msra.mxu0 0.0
    %1746 = vmatprep.subr.mxu0 0.0
    %1747 = vmatpush1.msra.mxu0 0.0
    %1748 = vmatprep.subr.mxu0 0.0
    %1749 = vmatpush1.msra.mxu0 0.0
    %1750 = vmatprep.subr.mxu0 0.0
    %1751 = vmatpush1.msra.mxu0 0.0
    %1752 = vmatprep.subr.mxu0 0.0
    %1753 = vmatpush1.msra.mxu0 0.0
    %1754 = vmatprep.subr.mxu0 0.0
    %1755 = vmatpush1.msra.mxu0 0.0
    %1756 = vmatprep.subr.mxu0 0.0
    %1757 = vmatpush1.msra.mxu0 0.0
    %1758 = vmatprep.subr.mxu0 0.0
    %1759 = vmatpush1.msra.mxu0 0.0
    %1760 = vmatprep.subr.mxu0 0.0
    %1761 = vmatpush1.msra.mxu0 0.0
    %1762 = vmatprep.subr.mxu0 0.0
    %1763 = vmatpush1.msra.mxu0 0.0
    %1764 = vmatprep.subr.mxu0 0.0
    %1765 = vmatpush1.msra.mxu0 0.0
    %1766 = vmatprep.subr.mxu0 0.0
    %1767 = vmatpush1.msra.mxu0 0.0
    %1768 = vmatprep.subr.mxu0 0.0
    %1769 = vmatpush1.msra.mxu0 0.0
    %1770 = vmatprep.mubr.f32.mxu0 0.0
    %1771 = vmatmul.mubr.f32.gmra.mrb[0].mxu0 %v1700
    %v1772 = vpop.f32.mrb[0].mxu0
    %v1773 = vadd.f32 0.0, %v1772
    %v1774 = vpop.f32.mrb[0].mxu0
    %v1775 = vadd.f32 0.0, %v1774
    %1776 = vdwg.mxu0
    %1777 = vmatprep.subr.mxu0 %v414
    %1778 = vmatpush1.msra.mxu0 %v413
    %1779 = vmatprep.subr.mxu0 %v418
    %1780 = vmatpush1.msra.mxu0 %v417
    %1781 = vmatprep.subr.mxu0 %v422
    %1782 = vmatpush1.msra.mxu0 %v421
    %1783 = vmatprep.subr.mxu0 %v426
    %1784 = vmatpush1.msra.mxu0 %v425
    %1785 = vmatprep.subr.mxu0 %v430
    %1786 = vmatpush1.msra.mxu0 %v429
    %1787 = vmatprep.subr.mxu0 %v434
    %1788 = vmatpush1.msra.mxu0 %v433
    %1789 = vmatprep.subr.mxu0 %v438
    %1790 = vmatpush1.msra.mxu0 %v437
    %1791 = vmatprep.subr.mxu0 %v442
    %1792 = vmatpush1.msra.mxu0 %v441
    %1793 = vmatprep.subr.mxu0 %v446
    %1794 = vmatpush1.msra.mxu0 %v445
    %1795 = vmatprep.subr.mxu0 %v450
    %1796 = vmatpush1.msra.mxu0 %v449
    %1797 = vmatprep.subr.mxu0 %v454
    %1798 = vmatpush1.msra.mxu0 %v453
    %1799 = vmatprep.subr.mxu0 %v458
    %1800 = vmatpush1.msra.mxu0 %v457
    %1801 = vmatprep.subr.mxu0 %v462
    %1802 = vmatpush1.msra.mxu0 %v461
    %1803 = vmatprep.subr.mxu0 %v466
    %1804 = vmatpush1.msra.mxu0 %v465
    %1805 = vmatprep.subr.mxu0 %v470
    %1806 = vmatpush1.msra.mxu0 %v469
    %1807 = vmatprep.subr.mxu0 %v474
    %1808 = vmatpush1.msra.mxu0 %v473
    %1809 = vmatprep.subr.mxu0 0.0
    %1810 = vmatpush1.msra.mxu0 0.0
    %1811 = vmatprep.subr.mxu0 0.0
    %1812 = vmatpush1.msra.mxu0 0.0
    %1813 = vmatprep.subr.mxu0 0.0
    %1814 = vmatpush1.msra.mxu0 0.0
    %1815 = vmatprep.subr.mxu0 0.0
    %1816 = vmatpush1.msra.mxu0 0.0
    %1817 = vmatprep.subr.mxu0 0.0
    %1818 = vmatpush1.msra.mxu0 0.0
    %1819 = vmatprep.subr.mxu0 0.0
    %1820 = vmatpush1.msra.mxu0 0.0
    %1821 = vmatprep.subr.mxu0 0.0
    %1822 = vmatpush1.msra.mxu0 0.0
    %1823 = vmatprep.subr.mxu0 0.0
    %1824 = vmatpush1.msra.mxu0 0.0
    %1825 = vmatprep.subr.mxu0 0.0
    %1826 = vmatpush1.msra.mxu0 0.0
    %1827 = vmatprep.subr.mxu0 0.0
    %1828 = vmatpush1.msra.mxu0 0.0
    %1829 = vmatprep.subr.mxu0 0.0
    %1830 = vmatpush1.msra.mxu0 0.0
    %1831 = vmatprep.subr.mxu0 0.0
    %1832 = vmatpush1.msra.mxu0 0.0
    %1833 = vmatprep.subr.mxu0 0.0
    %1834 = vmatpush1.msra.mxu0 0.0
    %1835 = vmatprep.subr.mxu0 0.0
    %1836 = vmatpush1.msra.mxu0 0.0
    %1837 = vmatprep.subr.mxu0 0.0
    %1838 = vmatpush1.msra.mxu0 0.0
    %1839 = vmatprep.subr.mxu0 0.0
    %1840 = vmatpush1.msra.mxu0 0.0
    %1841 = vmatprep.mubr.f32.mxu0 0.0
    %1842 = vmatmul.mubr.f32.gmra.mrb[0].mxu0 %v1700
    %v1843 = vpop.f32.mrb[0].mxu0
    %v1844 = vadd.f32 0.0, %v1843
    %v1845 = vpop.f32.mrb[0].mxu0
    %v1846 = vadd.f32 0.0, %v1845
    %1847 = vdwg.mxu0
    %v1848 = vadd.f32 %v1702, %v1773
    %v1849 = vadd.f32 %v1703, %v1775
    %v1850 = vadd.f32 %v1704, %v1844
    %v1851 = vadd.f32 %v1705, %v1846
    %v1852 = vxor.u32 %v1848, 2147483648
    %v1853 = vmul.f32 %v1852, 1.442695
    %v1854 = vpow.pop %v1853
    %v1855 = vadd.f32 %v1854, 1.0
    %v1856 = vrcp.pop %v1855
    %v1857 = vmul.f32 1.0, %v1856
    %v1858 = vxor.u32 %v1849, 2147483648
    %v1859 = vmul.f32 %v1858, 1.442695
    %v1860 = vpow.pop %v1859
    %v1861 = vadd.f32 %v1860, 1.0
    %v1862 = vrcp.pop %v1861
    %v1863 = vmul.f32 1.0, %v1862
    %v1864 = vtanh.pop %v1850
    %v1865 = vxor.u32 %v1851, 2147483648
    %v1866 = vmul.f32 %v1865, 1.442695
    %v1867 = vpow.pop %v1866
    %v1868 = vadd.f32 %v1867, 1.0
    %v1869 = vrcp.pop %v1868
    %v1870 = vmul.f32 1.0, %v1869
    %v1871 = vmul.f32 %v1863, %v1698
    %v1872 = vmul.f32 %v1857, %v1864
    %v1873 = vadd.f32 %v1871, %v1872
    %v1874 = vtanh.pop %v1873
    %v1875 = vmul.f32 %v1870, %v1874
    %1876 = vst [vmem:[#allocation3 + $0x38] sm:$0xff] %v1875
    %1877 = vst [vmem:[#allocation4] sm:$0xff] %v1875
    %1878 = vst [vmem:[#allocation5] sm:$0xff] %v1873
    %v1879 = vld [vmem:[#allocation3] sm:$0xff]
    %v1880 = vld [vmem:[#allocation3 + $0x8] sm:$0xff]
    %v1881 = vld [vmem:[#allocation3 + $0x10] sm:$0xff]
    %v1882 = vld [vmem:[#allocation3 + $0x18] sm:$0xff]
    %v1883 = vld [vmem:[#allocation3 + $0x20] sm:$0xff]
    %v1884 = vld [vmem:[#allocation3 + $0x28] sm:$0xff]
    %v1885 = vld [vmem:[#allocation3 + $0x30] sm:$0xff]
    %v1886 = vld [vmem:[#allocation3 + $0x38] sm:$0xff]
    %v1887 = vld [vmem:[#allocation11] sm:$0xff]
    %v1888 = vld [vmem:[#allocation11 + $0x8] sm:$0xff]
    %v1889 = vld [vmem:[#allocation11 + $0x10] sm:$0xff]
    %v1890 = vld [vmem:[#allocation11 + $0x18] sm:$0xff]
    %v1891 = vld [vmem:[#allocation11 + $0x20] sm:$0xff]
    %v1892 = vld [vmem:[#allocation11 + $0x28] sm:$0xff]
    %v1893 = vld [vmem:[#allocation11 + $0x30] sm:$0xff]
    %v1894 = vld [vmem:[#allocation11 + $0x38] sm:$0xff]
    %v1895 = vld [vmem:[#allocation11 + $0x40] sm:$0xff]
    %v1896 = vld [vmem:[#allocation11 + $0x48] sm:$0xff]
    %v1897 = vld [vmem:[#allocation11 + $0x50] sm:$0xff]
    %v1898 = vld [vmem:[#allocation11 + $0x58] sm:$0xff]
    %v1899 = vld [vmem:[#allocation11 + $0x60] sm:$0xff]
    %v1900 = vld [vmem:[#allocation11 + $0x68] sm:$0xff]
    %v1901 = vld [vmem:[#allocation11 + $0x70] sm:$0xff]
    %v1902 = vld [vmem:[#allocation11 + $0x78] sm:$0xff]
    %v1903 = vld [vmem:[#allocation11 + $0x80] sm:$0xff]
    %v1904 = vld [vmem:[#allocation11 + $0x88] sm:$0xff]
    %v1905 = vld [vmem:[#allocation11 + $0x90] sm:$0xff]
    %v1906 = vld [vmem:[#allocation11 + $0x98] sm:$0xff]
    %v1907 = vld [vmem:[#allocation11 + $0xa0] sm:$0xff]
    %v1908 = vld [vmem:[#allocation11 + $0xa8] sm:$0xff]
    %v1909 = vld [vmem:[#allocation11 + $0xb0] sm:$0xff]
    %v1910 = vld [vmem:[#allocation11 + $0xb8] sm:$0xff]
    %v1911 = vld [vmem:[#allocation11 + $0xc0] sm:$0xff]
    %v1912 = vld [vmem:[#allocation11 + $0xc8] sm:$0xff]
    %v1913 = vld [vmem:[#allocation11 + $0xd0] sm:$0xff]
    %v1914 = vld [vmem:[#allocation11 + $0xd8] sm:$0xff]
    %v1915 = vld [vmem:[#allocation11 + $0xe0] sm:$0xff]
    %v1916 = vld [vmem:[#allocation11 + $0xe8] sm:$0xff]
    %v1917 = vld [vmem:[#allocation11 + $0xf0] sm:$0xff]
    %v1918 = vld [vmem:[#allocation11 + $0xf8] sm:$0xff]
    %v1919 = vld [vmem:[#allocation11 + $0x100] sm:$0xff]
    %v1920 = vld [vmem:[#allocation11 + $0x108] sm:$0xff]
    %v1921 = vld [vmem:[#allocation11 + $0x110] sm:$0xff]
    %v1922 = vld [vmem:[#allocation11 + $0x118] sm:$0xff]
    %v1923 = vld [vmem:[#allocation11 + $0x120] sm:$0xff]
    %v1924 = vld [vmem:[#allocation11 + $0x128] sm:$0xff]
    %v1925 = vld [vmem:[#allocation11 + $0x130] sm:$0xff]
    %v1926 = vld [vmem:[#allocation11 + $0x138] sm:$0xff]
    %v1927 = vld [vmem:[#allocation11 + $0x140] sm:$0xff]
    %v1928 = vld [vmem:[#allocation11 + $0x148] sm:$0xff]
    %v1929 = vld [vmem:[#allocation11 + $0x150] sm:$0xff]
    %v1930 = vld [vmem:[#allocation11 + $0x158] sm:$0xff]
    %v1931 = vld [vmem:[#allocation11 + $0x160] sm:$0xff]
    %v1932 = vld [vmem:[#allocation11 + $0x168] sm:$0xff]
    %v1933 = vld [vmem:[#allocation11 + $0x170] sm:$0xff]
    %v1934 = vld [vmem:[#allocation11 + $0x178] sm:$0xff]
    %v1935 = vld [vmem:[#allocation11 + $0x180] sm:$0xff]
    %v1936 = vld [vmem:[#allocation11 + $0x188] sm:$0xff]
    %v1937 = vld [vmem:[#allocation11 + $0x190] sm:$0xff]
    %v1938 = vld [vmem:[#allocation11 + $0x198] sm:$0xff]
    %v1939 = vld [vmem:[#allocation11 + $0x1a0] sm:$0xff]
    %v1940 = vld [vmem:[#allocation11 + $0x1a8] sm:$0xff]
    %v1941 = vld [vmem:[#allocation11 + $0x1b0] sm:$0xff]
    %v1942 = vld [vmem:[#allocation11 + $0x1b8] sm:$0xff]
    %v1943 = vld [vmem:[#allocation11 + $0x1c0] sm:$0xff]
    %v1944 = vld [vmem:[#allocation11 + $0x1c8] sm:$0xff]
    %v1945 = vld [vmem:[#allocation11 + $0x1d0] sm:$0xff]
    %v1946 = vld [vmem:[#allocation11 + $0x1d8] sm:$0xff]
    %v1947 = vld [vmem:[#allocation11 + $0x1e0] sm:$0xff]
    %v1948 = vld [vmem:[#allocation11 + $0x1e8] sm:$0xff]
    %v1949 = vld [vmem:[#allocation11 + $0x1f0] sm:$0xff]
    %v1950 = vld [vmem:[#allocation11 + $0x1f8] sm:$0xff]
    %v1951 = vld [vmem:[%s6] sm:$0xf]
    %v1953 = vlaneseq
    %v1954 = vshrl.u32 %v1953, 7
    %v1955 = vsub.s32 0, %v1954
    %v1956 = vrot.slane %v1951, %v1955
    %v1957 = vlaneseq
    %v1958 = vshrl.u32 %v1957, 7
    %v1959 = vsub.s32 1, %v1958
    %v1960 = vrot.slane %v1951, %v1959
    %v1961 = vlaneseq
    %v1962 = vshrl.u32 %v1961, 7
    %v1963 = vsub.s32 2, %v1962
    %v1964 = vrot.slane %v1951, %v1963
    %v1965 = vlaneseq
    %v1966 = vshrl.u32 %v1965, 7
    %v1967 = vsub.s32 3, %v1966
    %v1968 = vrot.slane %v1951, %v1967
    %1973 = vmatprep.subr.mxu0 %v1888
    %1974 = vmatpush1.msra.mxu0 %v1887
    %1975 = vmatprep.subr.mxu0 %v1892
    %1976 = vmatpush1.msra.mxu0 %v1891
    %1977 = vmatprep.subr.mxu0 %v1896
    %1978 = vmatpush1.msra.mxu0 %v1895
    %1979 = vmatprep.subr.mxu0 %v1900
    %1980 = vmatpush1.msra.mxu0 %v1899
    %1981 = vmatprep.subr.mxu0 %v1904
    %1982 = vmatpush1.msra.mxu0 %v1903
    %1983 = vmatprep.subr.mxu0 %v1908
    %1984 = vmatpush1.msra.mxu0 %v1907
    %1985 = vmatprep.subr.mxu0 %v1912
    %1986 = vmatpush1.msra.mxu0 %v1911
    %1987 = vmatprep.subr.mxu0 %v1916
    %1988 = vmatpush1.msra.mxu0 %v1915
    %1989 = vmatprep.subr.mxu0 %v1920
    %1990 = vmatpush1.msra.mxu0 %v1919
    %1991 = vmatprep.subr.mxu0 %v1924
    %1992 = vmatpush1.msra.mxu0 %v1923
    %1993 = vmatprep.subr.mxu0 %v1928
    %1994 = vmatpush1.msra.mxu0 %v1927
    %1995 = vmatprep.subr.mxu0 %v1932
    %1996 = vmatpush1.msra.mxu0 %v1931
    %1997 = vmatprep.subr.mxu0 %v1936
    %1998 = vmatpush1.msra.mxu0 %v1935
    %1999 = vmatprep.subr.mxu0 %v1940
    %2000 = vmatpush1.msra.mxu0 %v1939
    %2001 = vmatprep.subr.mxu0 %v1944
    %2002 = vmatpush1.msra.mxu0 %v1943
    %2003 = vmatprep.subr.mxu0 %v1948
    %2004 = vmatpush1.msra.mxu0 %v1947
    %2005 = vmatprep.subr.mxu0 0.0
    %2006 = vmatpush1.msra.mxu0 0.0
    %2007 = vmatprep.subr.mxu0 0.0
    %2008 = vmatpush1.msra.mxu0 0.0
    %2009 = vmatprep.subr.mxu0 0.0
    %2010 = vmatpush1.msra.mxu0 0.0
    %2011 = vmatprep.subr.mxu0 0.0
    %2012 = vmatpush1.msra.mxu0 0.0
    %2013 = vmatprep.subr.mxu0 0.0
    %2014 = vmatpush1.msra.mxu0 0.0
    %2015 = vmatprep.subr.mxu0 0.0
    %2016 = vmatpush1.msra.mxu0 0.0
    %2017 = vmatprep.subr.mxu0 0.0
    %2018 = vmatpush1.msra.mxu0 0.0
    %2019 = vmatprep.subr.mxu0 0.0
    %2020 = vmatpush1.msra.mxu0 0.0
    %2021 = vmatprep.subr.mxu0 0.0
    %2022 = vmatpush1.msra.mxu0 0.0
    %2023 = vmatprep.subr.mxu0 0.0
    %2024 = vmatpush1.msra.mxu0 0.0
    %2025 = vmatprep.subr.mxu0 0.0
    %2026 = vmatpush1.msra.mxu0 0.0
    %2027 = vmatprep.subr.mxu0 0.0
    %2028 = vmatpush1.msra.mxu0 0.0
    %2029 = vmatprep.subr.mxu0 0.0
    %2030 = vmatpush1.msra.mxu0 0.0
    %2031 = vmatprep.subr.mxu0 0.0
    %2032 = vmatpush1.msra.mxu0 0.0
    %2033 = vmatprep.subr.mxu0 0.0
    %2034 = vmatpush1.msra.mxu0 0.0
    %2035 = vmatprep.subr.mxu0 0.0
    %2036 = vmatpush1.msra.mxu0 0.0
    %2037 = vmatprep.mubr.f32.mxu0 0.0
    %2038 = vmatmul.mubr.f32.gmra.mrb[0].mxu0 %v1879
    %v2039 = vpop.f32.mrb[0].mxu0
    %v2040 = vadd.f32 %v1956, %v2039
    %v2041 = vpop.f32.mrb[0].mxu0
    %v2042 = vadd.f32 %v1960, %v2041
    %2043 = vmatprep.mubr.f32.mxu0 0.0
    %2044 = vmatmul.mubr.f32.gmra.mrb[0].mxu0 %v1880
    %v2045 = vpop.f32.mrb[0].mxu0
    %v2046 = vadd.f32 %v1956, %v2045
    %v2047 = vpop.f32.mrb[0].mxu0
    %v2048 = vadd.f32 %v1960, %v2047
    %2049 = vmatprep.mubr.f32.mxu0 0.0
    %2050 = vmatmul.mubr.f32.gmra.mrb[0].mxu0 %v1881
    %v2051 = vpop.f32.mrb[0].mxu0
    %v2052 = vadd.f32 %v1956, %v2051
    %v2053 = vpop.f32.mrb[0].mxu0
    %v2054 = vadd.f32 %v1960, %v2053
    %2055 = vmatprep.mubr.f32.mxu0 0.0
    %2056 = vmatmul.mubr.f32.gmra.mrb[0].mxu0 %v1882
    %v2057 = vpop.f32.mrb[0].mxu0
    %v2058 = vadd.f32 %v1956, %v2057
    %v2059 = vpop.f32.mrb[0].mxu0
    %v2060 = vadd.f32 %v1960, %v2059
    %2061 = vmatprep.mubr.f32.mxu0 0.0
    %2062 = vmatmul.mubr.f32.gmra.mrb[0].mxu0 %v1883
    %v2063 = vpop.f32.mrb[0].mxu0
    %v2064 = vadd.f32 %v1956, %v2063
    %v2065 = vpop.f32.mrb[0].mxu0
    %v2066 = vadd.f32 %v1960, %v2065
    %2067 = vmatprep.mubr.f32.mxu0 0.0
    %2068 = vmatmul.mubr.f32.gmra.mrb[0].mxu0 %v1884
    %v2069 = vpop.f32.mrb[0].mxu0
    %v2070 = vadd.f32 %v1956, %v2069
    %v2071 = vpop.f32.mrb[0].mxu0
    %v2072 = vadd.f32 %v1960, %v2071
    %2073 = vmatprep.mubr.f32.mxu0 0.0
    %2074 = vmatmul.mubr.f32.gmra.mrb[0].mxu0 %v1885
    %v2075 = vpop.f32.mrb[0].mxu0
    %v2076 = vadd.f32 %v1956, %v2075
    %v2077 = vpop.f32.mrb[0].mxu0
    %v2078 = vadd.f32 %v1960, %v2077
    %2079 = vmatprep.mubr.f32.mxu0 0.0
    %2080 = vmatmul.mubr.f32.gmra.mrb[0].mxu0 %v1886
    %v2081 = vpop.f32.mrb[0].mxu0
    %v2082 = vadd.f32 %v1956, %v2081
    %v2083 = vpop.f32.mrb[0].mxu0
    %v2084 = vadd.f32 %v1960, %v2083
    %2085 = vdwg.mxu0
    %2086 = vmatprep.subr.mxu0 %v1890
    %2087 = vmatpush1.msra.mxu0 %v1889
    %2088 = vmatprep.subr.mxu0 %v1894
    %2089 = vmatpush1.msra.mxu0 %v1893
    %2090 = vmatprep.subr.mxu0 %v1898
    %2091 = vmatpush1.msra.mxu0 %v1897
    %2092 = vmatprep.subr.mxu0 %v1902
    %2093 = vmatpush1.msra.mxu0 %v1901
    %2094 = vmatprep.subr.mxu0 %v1906
    %2095 = vmatpush1.msra.mxu0 %v1905
    %2096 = vmatprep.subr.mxu0 %v1910
    %2097 = vmatpush1.msra.mxu0 %v1909
    %2098 = vmatprep.subr.mxu0 %v1914
    %2099 = vmatpush1.msra.mxu0 %v1913
    %2100 = vmatprep.subr.mxu0 %v1918
    %2101 = vmatpush1.msra.mxu0 %v1917
    %2102 = vmatprep.subr.mxu0 %v1922
    %2103 = vmatpush1.msra.mxu0 %v1921
    %2104 = vmatprep.subr.mxu0 %v1926
    %2105 = vmatpush1.msra.mxu0 %v1925
    %2106 = vmatprep.subr.mxu0 %v1930
    %2107 = vmatpush1.msra.mxu0 %v1929
    %2108 = vmatprep.subr.mxu0 %v1934
    %2109 = vmatpush1.msra.mxu0 %v1933
    %2110 = vmatprep.subr.mxu0 %v1938
    %2111 = vmatpush1.msra.mxu0 %v1937
    %2112 = vmatprep.subr.mxu0 %v1942
    %2113 = vmatpush1.msra.mxu0 %v1941
    %2114 = vmatprep.subr.mxu0 %v1946
    %2115 = vmatpush1.msra.mxu0 %v1945
    %2116 = vmatprep.subr.mxu0 %v1950
    %2117 = vmatpush1.msra.mxu0 %v1949
    %2118 = vmatprep.subr.mxu0 0.0
    %2119 = vmatpush1.msra.mxu0 0.0
    %2120 = vmatprep.subr.mxu0 0.0
    %2121 = vmatpush1.msra.mxu0 0.0
    %2122 = vmatprep.subr.mxu0 0.0
    %2123 = vmatpush1.msra.mxu0 0.0
    %2124 = vmatprep.subr.mxu0 0.0
    %2125 = vmatpush1.msra.mxu0 0.0
    %2126 = vmatprep.subr.mxu0 0.0
    %2127 = vmatpush1.msra.mxu0 0.0
    %2128 = vmatprep.subr.mxu0 0.0
    %2129 = vmatpush1.msra.mxu0 0.0
    %2130 = vmatprep.subr.mxu0 0.0
    %2131 = vmatpush1.msra.mxu0 0.0
    %2132 = vmatprep.subr.mxu0 0.0
    %2133 = vmatpush1.msra.mxu0 0.0
    %2134 = vmatprep.subr.mxu0 0.0
    %2135 = vmatpush1.msra.mxu0 0.0
    %2136 = vmatprep.subr.mxu0 0.0
    %2137 = vmatpush1.msra.mxu0 0.0
    %2138 = vmatprep.subr.mxu0 0.0
    %2139 = vmatpush1.msra.mxu0 0.0
    %2140 = vmatprep.subr.mxu0 0.0
    %2141 = vmatpush1.msra.mxu0 0.0
    %2142 = vmatprep.subr.mxu0 0.0
    %2143 = vmatpush1.msra.mxu0 0.0
    %2144 = vmatprep.subr.mxu0 0.0
    %2145 = vmatpush1.msra.mxu0 0.0
    %2146 = vmatprep.subr.mxu0 0.0
    %2147 = vmatpush1.msra.mxu0 0.0
    %2148 = vmatprep.subr.mxu0 0.0
    %2149 = vmatpush1.msra.mxu0 0.0
    %2150 = vmatprep.mubr.f32.mxu0 0.0
    %2151 = vmatmul.mubr.f32.gmra.mrb[0].mxu0 %v1879
    %v2152 = vpop.f32.mrb[0].mxu0
    %v2153 = vadd.f32 %v1964, %v2152
    %v2154 = vpop.f32.mrb[0].mxu0
    %v2155 = vadd.f32 %v1968, %v2154
    %2156 = vmatprep.mubr.f32.mxu0 0.0
    %2157 = vmatmul.mubr.f32.gmra.mrb[0].mxu0 %v1880
    %v2158 = vpop.f32.mrb[0].mxu0
    %v2159 = vadd.f32 %v1964, %v2158
    %v2160 = vpop.f32.mrb[0].mxu0
    %v2161 = vadd.f32 %v1968, %v2160
    %2162 = vmatprep.mubr.f32.mxu0 0.0
    %2163 = vmatmul.mubr.f32.gmra.mrb[0].mxu0 %v1881
    %v2164 = vpop.f32.mrb[0].mxu0
    %v2165 = vadd.f32 %v1964, %v2164
    %v2166 = vpop.f32.mrb[0].mxu0
    %v2167 = vadd.f32 %v1968, %v2166
    %2168 = vmatprep.mubr.f32.mxu0 0.0
    %2169 = vmatmul.mubr.f32.gmra.mrb[0].mxu0 %v1882
    %v2170 = vpop.f32.mrb[0].mxu0
    %v2171 = vadd.f32 %v1964, %v2170
    %v2172 = vpop.f32.mrb[0].mxu0
    %v2173 = vadd.f32 %v1968, %v2172
    %2174 = vmatprep.mubr.f32.mxu0 0.0
    %2175 = vmatmul.mubr.f32.gmra.mrb[0].mxu0 %v1883
    %v2176 = vpop.f32.mrb[0].mxu0
    %v2177 = vadd.f32 %v1964, %v2176
    %v2178 = vpop.f32.mrb[0].mxu0
    %v2179 = vadd.f32 %v1968, %v2178
    %2180 = vmatprep.mubr.f32.mxu0 0.0
    %2181 = vmatmul.mubr.f32.gmra.mrb[0].mxu0 %v1884
    %v2182 = vpop.f32.mrb[0].mxu0
    %v2183 = vadd.f32 %v1964, %v2182
    %v2184 = vpop.f32.mrb[0].mxu0
    %v2185 = vadd.f32 %v1968, %v2184
    %2186 = vmatprep.mubr.f32.mxu0 0.0
    %2187 = vmatmul.mubr.f32.gmra.mrb[0].mxu0 %v1885
    %v2188 = vpop.f32.mrb[0].mxu0
    %v2189 = vadd.f32 %v1964, %v2188
    %v2190 = vpop.f32.mrb[0].mxu0
    %v2191 = vadd.f32 %v1968, %v2190
    %2192 = vmatprep.mubr.f32.mxu0 0.0
    %2193 = vmatmul.mubr.f32.gmra.mrb[0].mxu0 %v1886
    %v2194 = vpop.f32.mrb[0].mxu0
    %v2195 = vadd.f32 %v1964, %v2194
    %v2196 = vpop.f32.mrb[0].mxu0
    %v2197 = vadd.f32 %v1968, %v2196
    %2198 = vdwg.mxu0
    %2199 = vst [vmem:[#allocation2] sm:$0xff] %v2040
    %2200 = vst [vmem:[#allocation2 + $0x8] sm:$0xff] %v2042
    %2201 = vst [vmem:[#allocation2 + $0x10] sm:$0xff] %v2153
    %2202 = vst [vmem:[#allocation2 + $0x18] sm:$0xff] %v2155
    %2203 = vst [vmem:[#allocation2 + $0x20] sm:$0xff] %v2046
    %2204 = vst [vmem:[#allocation2 + $0x28] sm:$0xff] %v2048
    %2205 = vst [vmem:[#allocation2 + $0x30] sm:$0xff] %v2159
    %2206 = vst [vmem:[#allocation2 + $0x38] sm:$0xff] %v2161
    %2207 = vst [vmem:[#allocation2 + $0x40] sm:$0xff] %v2052
    %2208 = vst [vmem:[#allocation2 + $0x48] sm:$0xff] %v2054
    %2209 = vst [vmem:[#allocation2 + $0x50] sm:$0xff] %v2165
    %2210 = vst [vmem:[#allocation2 + $0x58] sm:$0xff] %v2167
    %2211 = vst [vmem:[#allocation2 + $0x60] sm:$0xff] %v2058
    %2212 = vst [vmem:[#allocation2 + $0x68] sm:$0xff] %v2060
    %2213 = vst [vmem:[#allocation2 + $0x70] sm:$0xff] %v2171
    %2214 = vst [vmem:[#allocation2 + $0x78] sm:$0xff] %v2173
    %2215 = vst [vmem:[#allocation2 + $0x80] sm:$0xff] %v2064
    %2216 = vst [vmem:[#allocation2 + $0x88] sm:$0xff] %v2066
    %2217 = vst [vmem:[#allocation2 + $0x90] sm:$0xff] %v2177
    %2218 = vst [vmem:[#allocation2 + $0x98] sm:$0xff] %v2179
    %2219 = vst [vmem:[#allocation2 + $0xa0] sm:$0xff] %v2070
    %2220 = vst [vmem:[#allocation2 + $0xa8] sm:$0xff] %v2072
    %2221 = vst [vmem:[#allocation2 + $0xb0] sm:$0xff] %v2183
    %2222 = vst [vmem:[#allocation2 + $0xb8] sm:$0xff] %v2185
    %2223 = vst [vmem:[#allocation2 + $0xc0] sm:$0xff] %v2076
    %2224 = vst [vmem:[#allocation2 + $0xc8] sm:$0xff] %v2078
    %2225 = vst [vmem:[#allocation2 + $0xd0] sm:$0xff] %v2189
    %2226 = vst [vmem:[#allocation2 + $0xd8] sm:$0xff] %v2191
    %2227 = vst [vmem:[#allocation2 + $0xe0] sm:$0xff] %v2082
    %2228 = vst [vmem:[#allocation2 + $0xe8] sm:$0xff] %v2084
    %2229 = vst [vmem:[#allocation2 + $0xf0] sm:$0xff] %v2195
    %2230 = vst [vmem:[#allocation2 + $0xf8] sm:$0xff] %v2197
    %v2231 = vld [vmem:[#allocation13] sm:$0xff]
    %v2232 = vld [vmem:[#allocation13 + $0x8] sm:$0xff]
    %v2233 = vld [vmem:[#allocation13 + $0x10] sm:$0xff]
    %v2234 = vld [vmem:[#allocation13 + $0x18] sm:$0xff]
    %v2235 = vld [vmem:[#allocation13 + $0x20] sm:$0xff]
    %v2236 = vld [vmem:[#allocation13 + $0x28] sm:$0xff]
    %v2237 = vld [vmem:[#allocation13 + $0x30] sm:$0xff]
    %v2238 = vld [vmem:[#allocation13 + $0x38] sm:$0xff]
    %v2239 = vld [vmem:[#allocation13 + $0x40] sm:$0xff]
    %v2240 = vld [vmem:[#allocation13 + $0x48] sm:$0xff]
    %v2241 = vld [vmem:[#allocation13 + $0x50] sm:$0xff]
    %v2242 = vld [vmem:[#allocation13 + $0x58] sm:$0xff]
    %v2243 = vld [vmem:[#allocation13 + $0x60] sm:$0xff]
    %v2244 = vld [vmem:[#allocation13 + $0x68] sm:$0xff]
    %v2245 = vld [vmem:[#allocation13 + $0x70] sm:$0xff]
    %v2246 = vld [vmem:[#allocation13 + $0x78] sm:$0xff]
    %v2247 = vld [vmem:[#allocation13 + $0x80] sm:$0xff]
    %v2248 = vld [vmem:[#allocation13 + $0x88] sm:$0xff]
    %v2249 = vld [vmem:[#allocation13 + $0x90] sm:$0xff]
    %v2250 = vld [vmem:[#allocation13 + $0x98] sm:$0xff]
    %v2251 = vld [vmem:[#allocation13 + $0xa0] sm:$0xff]
    %v2252 = vld [vmem:[#allocation13 + $0xa8] sm:$0xff]
    %v2253 = vld [vmem:[#allocation13 + $0xb0] sm:$0xff]
    %v2254 = vld [vmem:[#allocation13 + $0xb8] sm:$0xff]
    %v2255 = vld [vmem:[#allocation13 + $0xc0] sm:$0xff]
    %v2256 = vld [vmem:[#allocation13 + $0xc8] sm:$0xff]
    %v2257 = vld [vmem:[#allocation13 + $0xd0] sm:$0xff]
    %v2258 = vld [vmem:[#allocation13 + $0xd8] sm:$0xff]
    %v2259 = vld [vmem:[#allocation13 + $0xe0] sm:$0xff]
    %v2260 = vld [vmem:[#allocation13 + $0xe8] sm:$0xff]
    %v2261 = vld [vmem:[#allocation13 + $0xf0] sm:$0xff]
    %v2262 = vld [vmem:[#allocation13 + $0xf8] sm:$0xff]
    %v2263 = vld [vmem:[#allocation13 + $0x100] sm:$0xff]
    %v2264 = vld [vmem:[#allocation13 + $0x108] sm:$0xff]
    %v2265 = vld [vmem:[#allocation13 + $0x110] sm:$0xff]
    %v2266 = vld [vmem:[#allocation13 + $0x118] sm:$0xff]
    %v2267 = vld [vmem:[#allocation13 + $0x120] sm:$0xff]
    %v2268 = vld [vmem:[#allocation13 + $0x128] sm:$0xff]
    %v2269 = vld [vmem:[#allocation13 + $0x130] sm:$0xff]
    %v2270 = vld [vmem:[#allocation13 + $0x138] sm:$0xff]
    %v2271 = vld [vmem:[#allocation13 + $0x140] sm:$0xff]
    %v2272 = vld [vmem:[#allocation13 + $0x148] sm:$0xff]
    %v2273 = vld [vmem:[#allocation13 + $0x150] sm:$0xff]
    %v2274 = vld [vmem:[#allocation13 + $0x158] sm:$0xff]
    %v2275 = vld [vmem:[#allocation13 + $0x160] sm:$0xff]
    %v2276 = vld [vmem:[#allocation13 + $0x168] sm:$0xff]
    %v2277 = vld [vmem:[#allocation13 + $0x170] sm:$0xff]
    %v2278 = vld [vmem:[#allocation13 + $0x178] sm:$0xff]
    %v2279 = vld [vmem:[#allocation13 + $0x180] sm:$0xff]
    %v2280 = vld [vmem:[#allocation13 + $0x188] sm:$0xff]
    %v2281 = vld [vmem:[#allocation13 + $0x190] sm:$0xff]
    %v2282 = vld [vmem:[#allocation13 + $0x198] sm:$0xff]
    %v2283 = vld [vmem:[#allocation13 + $0x1a0] sm:$0xff]
    %v2284 = vld [vmem:[#allocation13 + $0x1a8] sm:$0xff]
    %v2285 = vld [vmem:[#allocation13 + $0x1b0] sm:$0xff]
    %v2286 = vld [vmem:[#allocation13 + $0x1b8] sm:$0xff]
    %v2287 = vld [vmem:[#allocation13 + $0x1c0] sm:$0xff]
    %v2288 = vld [vmem:[#allocation13 + $0x1c8] sm:$0xff]
    %v2289 = vld [vmem:[#allocation13 + $0x1d0] sm:$0xff]
    %v2290 = vld [vmem:[#allocation13 + $0x1d8] sm:$0xff]
    %v2291 = vld [vmem:[#allocation13 + $0x1e0] sm:$0xff]
    %v2292 = vld [vmem:[#allocation13 + $0x1e8] sm:$0xff]
    %v2293 = vld [vmem:[#allocation13 + $0x1f0] sm:$0xff]
    %v2294 = vld [vmem:[#allocation13 + $0x1f8] sm:$0xff]
    %v2295 = vld [vmem:[#allocation6] sm:$0xff]
    %v2296 = vld [vmem:[#allocation7] sm:$0xff]
    %v2297 = vld [vmem:[#allocation2] sm:$0xff]
    %v2298 = vld [vmem:[#allocation2 + $0x8] sm:$0xff]
    %v2299 = vld [vmem:[#allocation2 + $0x10] sm:$0xff]
    %v2300 = vld [vmem:[#allocation2 + $0x18] sm:$0xff]
    %2301 = vmatprep.subr.mxu0 %v2232
    %2302 = vmatpush1.msra.mxu0 %v2231
    %2303 = vmatprep.subr.mxu0 %v2236
    %2304 = vmatpush1.msra.mxu0 %v2235
    %2305 = vmatprep.subr.mxu0 %v2240
    %2306 = vmatpush1.msra.mxu0 %v2239
    %2307 = vmatprep.subr.mxu0 %v2244
    %2308 = vmatpush1.msra.mxu0 %v2243
    %2309 = vmatprep.subr.mxu0 %v2248
    %2310 = vmatpush1.msra.mxu0 %v2247
    %2311 = vmatprep.subr.mxu0 %v2252
    %2312 = vmatpush1.msra.mxu0 %v2251
    %2313 = vmatprep.subr.mxu0 %v2256
    %2314 = vmatpush1.msra.mxu0 %v2255
    %2315 = vmatprep.subr.mxu0 %v2260
    %2316 = vmatpush1.msra.mxu0 %v2259
    %2317 = vmatprep.subr.mxu0 %v2264
    %2318 = vmatpush1.msra.mxu0 %v2263
    %2319 = vmatprep.subr.mxu0 %v2268
    %2320 = vmatpush1.msra.mxu0 %v2267
    %2321 = vmatprep.subr.mxu0 %v2272
    %2322 = vmatpush1.msra.mxu0 %v2271
    %2323 = vmatprep.subr.mxu0 %v2276
    %2324 = vmatpush1.msra.mxu0 %v2275
    %2325 = vmatprep.subr.mxu0 %v2280
    %2326 = vmatpush1.msra.mxu0 %v2279
    %2327 = vmatprep.subr.mxu0 %v2284
    %2328 = vmatpush1.msra.mxu0 %v2283
    %2329 = vmatprep.subr.mxu0 %v2288
    %2330 = vmatpush1.msra.mxu0 %v2287
    %2331 = vmatprep.subr.mxu0 %v2292
    %2332 = vmatpush1.msra.mxu0 %v2291
    %2333 = vmatprep.subr.mxu0 0.0
    %2334 = vmatpush1.msra.mxu0 0.0
    %2335 = vmatprep.subr.mxu0 0.0
    %2336 = vmatpush1.msra.mxu0 0.0
    %2337 = vmatprep.subr.mxu0 0.0
    %2338 = vmatpush1.msra.mxu0 0.0
    %2339 = vmatprep.subr.mxu0 0.0
    %2340 = vmatpush1.msra.mxu0 0.0
    %2341 = vmatprep.subr.mxu0 0.0
    %2342 = vmatpush1.msra.mxu0 0.0
    %2343 = vmatprep.subr.mxu0 0.0
    %2344 = vmatpush1.msra.mxu0 0.0
    %2345 = vmatprep.subr.mxu0 0.0
    %2346 = vmatpush1.msra.mxu0 0.0
    %2347 = vmatprep.subr.mxu0 0.0
    %2348 = vmatpush1.msra.mxu0 0.0
    %2349 = vmatprep.subr.mxu0 0.0
    %2350 = vmatpush1.msra.mxu0 0.0
    %2351 = vmatprep.subr.mxu0 0.0
    %2352 = vmatpush1.msra.mxu0 0.0
    %2353 = vmatprep.subr.mxu0 0.0
    %2354 = vmatpush1.msra.mxu0 0.0
    %2355 = vmatprep.subr.mxu0 0.0
    %2356 = vmatpush1.msra.mxu0 0.0
    %2357 = vmatprep.subr.mxu0 0.0
    %2358 = vmatpush1.msra.mxu0 0.0
    %2359 = vmatprep.subr.mxu0 0.0
    %2360 = vmatpush1.msra.mxu0 0.0
    %2361 = vmatprep.subr.mxu0 0.0
    %2362 = vmatpush1.msra.mxu0 0.0
    %2363 = vmatprep.subr.mxu0 0.0
    %2364 = vmatpush1.msra.mxu0 0.0
    %2365 = vmatprep.mubr.f32.mxu0 0.0
    %2366 = vmatmul.mubr.f32.gmra.mrb[0].mxu0 %v2295
    %v2367 = vpop.f32.mrb[0].mxu0
    %v2368 = vadd.f32 0.0, %v2367
    %v2369 = vpop.f32.mrb[0].mxu0
    %v2370 = vadd.f32 0.0, %v2369
    %2371 = vdwg.mxu0
    %2372 = vmatprep.subr.mxu0 %v2234
    %2373 = vmatpush1.msra.mxu0 %v2233
    %2374 = vmatprep.subr.mxu0 %v2238
    %2375 = vmatpush1.msra.mxu0 %v2237
    %2376 = vmatprep.subr.mxu0 %v2242
    %2377 = vmatpush1.msra.mxu0 %v2241
    %2378 = vmatprep.subr.mxu0 %v2246
    %2379 = vmatpush1.msra.mxu0 %v2245
    %2380 = vmatprep.subr.mxu0 %v2250
    %2381 = vmatpush1.msra.mxu0 %v2249
    %2382 = vmatprep.subr.mxu0 %v2254
    %2383 = vmatpush1.msra.mxu0 %v2253
    %2384 = vmatprep.subr.mxu0 %v2258
    %2385 = vmatpush1.msra.mxu0 %v2257
    %2386 = vmatprep.subr.mxu0 %v2262
    %2387 = vmatpush1.msra.mxu0 %v2261
    %2388 = vmatprep.subr.mxu0 %v2266
    %2389 = vmatpush1.msra.mxu0 %v2265
    %2390 = vmatprep.subr.mxu0 %v2270
    %2391 = vmatpush1.msra.mxu0 %v2269
    %2392 = vmatprep.subr.mxu0 %v2274
    %2393 = vmatpush1.msra.mxu0 %v2273
    %2394 = vmatprep.subr.mxu0 %v2278
    %2395 = vmatpush1.msra.mxu0 %v2277
    %2396 = vmatprep.subr.mxu0 %v2282
    %2397 = vmatpush1.msra.mxu0 %v2281
    %2398 = vmatprep.subr.mxu0 %v2286
    %2399 = vmatpush1.msra.mxu0 %v2285
    %2400 = vmatprep.subr.mxu0 %v2290
    %2401 = vmatpush1.msra.mxu0 %v2289
    %2402 = vmatprep.subr.mxu0 %v2294
    %2403 = vmatpush1.msra.mxu0 %v2293
    %2404 = vmatprep.subr.mxu0 0.0
    %2405 = vmatpush1.msra.mxu0 0.0
    %2406 = vmatprep.subr.mxu0 0.0
    %2407 = vmatpush1.msra.mxu0 0.0
    %2408 = vmatprep.subr.mxu0 0.0
    %2409 = vmatpush1.msra.mxu0 0.0
    %2410 = vmatprep.subr.mxu0 0.0
    %2411 = vmatpush1.msra.mxu0 0.0
    %2412 = vmatprep.subr.mxu0 0.0
    %2413 = vmatpush1.msra.mxu0 0.0
    %2414 = vmatprep.subr.mxu0 0.0
    %2415 = vmatpush1.msra.mxu0 0.0
    %2416 = vmatprep.subr.mxu0 0.0
    %2417 = vmatpush1.msra.mxu0 0.0
    %2418 = vmatprep.subr.mxu0 0.0
    %2419 = vmatpush1.msra.mxu0 0.0
    %2420 = vmatprep.subr.mxu0 0.0
    %2421 = vmatpush1.msra.mxu0 0.0
    %2422 = vmatprep.subr.mxu0 0.0
    %2423 = vmatpush1.msra.mxu0 0.0
    %2424 = vmatprep.subr.mxu0 0.0
    %2425 = vmatpush1.msra.mxu0 0.0
    %2426 = vmatprep.subr.mxu0 0.0
    %2427 = vmatpush1.msra.mxu0 0.0
    %2428 = vmatprep.subr.mxu0 0.0
    %2429 = vmatpush1.msra.mxu0 0.0
    %2430 = vmatprep.subr.mxu0 0.0
    %2431 = vmatpush1.msra.mxu0 0.0
    %2432 = vmatprep.subr.mxu0 0.0
    %2433 = vmatpush1.msra.mxu0 0.0
    %2434 = vmatprep.subr.mxu0 0.0
    %2435 = vmatpush1.msra.mxu0 0.0
    %2436 = vmatprep.mubr.f32.mxu0 0.0
    %2437 = vmatmul.mubr.f32.gmra.mrb[0].mxu0 %v2295
    %v2438 = vpop.f32.mrb[0].mxu0
    %v2439 = vadd.f32 0.0, %v2438
    %v2440 = vpop.f32.mrb[0].mxu0
    %v2441 = vadd.f32 0.0, %v2440
    %2442 = vdwg.mxu0
    %v2443 = vadd.f32 %v2297, %v2368
    %v2444 = vadd.f32 %v2298, %v2370
    %v2445 = vadd.f32 %v2299, %v2439
    %v2446 = vadd.f32 %v2300, %v2441
    %v2447 = vxor.u32 %v2443, 2147483648
    %v2448 = vmul.f32 %v2447, 1.442695
    %v2449 = vpow.pop %v2448
    %v2450 = vadd.f32 %v2449, 1.0
    %v2451 = vrcp.pop %v2450
    %v2452 = vmul.f32 1.0, %v2451
    %v2453 = vxor.u32 %v2444, 2147483648
    %v2454 = vmul.f32 %v2453, 1.442695
    %v2455 = vpow.pop %v2454
    %v2456 = vadd.f32 %v2455, 1.0
    %v2457 = vrcp.pop %v2456
    %v2458 = vmul.f32 1.0, %v2457
    %v2459 = vtanh.pop %v2445
    %v2460 = vxor.u32 %v2446, 2147483648
    %v2461 = vmul.f32 %v2460, 1.442695
    %v2462 = vpow.pop %v2461
    %v2463 = vadd.f32 %v2462, 1.0
    %v2464 = vrcp.pop %v2463
    %v2465 = vmul.f32 1.0, %v2464
    %v2466 = vmul.f32 %v2458, %v2296
    %v2467 = vmul.f32 %v2452, %v2459
    %v2468 = vadd.f32 %v2466, %v2467
    %v2469 = vtanh.pop %v2468
    %v2470 = vmul.f32 %v2465, %v2469
    %2471 = vst [vmem:[#allocation3] sm:$0xff] %v2470
    %v2472 = vld [vmem:[#allocation2 + $0x20] sm:$0xff]
    %v2473 = vld [vmem:[#allocation2 + $0x28] sm:$0xff]
    %v2474 = vld [vmem:[#allocation2 + $0x30] sm:$0xff]
    %v2475 = vld [vmem:[#allocation2 + $0x38] sm:$0xff]
    %2476 = vmatprep.subr.mxu0 %v2232
    %2477 = vmatpush1.msra.mxu0 %v2231
    %2478 = vmatprep.subr.mxu0 %v2236
    %2479 = vmatpush1.msra.mxu0 %v2235
    %2480 = vmatprep.subr.mxu0 %v2240
    %2481 = vmatpush1.msra.mxu0 %v2239
    %2482 = vmatprep.subr.mxu0 %v2244
    %2483 = vmatpush1.msra.mxu0 %v2243
    %2484 = vmatprep.subr.mxu0 %v2248
    %2485 = vmatpush1.msra.mxu0 %v2247
    %2486 = vmatprep.subr.mxu0 %v2252
    %2487 = vmatpush1.msra.mxu0 %v2251
    %2488 = vmatprep.subr.mxu0 %v2256
    %2489 = vmatpush1.msra.mxu0 %v2255
    %2490 = vmatprep.subr.mxu0 %v2260
    %2491 = vmatpush1.msra.mxu0 %v2259
    %2492 = vmatprep.subr.mxu0 %v2264
    %2493 = vmatpush1.msra.mxu0 %v2263
    %2494 = vmatprep.subr.mxu0 %v2268
    %2495 = vmatpush1.msra.mxu0 %v2267
    %2496 = vmatprep.subr.mxu0 %v2272
    %2497 = vmatpush1.msra.mxu0 %v2271
    %2498 = vmatprep.subr.mxu0 %v2276
    %2499 = vmatpush1.msra.mxu0 %v2275
    %2500 = vmatprep.subr.mxu0 %v2280
    %2501 = vmatpush1.msra.mxu0 %v2279
    %2502 = vmatprep.subr.mxu0 %v2284
    %2503 = vmatpush1.msra.mxu0 %v2283
    %2504 = vmatprep.subr.mxu0 %v2288
    %2505 = vmatpush1.msra.mxu0 %v2287
    %2506 = vmatprep.subr.mxu0 %v2292
    %2507 = vmatpush1.msra.mxu0 %v2291
    %2508 = vmatprep.subr.mxu0 0.0
    %2509 = vmatpush1.msra.mxu0 0.0
    %2510 = vmatprep.subr.mxu0 0.0
    %2511 = vmatpush1.msra.mxu0 0.0
    %2512 = vmatprep.subr.mxu0 0.0
    %2513 = vmatpush1.msra.mxu0 0.0
    %2514 = vmatprep.subr.mxu0 0.0
    %2515 = vmatpush1.msra.mxu0 0.0
    %2516 = vmatprep.subr.mxu0 0.0
    %2517 = vmatpush1.msra.mxu0 0.0
    %2518 = vmatprep.subr.mxu0 0.0
    %2519 = vmatpush1.msra.mxu0 0.0
    %2520 = vmatprep.subr.mxu0 0.0
    %2521 = vmatpush1.msra.mxu0 0.0
    %2522 = vmatprep.subr.mxu0 0.0
    %2523 = vmatpush1.msra.mxu0 0.0
    %2524 = vmatprep.subr.mxu0 0.0
    %2525 = vmatpush1.msra.mxu0 0.0
    %2526 = vmatprep.subr.mxu0 0.0
    %2527 = vmatpush1.msra.mxu0 0.0
    %2528 = vmatprep.subr.mxu0 0.0
    %2529 = vmatpush1.msra.mxu0 0.0
    %2530 = vmatprep.subr.mxu0 0.0
    %2531 = vmatpush1.msra.mxu0 0.0
    %2532 = vmatprep.subr.mxu0 0.0
    %2533 = vmatpush1.msra.mxu0 0.0
    %2534 = vmatprep.subr.mxu0 0.0
    %2535 = vmatpush1.msra.mxu0 0.0
    %2536 = vmatprep.subr.mxu0 0.0
    %2537 = vmatpush1.msra.mxu0 0.0
    %2538 = vmatprep.subr.mxu0 0.0
    %2539 = vmatpush1.msra.mxu0 0.0
    %2540 = vmatprep.mubr.f32.mxu0 0.0
    %2541 = vmatmul.mubr.f32.gmra.mrb[0].mxu0 %v2470
    %v2542 = vpop.f32.mrb[0].mxu0
    %v2543 = vadd.f32 0.0, %v2542
    %v2544 = vpop.f32.mrb[0].mxu0
    %v2545 = vadd.f32 0.0, %v2544
    %2546 = vdwg.mxu0
    %2547 = vmatprep.subr.mxu0 %v2234
    %2548 = vmatpush1.msra.mxu0 %v2233
    %2549 = vmatprep.subr.mxu0 %v2238
    %2550 = vmatpush1.msra.mxu0 %v2237
    %2551 = vmatprep.subr.mxu0 %v2242
    %2552 = vmatpush1.msra.mxu0 %v2241
    %2553 = vmatprep.subr.mxu0 %v2246
    %2554 = vmatpush1.msra.mxu0 %v2245
    %2555 = vmatprep.subr.mxu0 %v2250
    %2556 = vmatpush1.msra.mxu0 %v2249
    %2557 = vmatprep.subr.mxu0 %v2254
    %2558 = vmatpush1.msra.mxu0 %v2253
    %2559 = vmatprep.subr.mxu0 %v2258
    %2560 = vmatpush1.msra.mxu0 %v2257
    %2561 = vmatprep.subr.mxu0 %v2262
    %2562 = vmatpush1.msra.mxu0 %v2261
    %2563 = vmatprep.subr.mxu0 %v2266
    %2564 = vmatpush1.msra.mxu0 %v2265
    %2565 = vmatprep.subr.mxu0 %v2270
    %2566 = vmatpush1.msra.mxu0 %v2269
    %2567 = vmatprep.subr.mxu0 %v2274
    %2568 = vmatpush1.msra.mxu0 %v2273
    %2569 = vmatprep.subr.mxu0 %v2278
    %2570 = vmatpush1.msra.mxu0 %v2277
    %2571 = vmatprep.subr.mxu0 %v2282
    %2572 = vmatpush1.msra.mxu0 %v2281
    %2573 = vmatprep.subr.mxu0 %v2286
    %2574 = vmatpush1.msra.mxu0 %v2285
    %2575 = vmatprep.subr.mxu0 %v2290
    %2576 = vmatpush1.msra.mxu0 %v2289
    %2577 = vmatprep.subr.mxu0 %v2294
    %2578 = vmatpush1.msra.mxu0 %v2293
    %2579 = vmatprep.subr.mxu0 0.0
    %2580 = vmatpush1.msra.mxu0 0.0
    %2581 = vmatprep.subr.mxu0 0.0
    %2582 = vmatpush1.msra.mxu0 0.0
    %2583 = vmatprep.subr.mxu0 0.0
    %2584 = vmatpush1.msra.mxu0 0.0
    %2585 = vmatprep.subr.mxu0 0.0
    %2586 = vmatpush1.msra.mxu0 0.0
    %2587 = vmatprep.subr.mxu0 0.0
    %2588 = vmatpush1.msra.mxu0 0.0
    %2589 = vmatprep.subr.mxu0 0.0
    %2590 = vmatpush1.msra.mxu0 0.0
    %2591 = vmatprep.subr.mxu0 0.0
    %2592 = vmatpush1.msra.mxu0 0.0
    %2593 = vmatprep.subr.mxu0 0.0
    %2594 = vmatpush1.msra.mxu0 0.0
    %2595 = vmatprep.subr.mxu0 0.0
    %2596 = vmatpush1.msra.mxu0 0.0
    %2597 = vmatprep.subr.mxu0 0.0
    %2598 = vmatpush1.msra.mxu0 0.0
    %2599 = vmatprep.subr.mxu0 0.0
    %2600 = vmatpush1.msra.mxu0 0.0
    %2601 = vmatprep.subr.mxu0 0.0
    %2602 = vmatpush1.msra.mxu0 0.0
    %2603 = vmatprep.subr.mxu0 0.0
    %2604 = vmatpush1.msra.mxu0 0.0
    %2605 = vmatprep.subr.mxu0 0.0
    %2606 = vmatpush1.msra.mxu0 0.0
    %2607 = vmatprep.subr.mxu0 0.0
    %2608 = vmatpush1.msra.mxu0 0.0
    %2609 = vmatprep.subr.mxu0 0.0
    %2610 = vmatpush1.msra.mxu0 0.0
    %2611 = vmatprep.mubr.f32.mxu0 0.0
    %2612 = vmatmul.mubr.f32.gmra.mrb[0].mxu0 %v2470
    %v2613 = vpop.f32.mrb[0].mxu0
    %v2614 = vadd.f32 0.0, %v2613
    %v2615 = vpop.f32.mrb[0].mxu0
    %v2616 = vadd.f32 0.0, %v2615
    %2617 = vdwg.mxu0
    %v2618 = vadd.f32 %v2472, %v2543
    %v2619 = vadd.f32 %v2473, %v2545
    %v2620 = vadd.f32 %v2474, %v2614
    %v2621 = vadd.f32 %v2475, %v2616
    %v2622 = vxor.u32 %v2618, 2147483648
    %v2623 = vmul.f32 %v2622, 1.442695
    %v2624 = vpow.pop %v2623
    %v2625 = vadd.f32 %v2624, 1.0
    %v2626 = vrcp.pop %v2625
    %v2627 = vmul.f32 1.0, %v2626
    %v2628 = vxor.u32 %v2619, 2147483648
    %v2629 = vmul.f32 %v2628, 1.442695
    %v2630 = vpow.pop %v2629
    %v2631 = vadd.f32 %v2630, 1.0
    %v2632 = vrcp.pop %v2631
    %v2633 = vmul.f32 1.0, %v2632
    %v2634 = vtanh.pop %v2620
    %v2635 = vxor.u32 %v2621, 2147483648
    %v2636 = vmul.f32 %v2635, 1.442695
    %v2637 = vpow.pop %v2636
    %v2638 = vadd.f32 %v2637, 1.0
    %v2639 = vrcp.pop %v2638
    %v2640 = vmul.f32 1.0, %v2639
    %v2641 = vmul.f32 %v2633, %v2468
    %v2642 = vmul.f32 %v2627, %v2634
    %v2643 = vadd.f32 %v2641, %v2642
    %v2644 = vtanh.pop %v2643
    %v2645 = vmul.f32 %v2640, %v2644
    %2646 = vst [vmem:[#allocation3 + $0x8] sm:$0xff] %v2645
    %v2647 = vld [vmem:[#allocation2 + $0x40] sm:$0xff]
    %v2648 = vld [vmem:[#allocation2 + $0x48] sm:$0xff]
    %v2649 = vld [vmem:[#allocation2 + $0x50] sm:$0xff]
    %v2650 = vld [vmem:[#allocation2 + $0x58] sm:$0xff]
    %2651 = vmatprep.subr.mxu0 %v2232
    %2652 = vmatpush1.msra.mxu0 %v2231
    %2653 = vmatprep.subr.mxu0 %v2236
    %2654 = vmatpush1.msra.mxu0 %v2235
    %2655 = vmatprep.subr.mxu0 %v2240
    %2656 = vmatpush1.msra.mxu0 %v2239
    %2657 = vmatprep.subr.mxu0 %v2244
    %2658 = vmatpush1.msra.mxu0 %v2243
    %2659 = vmatprep.subr.mxu0 %v2248
    %2660 = vmatpush1.msra.mxu0 %v2247
    %2661 = vmatprep.subr.mxu0 %v2252
    %2662 = vmatpush1.msra.mxu0 %v2251
    %2663 = vmatprep.subr.mxu0 %v2256
    %2664 = vmatpush1.msra.mxu0 %v2255
    %2665 = vmatprep.subr.mxu0 %v2260
    %2666 = vmatpush1.msra.mxu0 %v2259
    %2667 = vmatprep.subr.mxu0 %v2264
    %2668 = vmatpush1.msra.mxu0 %v2263
    %2669 = vmatprep.subr.mxu0 %v2268
    %2670 = vmatpush1.msra.mxu0 %v2267
    %2671 = vmatprep.subr.mxu0 %v2272
    %2672 = vmatpush1.msra.mxu0 %v2271
    %2673 = vmatprep.subr.mxu0 %v2276
    %2674 = vmatpush1.msra.mxu0 %v2275
    %2675 = vmatprep.subr.mxu0 %v2280
    %2676 = vmatpush1.msra.mxu0 %v2279
    %2677 = vmatprep.subr.mxu0 %v2284
    %2678 = vmatpush1.msra.mxu0 %v2283
    %2679 = vmatprep.subr.mxu0 %v2288
    %2680 = vmatpush1.msra.mxu0 %v2287
    %2681 = vmatprep.subr.mxu0 %v2292
    %2682 = vmatpush1.msra.mxu0 %v2291
    %2683 = vmatprep.subr.mxu0 0.0
    %2684 = vmatpush1.msra.mxu0 0.0
    %2685 = vmatprep.subr.mxu0 0.0
    %2686 = vmatpush1.msra.mxu0 0.0
    %2687 = vmatprep.subr.mxu0 0.0
    %2688 = vmatpush1.msra.mxu0 0.0
    %2689 = vmatprep.subr.mxu0 0.0
    %2690 = vmatpush1.msra.mxu0 0.0
    %2691 = vmatprep.subr.mxu0 0.0
    %2692 = vmatpush1.msra.mxu0 0.0
    %2693 = vmatprep.subr.mxu0 0.0
    %2694 = vmatpush1.msra.mxu0 0.0
    %2695 = vmatprep.subr.mxu0 0.0
    %2696 = vmatpush1.msra.mxu0 0.0
    %2697 = vmatprep.subr.mxu0 0.0
    %2698 = vmatpush1.msra.mxu0 0.0
    %2699 = vmatprep.subr.mxu0 0.0
    %2700 = vmatpush1.msra.mxu0 0.0
    %2701 = vmatprep.subr.mxu0 0.0
    %2702 = vmatpush1.msra.mxu0 0.0
    %2703 = vmatprep.subr.mxu0 0.0
    %2704 = vmatpush1.msra.mxu0 0.0
    %2705 = vmatprep.subr.mxu0 0.0
    %2706 = vmatpush1.msra.mxu0 0.0
    %2707 = vmatprep.subr.mxu0 0.0
    %2708 = vmatpush1.msra.mxu0 0.0
    %2709 = vmatprep.subr.mxu0 0.0
    %2710 = vmatpush1.msra.mxu0 0.0
    %2711 = vmatprep.subr.mxu0 0.0
    %2712 = vmatpush1.msra.mxu0 0.0
    %2713 = vmatprep.subr.mxu0 0.0
    %2714 = vmatpush1.msra.mxu0 0.0
    %2715 = vmatprep.mubr.f32.mxu0 0.0
    %2716 = vmatmul.mubr.f32.gmra.mrb[0].mxu0 %v2645
    %v2717 = vpop.f32.mrb[0].mxu0
    %v2718 = vadd.f32 0.0, %v2717
    %v2719 = vpop.f32.mrb[0].mxu0
    %v2720 = vadd.f32 0.0, %v2719
    %2721 = vdwg.mxu0
    %2722 = vmatprep.subr.mxu0 %v2234
    %2723 = vmatpush1.msra.mxu0 %v2233
    %2724 = vmatprep.subr.mxu0 %v2238
    %2725 = vmatpush1.msra.mxu0 %v2237
    %2726 = vmatprep.subr.mxu0 %v2242
    %2727 = vmatpush1.msra.mxu0 %v2241
    %2728 = vmatprep.subr.mxu0 %v2246
    %2729 = vmatpush1.msra.mxu0 %v2245
    %2730 = vmatprep.subr.mxu0 %v2250
    %2731 = vmatpush1.msra.mxu0 %v2249
    %2732 = vmatprep.subr.mxu0 %v2254
    %2733 = vmatpush1.msra.mxu0 %v2253
    %2734 = vmatprep.subr.mxu0 %v2258
    %2735 = vmatpush1.msra.mxu0 %v2257
    %2736 = vmatprep.subr.mxu0 %v2262
    %2737 = vmatpush1.msra.mxu0 %v2261
    %2738 = vmatprep.subr.mxu0 %v2266
    %2739 = vmatpush1.msra.mxu0 %v2265
    %2740 = vmatprep.subr.mxu0 %v2270
    %2741 = vmatpush1.msra.mxu0 %v2269
    %2742 = vmatprep.subr.mxu0 %v2274
    %2743 = vmatpush1.msra.mxu0 %v2273
    %2744 = vmatprep.subr.mxu0 %v2278
    %2745 = vmatpush1.msra.mxu0 %v2277
    %2746 = vmatprep.subr.mxu0 %v2282
    %2747 = vmatpush1.msra.mxu0 %v2281
    %2748 = vmatprep.subr.mxu0 %v2286
    %2749 = vmatpush1.msra.mxu0 %v2285
    %2750 = vmatprep.subr.mxu0 %v2290
    %2751 = vmatpush1.msra.mxu0 %v2289
    %2752 = vmatprep.subr.mxu0 %v2294
    %2753 = vmatpush1.msra.mxu0 %v2293
    %2754 = vmatprep.subr.mxu0 0.0
    %2755 = vmatpush1.msra.mxu0 0.0
    %2756 = vmatprep.subr.mxu0 0.0
    %2757 = vmatpush1.msra.mxu0 0.0
    %2758 = vmatprep.subr.mxu0 0.0
    %2759 = vmatpush1.msra.mxu0 0.0
    %2760 = vmatprep.subr.mxu0 0.0
    %2761 = vmatpush1.msra.mxu0 0.0
    %2762 = vmatprep.subr.mxu0 0.0
    %2763 = vmatpush1.msra.mxu0 0.0
    %2764 = vmatprep.subr.mxu0 0.0
    %2765 = vmatpush1.msra.mxu0 0.0
    %2766 = vmatprep.subr.mxu0 0.0
    %2767 = vmatpush1.msra.mxu0 0.0
    %2768 = vmatprep.subr.mxu0 0.0
    %2769 = vmatpush1.msra.mxu0 0.0
    %2770 = vmatprep.subr.mxu0 0.0
    %2771 = vmatpush1.msra.mxu0 0.0
    %2772 = vmatprep.subr.mxu0 0.0
    %2773 = vmatpush1.msra.mxu0 0.0
    %2774 = vmatprep.subr.mxu0 0.0
    %2775 = vmatpush1.msra.mxu0 0.0
    %2776 = vmatprep.subr.mxu0 0.0
    %2777 = vmatpush1.msra.mxu0 0.0
    %2778 = vmatprep.subr.mxu0 0.0
    %2779 = vmatpush1.msra.mxu0 0.0
    %2780 = vmatprep.subr.mxu0 0.0
    %2781 = vmatpush1.msra.mxu0 0.0
    %2782 = vmatprep.subr.mxu0 0.0
    %2783 = vmatpush1.msra.mxu0 0.0
    %2784 = vmatprep.subr.mxu0 0.0
    %2785 = vmatpush1.msra.mxu0 0.0
    %2786 = vmatprep.mubr.f32.mxu0 0.0
    %2787 = vmatmul.mubr.f32.gmra.mrb[0].mxu0 %v2645
    %v2788 = vpop.f32.mrb[0].mxu0
    %v2789 = vadd.f32 0.0, %v2788
    %v2790 = vpop.f32.mrb[0].mxu0
    %v2791 = vadd.f32 0.0, %v2790
    %2792 = vdwg.mxu0
    %v2793 = vadd.f32 %v2647, %v2718
    %v2794 = vadd.f32 %v2648, %v2720
    %v2795 = vadd.f32 %v2649, %v2789
    %v2796 = vadd.f32 %v2650, %v2791
    %v2797 = vxor.u32 %v2793, 2147483648
    %v2798 = vmul.f32 %v2797, 1.442695
    %v2799 = vpow.pop %v2798
    %v2800 = vadd.f32 %v2799, 1.0
    %v2801 = vrcp.pop %v2800
    %v2802 = vmul.f32 1.0, %v2801
    %v2803 = vxor.u32 %v2794, 2147483648
    %v2804 = vmul.f32 %v2803, 1.442695
    %v2805 = vpow.pop %v2804
    %v2806 = vadd.f32 %v2805, 1.0
    %v2807 = vrcp.pop %v2806
    %v2808 = vmul.f32 1.0, %v2807
    %v2809 = vtanh.pop %v2795
    %v2810 = vxor.u32 %v2796, 2147483648
    %v2811 = vmul.f32 %v2810, 1.442695
    %v2812 = vpow.pop %v2811
    %v2813 = vadd.f32 %v2812, 1.0
    %v2814 = vrcp.pop %v2813
    %v2815 = vmul.f32 1.0, %v2814
    %v2816 = vmul.f32 %v2808, %v2643
    %v2817 = vmul.f32 %v2802, %v2809
    %v2818 = vadd.f32 %v2816, %v2817
    %v2819 = vtanh.pop %v2818
    %v2820 = vmul.f32 %v2815, %v2819
    %2821 = vst [vmem:[#allocation3 + $0x10] sm:$0xff] %v2820
    %v2822 = vld [vmem:[#allocation2 + $0x60] sm:$0xff]
    %v2823 = vld [vmem:[#allocation2 + $0x68] sm:$0xff]
    %v2824 = vld [vmem:[#allocation2 + $0x70] sm:$0xff]
    %v2825 = vld [vmem:[#allocation2 + $0x78] sm:$0xff]
    %2826 = vmatprep.subr.mxu0 %v2232
    %2827 = vmatpush1.msra.mxu0 %v2231
    %2828 = vmatprep.subr.mxu0 %v2236
    %2829 = vmatpush1.msra.mxu0 %v2235
    %2830 = vmatprep.subr.mxu0 %v2240
    %2831 = vmatpush1.msra.mxu0 %v2239
    %2832 = vmatprep.subr.mxu0 %v2244
    %2833 = vmatpush1.msra.mxu0 %v2243
    %2834 = vmatprep.subr.mxu0 %v2248
    %2835 = vmatpush1.msra.mxu0 %v2247
    %2836 = vmatprep.subr.mxu0 %v2252
    %2837 = vmatpush1.msra.mxu0 %v2251
    %2838 = vmatprep.subr.mxu0 %v2256
    %2839 = vmatpush1.msra.mxu0 %v2255
    %2840 = vmatprep.subr.mxu0 %v2260
    %2841 = vmatpush1.msra.mxu0 %v2259
    %2842 = vmatprep.subr.mxu0 %v2264
    %2843 = vmatpush1.msra.mxu0 %v2263
    %2844 = vmatprep.subr.mxu0 %v2268
    %2845 = vmatpush1.msra.mxu0 %v2267
    %2846 = vmatprep.subr.mxu0 %v2272
    %2847 = vmatpush1.msra.mxu0 %v2271
    %2848 = vmatprep.subr.mxu0 %v2276
    %2849 = vmatpush1.msra.mxu0 %v2275
    %2850 = vmatprep.subr.mxu0 %v2280
    %2851 = vmatpush1.msra.mxu0 %v2279
    %2852 = vmatprep.subr.mxu0 %v2284
    %2853 = vmatpush1.msra.mxu0 %v2283
    %2854 = vmatprep.subr.mxu0 %v2288
    %2855 = vmatpush1.msra.mxu0 %v2287
    %2856 = vmatprep.subr.mxu0 %v2292
    %2857 = vmatpush1.msra.mxu0 %v2291
    %2858 = vmatprep.subr.mxu0 0.0
    %2859 = vmatpush1.msra.mxu0 0.0
    %2860 = vmatprep.subr.mxu0 0.0
    %2861 = vmatpush1.msra.mxu0 0.0
    %2862 = vmatprep.subr.mxu0 0.0
    %2863 = vmatpush1.msra.mxu0 0.0
    %2864 = vmatprep.subr.mxu0 0.0
    %2865 = vmatpush1.msra.mxu0 0.0
    %2866 = vmatprep.subr.mxu0 0.0
    %2867 = vmatpush1.msra.mxu0 0.0
    %2868 = vmatprep.subr.mxu0 0.0
    %2869 = vmatpush1.msra.mxu0 0.0
    %2870 = vmatprep.subr.mxu0 0.0
    %2871 = vmatpush1.msra.mxu0 0.0
    %2872 = vmatprep.subr.mxu0 0.0
    %2873 = vmatpush1.msra.mxu0 0.0
    %2874 = vmatprep.subr.mxu0 0.0
    %2875 = vmatpush1.msra.mxu0 0.0
    %2876 = vmatprep.subr.mxu0 0.0
    %2877 = vmatpush1.msra.mxu0 0.0
    %2878 = vmatprep.subr.mxu0 0.0
    %2879 = vmatpush1.msra.mxu0 0.0
    %2880 = vmatprep.subr.mxu0 0.0
    %2881 = vmatpush1.msra.mxu0 0.0
    %2882 = vmatprep.subr.mxu0 0.0
    %2883 = vmatpush1.msra.mxu0 0.0
    %2884 = vmatprep.subr.mxu0 0.0
    %2885 = vmatpush1.msra.mxu0 0.0
    %2886 = vmatprep.subr.mxu0 0.0
    %2887 = vmatpush1.msra.mxu0 0.0
    %2888 = vmatprep.subr.mxu0 0.0
    %2889 = vmatpush1.msra.mxu0 0.0
    %2890 = vmatprep.mubr.f32.mxu0 0.0
    %2891 = vmatmul.mubr.f32.gmra.mrb[0].mxu0 %v2820
    %v2892 = vpop.f32.mrb[0].mxu0
    %v2893 = vadd.f32 0.0, %v2892
    %v2894 = vpop.f32.mrb[0].mxu0
    %v2895 = vadd.f32 0.0, %v2894
    %2896 = vdwg.mxu0
    %2897 = vmatprep.subr.mxu0 %v2234
    %2898 = vmatpush1.msra.mxu0 %v2233
    %2899 = vmatprep.subr.mxu0 %v2238
    %2900 = vmatpush1.msra.mxu0 %v2237
    %2901 = vmatprep.subr.mxu0 %v2242
    %2902 = vmatpush1.msra.mxu0 %v2241
    %2903 = vmatprep.subr.mxu0 %v2246
    %2904 = vmatpush1.msra.mxu0 %v2245
    %2905 = vmatprep.subr.mxu0 %v2250
    %2906 = vmatpush1.msra.mxu0 %v2249
    %2907 = vmatprep.subr.mxu0 %v2254
    %2908 = vmatpush1.msra.mxu0 %v2253
    %2909 = vmatprep.subr.mxu0 %v2258
    %2910 = vmatpush1.msra.mxu0 %v2257
    %2911 = vmatprep.subr.mxu0 %v2262
    %2912 = vmatpush1.msra.mxu0 %v2261
    %2913 = vmatprep.subr.mxu0 %v2266
    %2914 = vmatpush1.msra.mxu0 %v2265
    %2915 = vmatprep.subr.mxu0 %v2270
    %2916 = vmatpush1.msra.mxu0 %v2269
    %2917 = vmatprep.subr.mxu0 %v2274
    %2918 = vmatpush1.msra.mxu0 %v2273
    %2919 = vmatprep.subr.mxu0 %v2278
    %2920 = vmatpush1.msra.mxu0 %v2277
    %2921 = vmatprep.subr.mxu0 %v2282
    %2922 = vmatpush1.msra.mxu0 %v2281
    %2923 = vmatprep.subr.mxu0 %v2286
    %2924 = vmatpush1.msra.mxu0 %v2285
    %2925 = vmatprep.subr.mxu0 %v2290
    %2926 = vmatpush1.msra.mxu0 %v2289
    %2927 = vmatprep.subr.mxu0 %v2294
    %2928 = vmatpush1.msra.mxu0 %v2293
    %2929 = vmatprep.subr.mxu0 0.0
    %2930 = vmatpush1.msra.mxu0 0.0
    %2931 = vmatprep.subr.mxu0 0.0
    %2932 = vmatpush1.msra.mxu0 0.0
    %2933 = vmatprep.subr.mxu0 0.0
    %2934 = vmatpush1.msra.mxu0 0.0
    %2935 = vmatprep.subr.mxu0 0.0
    %2936 = vmatpush1.msra.mxu0 0.0
    %2937 = vmatprep.subr.mxu0 0.0
    %2938 = vmatpush1.msra.mxu0 0.0
    %2939 = vmatprep.subr.mxu0 0.0
    %2940 = vmatpush1.msra.mxu0 0.0
    %2941 = vmatprep.subr.mxu0 0.0
    %2942 = vmatpush1.msra.mxu0 0.0
    %2943 = vmatprep.subr.mxu0 0.0
    %2944 = vmatpush1.msra.mxu0 0.0
    %2945 = vmatprep.subr.mxu0 0.0
    %2946 = vmatpush1.msra.mxu0 0.0
    %2947 = vmatprep.subr.mxu0 0.0
    %2948 = vmatpush1.msra.mxu0 0.0
    %2949 = vmatprep.subr.mxu0 0.0
    %2950 = vmatpush1.msra.mxu0 0.0
    %2951 = vmatprep.subr.mxu0 0.0
    %2952 = vmatpush1.msra.mxu0 0.0
    %2953 = vmatprep.subr.mxu0 0.0
    %2954 = vmatpush1.msra.mxu0 0.0
    %2955 = vmatprep.subr.mxu0 0.0
    %2956 = vmatpush1.msra.mxu0 0.0
    %2957 = vmatprep.subr.mxu0 0.0
    %2958 = vmatpush1.msra.mxu0 0.0
    %2959 = vmatprep.subr.mxu0 0.0
    %2960 = vmatpush1.msra.mxu0 0.0
    %2961 = vmatprep.mubr.f32.mxu0 0.0
    %2962 = vmatmul.mubr.f32.gmra.mrb[0].mxu0 %v2820
    %v2963 = vpop.f32.mrb[0].mxu0
    %v2964 = vadd.f32 0.0, %v2963
    %v2965 = vpop.f32.mrb[0].mxu0
    %v2966 = vadd.f32 0.0, %v2965
    %2967 = vdwg.mxu0
    %v2968 = vadd.f32 %v2822, %v2893
    %v2969 = vadd.f32 %v2823, %v2895
    %v2970 = vadd.f32 %v2824, %v2964
    %v2971 = vadd.f32 %v2825, %v2966
    %v2972 = vxor.u32 %v2968, 2147483648
    %v2973 = vmul.f32 %v2972, 1.442695
    %v2974 = vpow.pop %v2973
    %v2975 = vadd.f32 %v2974, 1.0
    %v2976 = vrcp.pop %v2975
    %v2977 = vmul.f32 1.0, %v2976
    %v2978 = vxor.u32 %v2969, 2147483648
    %v2979 = vmul.f32 %v2978, 1.442695
    %v2980 = vpow.pop %v2979
    %v2981 = vadd.f32 %v2980, 1.0
    %v2982 = vrcp.pop %v2981
    %v2983 = vmul.f32 1.0, %v2982
    %v2984 = vtanh.pop %v2970
    %v2985 = vxor.u32 %v2971, 2147483648
    %v2986 = vmul.f32 %v2985, 1.442695
    %v2987 = vpow.pop %v2986
    %v2988 = vadd.f32 %v2987, 1.0
    %v2989 = vrcp.pop %v2988
    %v2990 = vmul.f32 1.0, %v2989
    %v2991 = vmul.f32 %v2983, %v2818
    %v2992 = vmul.f32 %v2977, %v2984
    %v2993 = vadd.f32 %v2991, %v2992
    %v2994 = vtanh.pop %v2993
    %v2995 = vmul.f32 %v2990, %v2994
    %2996 = vst [vmem:[#allocation3 + $0x18] sm:$0xff] %v2995
    %v2997 = vld [vmem:[#allocation2 + $0x80] sm:$0xff]
    %v2998 = vld [vmem:[#allocation2 + $0x88] sm:$0xff]
    %v2999 = vld [vmem:[#allocation2 + $0x90] sm:$0xff]
    %v3000 = vld [vmem:[#allocation2 + $0x98] sm:$0xff]
    %3001 = vmatprep.subr.mxu0 %v2232
    %3002 = vmatpush1.msra.mxu0 %v2231
    %3003 = vmatprep.subr.mxu0 %v2236
    %3004 = vmatpush1.msra.mxu0 %v2235
    %3005 = vmatprep.subr.mxu0 %v2240
    %3006 = vmatpush1.msra.mxu0 %v2239
    %3007 = vmatprep.subr.mxu0 %v2244
    %3008 = vmatpush1.msra.mxu0 %v2243
    %3009 = vmatprep.subr.mxu0 %v2248
    %3010 = vmatpush1.msra.mxu0 %v2247
    %3011 = vmatprep.subr.mxu0 %v2252
    %3012 = vmatpush1.msra.mxu0 %v2251
    %3013 = vmatprep.subr.mxu0 %v2256
    %3014 = vmatpush1.msra.mxu0 %v2255
    %3015 = vmatprep.subr.mxu0 %v2260
    %3016 = vmatpush1.msra.mxu0 %v2259
    %3017 = vmatprep.subr.mxu0 %v2264
    %3018 = vmatpush1.msra.mxu0 %v2263
    %3019 = vmatprep.subr.mxu0 %v2268
    %3020 = vmatpush1.msra.mxu0 %v2267
    %3021 = vmatprep.subr.mxu0 %v2272
    %3022 = vmatpush1.msra.mxu0 %v2271
    %3023 = vmatprep.subr.mxu0 %v2276
    %3024 = vmatpush1.msra.mxu0 %v2275
    %3025 = vmatprep.subr.mxu0 %v2280
    %3026 = vmatpush1.msra.mxu0 %v2279
    %3027 = vmatprep.subr.mxu0 %v2284
    %3028 = vmatpush1.msra.mxu0 %v2283
    %3029 = vmatprep.subr.mxu0 %v2288
    %3030 = vmatpush1.msra.mxu0 %v2287
    %3031 = vmatprep.subr.mxu0 %v2292
    %3032 = vmatpush1.msra.mxu0 %v2291
    %3033 = vmatprep.subr.mxu0 0.0
    %3034 = vmatpush1.msra.mxu0 0.0
    %3035 = vmatprep.subr.mxu0 0.0
    %3036 = vmatpush1.msra.mxu0 0.0
    %3037 = vmatprep.subr.mxu0 0.0
    %3038 = vmatpush1.msra.mxu0 0.0
    %3039 = vmatprep.subr.mxu0 0.0
    %3040 = vmatpush1.msra.mxu0 0.0
    %3041 = vmatprep.subr.mxu0 0.0
    %3042 = vmatpush1.msra.mxu0 0.0
    %3043 = vmatprep.subr.mxu0 0.0
    %3044 = vmatpush1.msra.mxu0 0.0
    %3045 = vmatprep.subr.mxu0 0.0
    %3046 = vmatpush1.msra.mxu0 0.0
    %3047 = vmatprep.subr.mxu0 0.0
    %3048 = vmatpush1.msra.mxu0 0.0
    %3049 = vmatprep.subr.mxu0 0.0
    %3050 = vmatpush1.msra.mxu0 0.0
    %3051 = vmatprep.subr.mxu0 0.0
    %3052 = vmatpush1.msra.mxu0 0.0
    %3053 = vmatprep.subr.mxu0 0.0
    %3054 = vmatpush1.msra.mxu0 0.0
    %3055 = vmatprep.subr.mxu0 0.0
    %3056 = vmatpush1.msra.mxu0 0.0
    %3057 = vmatprep.subr.mxu0 0.0
    %3058 = vmatpush1.msra.mxu0 0.0
    %3059 = vmatprep.subr.mxu0 0.0
    %3060 = vmatpush1.msra.mxu0 0.0
    %3061 = vmatprep.subr.mxu0 0.0
    %3062 = vmatpush1.msra.mxu0 0.0
    %3063 = vmatprep.subr.mxu0 0.0
    %3064 = vmatpush1.msra.mxu0 0.0
    %3065 = vmatprep.mubr.f32.mxu0 0.0
    %3066 = vmatmul.mubr.f32.gmra.mrb[0].mxu0 %v2995
    %v3067 = vpop.f32.mrb[0].mxu0
    %v3068 = vadd.f32 0.0, %v3067
    %v3069 = vpop.f32.mrb[0].mxu0
    %v3070 = vadd.f32 0.0, %v3069
    %3071 = vdwg.mxu0
    %3072 = vmatprep.subr.mxu0 %v2234
    %3073 = vmatpush1.msra.mxu0 %v2233
    %3074 = vmatprep.subr.mxu0 %v2238
    %3075 = vmatpush1.msra.mxu0 %v2237
    %3076 = vmatprep.subr.mxu0 %v2242
    %3077 = vmatpush1.msra.mxu0 %v2241
    %3078 = vmatprep.subr.mxu0 %v2246
    %3079 = vmatpush1.msra.mxu0 %v2245
    %3080 = vmatprep.subr.mxu0 %v2250
    %3081 = vmatpush1.msra.mxu0 %v2249
    %3082 = vmatprep.subr.mxu0 %v2254
    %3083 = vmatpush1.msra.mxu0 %v2253
    %3084 = vmatprep.subr.mxu0 %v2258
    %3085 = vmatpush1.msra.mxu0 %v2257
    %3086 = vmatprep.subr.mxu0 %v2262
    %3087 = vmatpush1.msra.mxu0 %v2261
    %3088 = vmatprep.subr.mxu0 %v2266
    %3089 = vmatpush1.msra.mxu0 %v2265
    %3090 = vmatprep.subr.mxu0 %v2270
    %3091 = vmatpush1.msra.mxu0 %v2269
    %3092 = vmatprep.subr.mxu0 %v2274
    %3093 = vmatpush1.msra.mxu0 %v2273
    %3094 = vmatprep.subr.mxu0 %v2278
    %3095 = vmatpush1.msra.mxu0 %v2277
    %3096 = vmatprep.subr.mxu0 %v2282
    %3097 = vmatpush1.msra.mxu0 %v2281
    %3098 = vmatprep.subr.mxu0 %v2286
    %3099 = vmatpush1.msra.mxu0 %v2285
    %3100 = vmatprep.subr.mxu0 %v2290
    %3101 = vmatpush1.msra.mxu0 %v2289
    %3102 = vmatprep.subr.mxu0 %v2294
    %3103 = vmatpush1.msra.mxu0 %v2293
    %3104 = vmatprep.subr.mxu0 0.0
    %3105 = vmatpush1.msra.mxu0 0.0
    %3106 = vmatprep.subr.mxu0 0.0
    %3107 = vmatpush1.msra.mxu0 0.0
    %3108 = vmatprep.subr.mxu0 0.0
    %3109 = vmatpush1.msra.mxu0 0.0
    %3110 = vmatprep.subr.mxu0 0.0
    %3111 = vmatpush1.msra.mxu0 0.0
    %3112 = vmatprep.subr.mxu0 0.0
    %3113 = vmatpush1.msra.mxu0 0.0
    %3114 = vmatprep.subr.mxu0 0.0
    %3115 = vmatpush1.msra.mxu0 0.0
    %3116 = vmatprep.subr.mxu0 0.0
    %3117 = vmatpush1.msra.mxu0 0.0
    %3118 = vmatprep.subr.mxu0 0.0
    %3119 = vmatpush1.msra.mxu0 0.0
    %3120 = vmatprep.subr.mxu0 0.0
    %3121 = vmatpush1.msra.mxu0 0.0
    %3122 = vmatprep.subr.mxu0 0.0
    %3123 = vmatpush1.msra.mxu0 0.0
    %3124 = vmatprep.subr.mxu0 0.0
    %3125 = vmatpush1.msra.mxu0 0.0
    %3126 = vmatprep.subr.mxu0 0.0
    %3127 = vmatpush1.msra.mxu0 0.0
    %3128 = vmatprep.subr.mxu0 0.0
    %3129 = vmatpush1.msra.mxu0 0.0
    %3130 = vmatprep.subr.mxu0 0.0
    %3131 = vmatpush1.msra.mxu0 0.0
    %3132 = vmatprep.subr.mxu0 0.0
    %3133 = vmatpush1.msra.mxu0 0.0
    %3134 = vmatprep.subr.mxu0 0.0
    %3135 = vmatpush1.msra.mxu0 0.0
    %3136 = vmatprep.mubr.f32.mxu0 0.0
    %3137 = vmatmul.mubr.f32.gmra.mrb[0].mxu0 %v2995
    %v3138 = vpop.f32.mrb[0].mxu0
    %v3139 = vadd.f32 0.0, %v3138
    %v3140 = vpop.f32.mrb[0].mxu0
    %v3141 = vadd.f32 0.0, %v3140
    %3142 = vdwg.mxu0
    %v3143 = vadd.f32 %v2997, %v3068
    %v3144 = vadd.f32 %v2998, %v3070
    %v3145 = vadd.f32 %v2999, %v3139
    %v3146 = vadd.f32 %v3000, %v3141
    %v3147 = vxor.u32 %v3143, 2147483648
    %v3148 = vmul.f32 %v3147, 1.442695
    %v3149 = vpow.pop %v3148
    %v3150 = vadd.f32 %v3149, 1.0
    %v3151 = vrcp.pop %v3150
    %v3152 = vmul.f32 1.0, %v3151
    %v3153 = vxor.u32 %v3144, 2147483648
    %v3154 = vmul.f32 %v3153, 1.442695
    %v3155 = vpow.pop %v3154
    %v3156 = vadd.f32 %v3155, 1.0
    %v3157 = vrcp.pop %v3156
    %v3158 = vmul.f32 1.0, %v3157
    %v3159 = vtanh.pop %v3145
    %v3160 = vxor.u32 %v3146, 2147483648
    %v3161 = vmul.f32 %v3160, 1.442695
    %v3162 = vpow.pop %v3161
    %v3163 = vadd.f32 %v3162, 1.0
    %v3164 = vrcp.pop %v3163
    %v3165 = vmul.f32 1.0, %v3164
    %v3166 = vmul.f32 %v3158, %v2993
    %v3167 = vmul.f32 %v3152, %v3159
    %v3168 = vadd.f32 %v3166, %v3167
    %v3169 = vtanh.pop %v3168
    %v3170 = vmul.f32 %v3165, %v3169
    %3171 = vst [vmem:[#allocation3 + $0x20] sm:$0xff] %v3170
    %v3172 = vld [vmem:[#allocation2 + $0xa0] sm:$0xff]
    %v3173 = vld [vmem:[#allocation2 + $0xa8] sm:$0xff]
    %v3174 = vld [vmem:[#allocation2 + $0xb0] sm:$0xff]
    %v3175 = vld [vmem:[#allocation2 + $0xb8] sm:$0xff]
    %3176 = vmatprep.subr.mxu0 %v2232
    %3177 = vmatpush1.msra.mxu0 %v2231
    %3178 = vmatprep.subr.mxu0 %v2236
    %3179 = vmatpush1.msra.mxu0 %v2235
    %3180 = vmatprep.subr.mxu0 %v2240
    %3181 = vmatpush1.msra.mxu0 %v2239
    %3182 = vmatprep.subr.mxu0 %v2244
    %3183 = vmatpush1.msra.mxu0 %v2243
    %3184 = vmatprep.subr.mxu0 %v2248
    %3185 = vmatpush1.msra.mxu0 %v2247
    %3186 = vmatprep.subr.mxu0 %v2252
    %3187 = vmatpush1.msra.mxu0 %v2251
    %3188 = vmatprep.subr.mxu0 %v2256
    %3189 = vmatpush1.msra.mxu0 %v2255
    %3190 = vmatprep.subr.mxu0 %v2260
    %3191 = vmatpush1.msra.mxu0 %v2259
    %3192 = vmatprep.subr.mxu0 %v2264
    %3193 = vmatpush1.msra.mxu0 %v2263
    %3194 = vmatprep.subr.mxu0 %v2268
    %3195 = vmatpush1.msra.mxu0 %v2267
    %3196 = vmatprep.subr.mxu0 %v2272
    %3197 = vmatpush1.msra.mxu0 %v2271
    %3198 = vmatprep.subr.mxu0 %v2276
    %3199 = vmatpush1.msra.mxu0 %v2275
    %3200 = vmatprep.subr.mxu0 %v2280
    %3201 = vmatpush1.msra.mxu0 %v2279
    %3202 = vmatprep.subr.mxu0 %v2284
    %3203 = vmatpush1.msra.mxu0 %v2283
    %3204 = vmatprep.subr.mxu0 %v2288
    %3205 = vmatpush1.msra.mxu0 %v2287
    %3206 = vmatprep.subr.mxu0 %v2292
    %3207 = vmatpush1.msra.mxu0 %v2291
    %3208 = vmatprep.subr.mxu0 0.0
    %3209 = vmatpush1.msra.mxu0 0.0
    %3210 = vmatprep.subr.mxu0 0.0
    %3211 = vmatpush1.msra.mxu0 0.0
    %3212 = vmatprep.subr.mxu0 0.0
    %3213 = vmatpush1.msra.mxu0 0.0
    %3214 = vmatprep.subr.mxu0 0.0
    %3215 = vmatpush1.msra.mxu0 0.0
    %3216 = vmatprep.subr.mxu0 0.0
    %3217 = vmatpush1.msra.mxu0 0.0
    %3218 = vmatprep.subr.mxu0 0.0
    %3219 = vmatpush1.msra.mxu0 0.0
    %3220 = vmatprep.subr.mxu0 0.0
    %3221 = vmatpush1.msra.mxu0 0.0
    %3222 = vmatprep.subr.mxu0 0.0
    %3223 = vmatpush1.msra.mxu0 0.0
    %3224 = vmatprep.subr.mxu0 0.0
    %3225 = vmatpush1.msra.mxu0 0.0
    %3226 = vmatprep.subr.mxu0 0.0
    %3227 = vmatpush1.msra.mxu0 0.0
    %3228 = vmatprep.subr.mxu0 0.0
    %3229 = vmatpush1.msra.mxu0 0.0
    %3230 = vmatprep.subr.mxu0 0.0
    %3231 = vmatpush1.msra.mxu0 0.0
    %3232 = vmatprep.subr.mxu0 0.0
    %3233 = vmatpush1.msra.mxu0 0.0
    %3234 = vmatprep.subr.mxu0 0.0
    %3235 = vmatpush1.msra.mxu0 0.0
    %3236 = vmatprep.subr.mxu0 0.0
    %3237 = vmatpush1.msra.mxu0 0.0
    %3238 = vmatprep.subr.mxu0 0.0
    %3239 = vmatpush1.msra.mxu0 0.0
    %3240 = vmatprep.mubr.f32.mxu0 0.0
    %3241 = vmatmul.mubr.f32.gmra.mrb[0].mxu0 %v3170
    %v3242 = vpop.f32.mrb[0].mxu0
    %v3243 = vadd.f32 0.0, %v3242
    %v3244 = vpop.f32.mrb[0].mxu0
    %v3245 = vadd.f32 0.0, %v3244
    %3246 = vdwg.mxu0
    %3247 = vmatprep.subr.mxu0 %v2234
    %3248 = vmatpush1.msra.mxu0 %v2233
    %3249 = vmatprep.subr.mxu0 %v2238
    %3250 = vmatpush1.msra.mxu0 %v2237
    %3251 = vmatprep.subr.mxu0 %v2242
    %3252 = vmatpush1.msra.mxu0 %v2241
    %3253 = vmatprep.subr.mxu0 %v2246
    %3254 = vmatpush1.msra.mxu0 %v2245
    %3255 = vmatprep.subr.mxu0 %v2250
    %3256 = vmatpush1.msra.mxu0 %v2249
    %3257 = vmatprep.subr.mxu0 %v2254
    %3258 = vmatpush1.msra.mxu0 %v2253
    %3259 = vmatprep.subr.mxu0 %v2258
    %3260 = vmatpush1.msra.mxu0 %v2257
    %3261 = vmatprep.subr.mxu0 %v2262
    %3262 = vmatpush1.msra.mxu0 %v2261
    %3263 = vmatprep.subr.mxu0 %v2266
    %3264 = vmatpush1.msra.mxu0 %v2265
    %3265 = vmatprep.subr.mxu0 %v2270
    %3266 = vmatpush1.msra.mxu0 %v2269
    %3267 = vmatprep.subr.mxu0 %v2274
    %3268 = vmatpush1.msra.mxu0 %v2273
    %3269 = vmatprep.subr.mxu0 %v2278
    %3270 = vmatpush1.msra.mxu0 %v2277
    %3271 = vmatprep.subr.mxu0 %v2282
    %3272 = vmatpush1.msra.mxu0 %v2281
    %3273 = vmatprep.subr.mxu0 %v2286
    %3274 = vmatpush1.msra.mxu0 %v2285
    %3275 = vmatprep.subr.mxu0 %v2290
    %3276 = vmatpush1.msra.mxu0 %v2289
    %3277 = vmatprep.subr.mxu0 %v2294
    %3278 = vmatpush1.msra.mxu0 %v2293
    %3279 = vmatprep.subr.mxu0 0.0
    %3280 = vmatpush1.msra.mxu0 0.0
    %3281 = vmatprep.subr.mxu0 0.0
    %3282 = vmatpush1.msra.mxu0 0.0
    %3283 = vmatprep.subr.mxu0 0.0
    %3284 = vmatpush1.msra.mxu0 0.0
    %3285 = vmatprep.subr.mxu0 0.0
    %3286 = vmatpush1.msra.mxu0 0.0
    %3287 = vmatprep.subr.mxu0 0.0
    %3288 = vmatpush1.msra.mxu0 0.0
    %3289 = vmatprep.subr.mxu0 0.0
    %3290 = vmatpush1.msra.mxu0 0.0
    %3291 = vmatprep.subr.mxu0 0.0
    %3292 = vmatpush1.msra.mxu0 0.0
    %3293 = vmatprep.subr.mxu0 0.0
    %3294 = vmatpush1.msra.mxu0 0.0
    %3295 = vmatprep.subr.mxu0 0.0
    %3296 = vmatpush1.msra.mxu0 0.0
    %3297 = vmatprep.subr.mxu0 0.0
    %3298 = vmatpush1.msra.mxu0 0.0
    %3299 = vmatprep.subr.mxu0 0.0
    %3300 = vmatpush1.msra.mxu0 0.0
    %3301 = vmatprep.subr.mxu0 0.0
    %3302 = vmatpush1.msra.mxu0 0.0
    %3303 = vmatprep.subr.mxu0 0.0
    %3304 = vmatpush1.msra.mxu0 0.0
    %3305 = vmatprep.subr.mxu0 0.0
    %3306 = vmatpush1.msra.mxu0 0.0
    %3307 = vmatprep.subr.mxu0 0.0
    %3308 = vmatpush1.msra.mxu0 0.0
    %3309 = vmatprep.subr.mxu0 0.0
    %3310 = vmatpush1.msra.mxu0 0.0
    %3311 = vmatprep.mubr.f32.mxu0 0.0
    %3312 = vmatmul.mubr.f32.gmra.mrb[0].mxu0 %v3170
    %v3313 = vpop.f32.mrb[0].mxu0
    %v3314 = vadd.f32 0.0, %v3313
    %v3315 = vpop.f32.mrb[0].mxu0
    %v3316 = vadd.f32 0.0, %v3315
    %3317 = vdwg.mxu0
    %v3318 = vadd.f32 %v3172, %v3243
    %v3319 = vadd.f32 %v3173, %v3245
    %v3320 = vadd.f32 %v3174, %v3314
    %v3321 = vadd.f32 %v3175, %v3316
    %v3322 = vxor.u32 %v3318, 2147483648
    %v3323 = vmul.f32 %v3322, 1.442695
    %v3324 = vpow.pop %v3323
    %v3325 = vadd.f32 %v3324, 1.0
    %v3326 = vrcp.pop %v3325
    %v3327 = vmul.f32 1.0, %v3326
    %v3328 = vxor.u32 %v3319, 2147483648
    %v3329 = vmul.f32 %v3328, 1.442695
    %v3330 = vpow.pop %v3329
    %v3331 = vadd.f32 %v3330, 1.0
    %v3332 = vrcp.pop %v3331
    %v3333 = vmul.f32 1.0, %v3332
    %v3334 = vtanh.pop %v3320
    %v3335 = vxor.u32 %v3321, 2147483648
    %v3336 = vmul.f32 %v3335, 1.442695
    %v3337 = vpow.pop %v3336
    %v3338 = vadd.f32 %v3337, 1.0
    %v3339 = vrcp.pop %v3338
    %v3340 = vmul.f32 1.0, %v3339
    %v3341 = vmul.f32 %v3333, %v3168
    %v3342 = vmul.f32 %v3327, %v3334
    %v3343 = vadd.f32 %v3341, %v3342
    %v3344 = vtanh.pop %v3343
    %v3345 = vmul.f32 %v3340, %v3344
    %3346 = vst [vmem:[#allocation3 + $0x28] sm:$0xff] %v3345
    %v3347 = vld [vmem:[#allocation2 + $0xc0] sm:$0xff]
    %v3348 = vld [vmem:[#allocation2 + $0xc8] sm:$0xff]
    %v3349 = vld [vmem:[#allocation2 + $0xd0] sm:$0xff]
    %v3350 = vld [vmem:[#allocation2 + $0xd8] sm:$0xff]
    %3351 = vmatprep.subr.mxu0 %v2232
    %3352 = vmatpush1.msra.mxu0 %v2231
    %3353 = vmatprep.subr.mxu0 %v2236
    %3354 = vmatpush1.msra.mxu0 %v2235
    %3355 = vmatprep.subr.mxu0 %v2240
    %3356 = vmatpush1.msra.mxu0 %v2239
    %3357 = vmatprep.subr.mxu0 %v2244
    %3358 = vmatpush1.msra.mxu0 %v2243
    %3359 = vmatprep.subr.mxu0 %v2248
    %3360 = vmatpush1.msra.mxu0 %v2247
    %3361 = vmatprep.subr.mxu0 %v2252
    %3362 = vmatpush1.msra.mxu0 %v2251
    %3363 = vmatprep.subr.mxu0 %v2256
    %3364 = vmatpush1.msra.mxu0 %v2255
    %3365 = vmatprep.subr.mxu0 %v2260
    %3366 = vmatpush1.msra.mxu0 %v2259
    %3367 = vmatprep.subr.mxu0 %v2264
    %3368 = vmatpush1.msra.mxu0 %v2263
    %3369 = vmatprep.subr.mxu0 %v2268
    %3370 = vmatpush1.msra.mxu0 %v2267
    %3371 = vmatprep.subr.mxu0 %v2272
    %3372 = vmatpush1.msra.mxu0 %v2271
    %3373 = vmatprep.subr.mxu0 %v2276
    %3374 = vmatpush1.msra.mxu0 %v2275
    %3375 = vmatprep.subr.mxu0 %v2280
    %3376 = vmatpush1.msra.mxu0 %v2279
    %3377 = vmatprep.subr.mxu0 %v2284
    %3378 = vmatpush1.msra.mxu0 %v2283
    %3379 = vmatprep.subr.mxu0 %v2288
    %3380 = vmatpush1.msra.mxu0 %v2287
    %3381 = vmatprep.subr.mxu0 %v2292
    %3382 = vmatpush1.msra.mxu0 %v2291
    %3383 = vmatprep.subr.mxu0 0.0
    %3384 = vmatpush1.msra.mxu0 0.0
    %3385 = vmatprep.subr.mxu0 0.0
    %3386 = vmatpush1.msra.mxu0 0.0
    %3387 = vmatprep.subr.mxu0 0.0
    %3388 = vmatpush1.msra.mxu0 0.0
    %3389 = vmatprep.subr.mxu0 0.0
    %3390 = vmatpush1.msra.mxu0 0.0
    %3391 = vmatprep.subr.mxu0 0.0
    %3392 = vmatpush1.msra.mxu0 0.0
    %3393 = vmatprep.subr.mxu0 0.0
    %3394 = vmatpush1.msra.mxu0 0.0
    %3395 = vmatprep.subr.mxu0 0.0
    %3396 = vmatpush1.msra.mxu0 0.0
    %3397 = vmatprep.subr.mxu0 0.0
    %3398 = vmatpush1.msra.mxu0 0.0
    %3399 = vmatprep.subr.mxu0 0.0
    %3400 = vmatpush1.msra.mxu0 0.0
    %3401 = vmatprep.subr.mxu0 0.0
    %3402 = vmatpush1.msra.mxu0 0.0
    %3403 = vmatprep.subr.mxu0 0.0
    %3404 = vmatpush1.msra.mxu0 0.0
    %3405 = vmatprep.subr.mxu0 0.0
    %3406 = vmatpush1.msra.mxu0 0.0
    %3407 = vmatprep.subr.mxu0 0.0
    %3408 = vmatpush1.msra.mxu0 0.0
    %3409 = vmatprep.subr.mxu0 0.0
    %3410 = vmatpush1.msra.mxu0 0.0
    %3411 = vmatprep.subr.mxu0 0.0
    %3412 = vmatpush1.msra.mxu0 0.0
    %3413 = vmatprep.subr.mxu0 0.0
    %3414 = vmatpush1.msra.mxu0 0.0
    %3415 = vmatprep.mubr.f32.mxu0 0.0
    %3416 = vmatmul.mubr.f32.gmra.mrb[0].mxu0 %v3345
    %v3417 = vpop.f32.mrb[0].mxu0
    %v3418 = vadd.f32 0.0, %v3417
    %v3419 = vpop.f32.mrb[0].mxu0
    %v3420 = vadd.f32 0.0, %v3419
    %3421 = vdwg.mxu0
    %3422 = vmatprep.subr.mxu0 %v2234
    %3423 = vmatpush1.msra.mxu0 %v2233
    %3424 = vmatprep.subr.mxu0 %v2238
    %3425 = vmatpush1.msra.mxu0 %v2237
    %3426 = vmatprep.subr.mxu0 %v2242
    %3427 = vmatpush1.msra.mxu0 %v2241
    %3428 = vmatprep.subr.mxu0 %v2246
    %3429 = vmatpush1.msra.mxu0 %v2245
    %3430 = vmatprep.subr.mxu0 %v2250
    %3431 = vmatpush1.msra.mxu0 %v2249
    %3432 = vmatprep.subr.mxu0 %v2254
    %3433 = vmatpush1.msra.mxu0 %v2253
    %3434 = vmatprep.subr.mxu0 %v2258
    %3435 = vmatpush1.msra.mxu0 %v2257
    %3436 = vmatprep.subr.mxu0 %v2262
    %3437 = vmatpush1.msra.mxu0 %v2261
    %3438 = vmatprep.subr.mxu0 %v2266
    %3439 = vmatpush1.msra.mxu0 %v2265
    %3440 = vmatprep.subr.mxu0 %v2270
    %3441 = vmatpush1.msra.mxu0 %v2269
    %3442 = vmatprep.subr.mxu0 %v2274
    %3443 = vmatpush1.msra.mxu0 %v2273
    %3444 = vmatprep.subr.mxu0 %v2278
    %3445 = vmatpush1.msra.mxu0 %v2277
    %3446 = vmatprep.subr.mxu0 %v2282
    %3447 = vmatpush1.msra.mxu0 %v2281
    %3448 = vmatprep.subr.mxu0 %v2286
    %3449 = vmatpush1.msra.mxu0 %v2285
    %3450 = vmatprep.subr.mxu0 %v2290
    %3451 = vmatpush1.msra.mxu0 %v2289
    %3452 = vmatprep.subr.mxu0 %v2294
    %3453 = vmatpush1.msra.mxu0 %v2293
    %3454 = vmatprep.subr.mxu0 0.0
    %3455 = vmatpush1.msra.mxu0 0.0
    %3456 = vmatprep.subr.mxu0 0.0
    %3457 = vmatpush1.msra.mxu0 0.0
    %3458 = vmatprep.subr.mxu0 0.0
    %3459 = vmatpush1.msra.mxu0 0.0
    %3460 = vmatprep.subr.mxu0 0.0
    %3461 = vmatpush1.msra.mxu0 0.0
    %3462 = vmatprep.subr.mxu0 0.0
    %3463 = vmatpush1.msra.mxu0 0.0
    %3464 = vmatprep.subr.mxu0 0.0
    %3465 = vmatpush1.msra.mxu0 0.0
    %3466 = vmatprep.subr.mxu0 0.0
    %3467 = vmatpush1.msra.mxu0 0.0
    %3468 = vmatprep.subr.mxu0 0.0
    %3469 = vmatpush1.msra.mxu0 0.0
    %3470 = vmatprep.subr.mxu0 0.0
    %3471 = vmatpush1.msra.mxu0 0.0
    %3472 = vmatprep.subr.mxu0 0.0
    %3473 = vmatpush1.msra.mxu0 0.0
    %3474 = vmatprep.subr.mxu0 0.0
    %3475 = vmatpush1.msra.mxu0 0.0
    %3476 = vmatprep.subr.mxu0 0.0
    %3477 = vmatpush1.msra.mxu0 0.0
    %3478 = vmatprep.subr.mxu0 0.0
    %3479 = vmatpush1.msra.mxu0 0.0
    %3480 = vmatprep.subr.mxu0 0.0
    %3481 = vmatpush1.msra.mxu0 0.0
    %3482 = vmatprep.subr.mxu0 0.0
    %3483 = vmatpush1.msra.mxu0 0.0
    %3484 = vmatprep.subr.mxu0 0.0
    %3485 = vmatpush1.msra.mxu0 0.0
    %3486 = vmatprep.mubr.f32.mxu0 0.0
    %3487 = vmatmul.mubr.f32.gmra.mrb[0].mxu0 %v3345
    %v3488 = vpop.f32.mrb[0].mxu0
    %v3489 = vadd.f32 0.0, %v3488
    %v3490 = vpop.f32.mrb[0].mxu0
    %v3491 = vadd.f32 0.0, %v3490
    %3492 = vdwg.mxu0
    %v3493 = vadd.f32 %v3347, %v3418
    %v3494 = vadd.f32 %v3348, %v3420
    %v3495 = vadd.f32 %v3349, %v3489
    %v3496 = vadd.f32 %v3350, %v3491
    %v3497 = vxor.u32 %v3493, 2147483648
    %v3498 = vmul.f32 %v3497, 1.442695
    %v3499 = vpow.pop %v3498
    %v3500 = vadd.f32 %v3499, 1.0
    %v3501 = vrcp.pop %v3500
    %v3502 = vmul.f32 1.0, %v3501
    %v3503 = vxor.u32 %v3494, 2147483648
    %v3504 = vmul.f32 %v3503, 1.442695
    %v3505 = vpow.pop %v3504
    %v3506 = vadd.f32 %v3505, 1.0
    %v3507 = vrcp.pop %v3506
    %v3508 = vmul.f32 1.0, %v3507
    %v3509 = vtanh.pop %v3495
    %v3510 = vxor.u32 %v3496, 2147483648
    %v3511 = vmul.f32 %v3510, 1.442695
    %v3512 = vpow.pop %v3511
    %v3513 = vadd.f32 %v3512, 1.0
    %v3514 = vrcp.pop %v3513
    %v3515 = vmul.f32 1.0, %v3514
    %v3516 = vmul.f32 %v3508, %v3343
    %v3517 = vmul.f32 %v3502, %v3509
    %v3518 = vadd.f32 %v3516, %v3517
    %v3519 = vtanh.pop %v3518
    %v3520 = vmul.f32 %v3515, %v3519
    %3521 = vst [vmem:[#allocation3 + $0x30] sm:$0xff] %v3520
    %v3522 = vld [vmem:[#allocation2 + $0xe0] sm:$0xff]
    %v3523 = vld [vmem:[#allocation2 + $0xe8] sm:$0xff]
    %v3524 = vld [vmem:[#allocation2 + $0xf0] sm:$0xff]
    %v3525 = vld [vmem:[#allocation2 + $0xf8] sm:$0xff]
    %3526 = vmatprep.subr.mxu0 %v2232
    %3527 = vmatpush1.msra.mxu0 %v2231
    %3528 = vmatprep.subr.mxu0 %v2236
    %3529 = vmatpush1.msra.mxu0 %v2235
    %3530 = vmatprep.subr.mxu0 %v2240
    %3531 = vmatpush1.msra.mxu0 %v2239
    %3532 = vmatprep.subr.mxu0 %v2244
    %3533 = vmatpush1.msra.mxu0 %v2243
    %3534 = vmatprep.subr.mxu0 %v2248
    %3535 = vmatpush1.msra.mxu0 %v2247
    %3536 = vmatprep.subr.mxu0 %v2252
    %3537 = vmatpush1.msra.mxu0 %v2251
    %3538 = vmatprep.subr.mxu0 %v2256
    %3539 = vmatpush1.msra.mxu0 %v2255
    %3540 = vmatprep.subr.mxu0 %v2260
    %3541 = vmatpush1.msra.mxu0 %v2259
    %3542 = vmatprep.subr.mxu0 %v2264
    %3543 = vmatpush1.msra.mxu0 %v2263
    %3544 = vmatprep.subr.mxu0 %v2268
    %3545 = vmatpush1.msra.mxu0 %v2267
    %3546 = vmatprep.subr.mxu0 %v2272
    %3547 = vmatpush1.msra.mxu0 %v2271
    %3548 = vmatprep.subr.mxu0 %v2276
    %3549 = vmatpush1.msra.mxu0 %v2275
    %3550 = vmatprep.subr.mxu0 %v2280
    %3551 = vmatpush1.msra.mxu0 %v2279
    %3552 = vmatprep.subr.mxu0 %v2284
    %3553 = vmatpush1.msra.mxu0 %v2283
    %3554 = vmatprep.subr.mxu0 %v2288
    %3555 = vmatpush1.msra.mxu0 %v2287
    %3556 = vmatprep.subr.mxu0 %v2292
    %3557 = vmatpush1.msra.mxu0 %v2291
    %3558 = vmatprep.subr.mxu0 0.0
    %3559 = vmatpush1.msra.mxu0 0.0
    %3560 = vmatprep.subr.mxu0 0.0
    %3561 = vmatpush1.msra.mxu0 0.0
    %3562 = vmatprep.subr.mxu0 0.0
    %3563 = vmatpush1.msra.mxu0 0.0
    %3564 = vmatprep.subr.mxu0 0.0
    %3565 = vmatpush1.msra.mxu0 0.0
    %3566 = vmatprep.subr.mxu0 0.0
    %3567 = vmatpush1.msra.mxu0 0.0
    %3568 = vmatprep.subr.mxu0 0.0
    %3569 = vmatpush1.msra.mxu0 0.0
    %3570 = vmatprep.subr.mxu0 0.0
    %3571 = vmatpush1.msra.mxu0 0.0
    %3572 = vmatprep.subr.mxu0 0.0
    %3573 = vmatpush1.msra.mxu0 0.0
    %3574 = vmatprep.subr.mxu0 0.0
    %3575 = vmatpush1.msra.mxu0 0.0
    %3576 = vmatprep.subr.mxu0 0.0
    %3577 = vmatpush1.msra.mxu0 0.0
    %3578 = vmatprep.subr.mxu0 0.0
    %3579 = vmatpush1.msra.mxu0 0.0
    %3580 = vmatprep.subr.mxu0 0.0
    %3581 = vmatpush1.msra.mxu0 0.0
    %3582 = vmatprep.subr.mxu0 0.0
    %3583 = vmatpush1.msra.mxu0 0.0
    %3584 = vmatprep.subr.mxu0 0.0
    %3585 = vmatpush1.msra.mxu0 0.0
    %3586 = vmatprep.subr.mxu0 0.0
    %3587 = vmatpush1.msra.mxu0 0.0
    %3588 = vmatprep.subr.mxu0 0.0
    %3589 = vmatpush1.msra.mxu0 0.0
    %3590 = vmatprep.mubr.f32.mxu0 0.0
    %3591 = vmatmul.mubr.f32.gmra.mrb[0].mxu0 %v3520
    %v3592 = vpop.f32.mrb[0].mxu0
    %v3593 = vadd.f32 0.0, %v3592
    %v3594 = vpop.f32.mrb[0].mxu0
    %v3595 = vadd.f32 0.0, %v3594
    %3596 = vdwg.mxu0
    %3597 = vmatprep.subr.mxu0 %v2234
    %3598 = vmatpush1.msra.mxu0 %v2233
    %3599 = vmatprep.subr.mxu0 %v2238
    %3600 = vmatpush1.msra.mxu0 %v2237
    %3601 = vmatprep.subr.mxu0 %v2242
    %3602 = vmatpush1.msra.mxu0 %v2241
    %3603 = vmatprep.subr.mxu0 %v2246
    %3604 = vmatpush1.msra.mxu0 %v2245
    %3605 = vmatprep.subr.mxu0 %v2250
    %3606 = vmatpush1.msra.mxu0 %v2249
    %3607 = vmatprep.subr.mxu0 %v2254
    %3608 = vmatpush1.msra.mxu0 %v2253
    %3609 = vmatprep.subr.mxu0 %v2258
    %3610 = vmatpush1.msra.mxu0 %v2257
    %3611 = vmatprep.subr.mxu0 %v2262
    %3612 = vmatpush1.msra.mxu0 %v2261
    %3613 = vmatprep.subr.mxu0 %v2266
    %3614 = vmatpush1.msra.mxu0 %v2265
    %3615 = vmatprep.subr.mxu0 %v2270
    %3616 = vmatpush1.msra.mxu0 %v2269
    %3617 = vmatprep.subr.mxu0 %v2274
    %3618 = vmatpush1.msra.mxu0 %v2273
    %3619 = vmatprep.subr.mxu0 %v2278
    %3620 = vmatpush1.msra.mxu0 %v2277
    %3621 = vmatprep.subr.mxu0 %v2282
    %3622 = vmatpush1.msra.mxu0 %v2281
    %3623 = vmatprep.subr.mxu0 %v2286
    %3624 = vmatpush1.msra.mxu0 %v2285
    %3625 = vmatprep.subr.mxu0 %v2290
    %3626 = vmatpush1.msra.mxu0 %v2289
    %3627 = vmatprep.subr.mxu0 %v2294
    %3628 = vmatpush1.msra.mxu0 %v2293
    %3629 = vmatprep.subr.mxu0 0.0
    %3630 = vmatpush1.msra.mxu0 0.0
    %3631 = vmatprep.subr.mxu0 0.0
    %3632 = vmatpush1.msra.mxu0 0.0
    %3633 = vmatprep.subr.mxu0 0.0
    %3634 = vmatpush1.msra.mxu0 0.0
    %3635 = vmatprep.subr.mxu0 0.0
    %3636 = vmatpush1.msra.mxu0 0.0
    %3637 = vmatprep.subr.mxu0 0.0
    %3638 = vmatpush1.msra.mxu0 0.0
    %3639 = vmatprep.subr.mxu0 0.0
    %3640 = vmatpush1.msra.mxu0 0.0
    %3641 = vmatprep.subr.mxu0 0.0
    %3642 = vmatpush1.msra.mxu0 0.0
    %3643 = vmatprep.subr.mxu0 0.0
    %3644 = vmatpush1.msra.mxu0 0.0
    %3645 = vmatprep.subr.mxu0 0.0
    %3646 = vmatpush1.msra.mxu0 0.0
    %3647 = vmatprep.subr.mxu0 0.0
    %3648 = vmatpush1.msra.mxu0 0.0
    %3649 = vmatprep.subr.mxu0 0.0
    %3650 = vmatpush1.msra.mxu0 0.0
    %3651 = vmatprep.subr.mxu0 0.0
    %3652 = vmatpush1.msra.mxu0 0.0
    %3653 = vmatprep.subr.mxu0 0.0
    %3654 = vmatpush1.msra.mxu0 0.0
    %3655 = vmatprep.subr.mxu0 0.0
    %3656 = vmatpush1.msra.mxu0 0.0
    %3657 = vmatprep.subr.mxu0 0.0
    %3658 = vmatpush1.msra.mxu0 0.0
    %3659 = vmatprep.subr.mxu0 0.0
    %3660 = vmatpush1.msra.mxu0 0.0
    %3661 = vmatprep.mubr.f32.mxu0 0.0
    %3662 = vmatmul.mubr.f32.gmra.mrb[0].mxu0 %v3520
    %v3663 = vpop.f32.mrb[0].mxu0
    %v3664 = vadd.f32 0.0, %v3663
    %v3665 = vpop.f32.mrb[0].mxu0
    %v3666 = vadd.f32 0.0, %v3665
    %3667 = vdwg.mxu0
    %v3668 = vadd.f32 %v3522, %v3593
    %v3669 = vadd.f32 %v3523, %v3595
    %v3670 = vadd.f32 %v3524, %v3664
    %v3671 = vadd.f32 %v3525, %v3666
    %v3672 = vxor.u32 %v3668, 2147483648
    %v3673 = vmul.f32 %v3672, 1.442695
    %v3674 = vpow.pop %v3673
    %v3675 = vadd.f32 %v3674, 1.0
    %v3676 = vrcp.pop %v3675
    %v3677 = vmul.f32 1.0, %v3676
    %v3678 = vxor.u32 %v3669, 2147483648
    %v3679 = vmul.f32 %v3678, 1.442695
    %v3680 = vpow.pop %v3679
    %v3681 = vadd.f32 %v3680, 1.0
    %v3682 = vrcp.pop %v3681
    %v3683 = vmul.f32 1.0, %v3682
    %v3684 = vtanh.pop %v3670
    %v3685 = vxor.u32 %v3671, 2147483648
    %v3686 = vmul.f32 %v3685, 1.442695
    %v3687 = vpow.pop %v3686
    %v3688 = vadd.f32 %v3687, 1.0
    %v3689 = vrcp.pop %v3688
    %v3690 = vmul.f32 1.0, %v3689
    %v3691 = vmul.f32 %v3683, %v3518
    %v3692 = vmul.f32 %v3677, %v3684
    %v3693 = vadd.f32 %v3691, %v3692
    %v3694 = vtanh.pop %v3693
    %v3695 = vmul.f32 %v3690, %v3694
    %3696 = vst [vmem:[#allocation3 + $0x38] sm:$0xff] %v3695
    %3697 = vst [vmem:[#allocation6] sm:$0xff] %v3695
    %3698 = vst [vmem:[#allocation7] sm:$0xff] %v3693
    %v3699 = vld [vmem:[#allocation3] sm:$0xff]
    %v3700 = vld [vmem:[#allocation3 + $0x8] sm:$0xff]
    %v3701 = vld [vmem:[#allocation3 + $0x10] sm:$0xff]
    %v3702 = vld [vmem:[#allocation3 + $0x18] sm:$0xff]
    %v3703 = vld [vmem:[#allocation3 + $0x20] sm:$0xff]
    %v3704 = vld [vmem:[#allocation3 + $0x28] sm:$0xff]
    %v3705 = vld [vmem:[#allocation3 + $0x30] sm:$0xff]
    %v3706 = vld [vmem:[#allocation3 + $0x38] sm:$0xff]
    %v3707 = vld [vmem:[%s7] sm:$0xff]
    %v3708 = vld [vmem:[%s7 + $0x8] sm:$0xff]
    %v3709 = vld [vmem:[%s7 + $0x10] sm:$0xff]
    %v3710 = vld [vmem:[%s7 + $0x18] sm:$0xff]
    %v3711 = vld [vmem:[%s7 + $0x20] sm:$0xff]
    %v3712 = vld [vmem:[%s7 + $0x28] sm:$0xff]
    %v3713 = vld [vmem:[%s7 + $0x30] sm:$0xff]
    %v3714 = vld [vmem:[%s7 + $0x38] sm:$0xff]
    %v3715 = vld [vmem:[%s7 + $0x40] sm:$0xff]
    %v3716 = vld [vmem:[%s7 + $0x48] sm:$0xff]
    %v3717 = vld [vmem:[%s7 + $0x50] sm:$0xff]
    %v3718 = vld [vmem:[%s7 + $0x58] sm:$0xff]
    %v3719 = vld [vmem:[%s7 + $0x60] sm:$0xff]
    %v3720 = vld [vmem:[%s7 + $0x68] sm:$0xff]
    %v3721 = vld [vmem:[%s7 + $0x70] sm:$0xff]
    %v3722 = vld [vmem:[%s7 + $0x78] sm:$0xff]
    %v3723 = vld [vmem:[#allocation8] sm:$0x1]
    %v3725 = vlaneseq
    %v3726 = vshrl.u32 %v3725, 7
    %v3727 = vsub.s32 0, %v3726
    %v3728 = vrot.slane %v3723, %v3727
    %3730 = vmatprep.subr.mxu0 0.0
    %3731 = vmatpush1.msra.mxu0 %v3707
    %3732 = vmatprep.subr.mxu0 0.0
    %3733 = vmatpush1.msra.mxu0 %v3708
    %3734 = vmatprep.subr.mxu0 0.0
    %3735 = vmatpush1.msra.mxu0 %v3709
    %3736 = vmatprep.subr.mxu0 0.0
    %3737 = vmatpush1.msra.mxu0 %v3710
    %3738 = vmatprep.subr.mxu0 0.0
    %3739 = vmatpush1.msra.mxu0 %v3711
    %3740 = vmatprep.subr.mxu0 0.0
    %3741 = vmatpush1.msra.mxu0 %v3712
    %3742 = vmatprep.subr.mxu0 0.0
    %3743 = vmatpush1.msra.mxu0 %v3713
    %3744 = vmatprep.subr.mxu0 0.0
    %3745 = vmatpush1.msra.mxu0 %v3714
    %3746 = vmatprep.subr.mxu0 0.0
    %3747 = vmatpush1.msra.mxu0 %v3715
    %3748 = vmatprep.subr.mxu0 0.0
    %3749 = vmatpush1.msra.mxu0 %v3716
    %3750 = vmatprep.subr.mxu0 0.0
    %3751 = vmatpush1.msra.mxu0 %v3717
    %3752 = vmatprep.subr.mxu0 0.0
    %3753 = vmatpush1.msra.mxu0 %v3718
    %3754 = vmatprep.subr.mxu0 0.0
    %3755 = vmatpush1.msra.mxu0 %v3719
    %3756 = vmatprep.subr.mxu0 0.0
    %3757 = vmatpush1.msra.mxu0 %v3720
    %3758 = vmatprep.subr.mxu0 0.0
    %3759 = vmatpush1.msra.mxu0 %v3721
    %3760 = vmatprep.subr.mxu0 0.0
    %3761 = vmatpush1.msra.mxu0 %v3722
    %3762 = vmatprep.subr.mxu0 0.0
    %3763 = vmatpush1.msra.mxu0 0.0
    %3764 = vmatprep.subr.mxu0 0.0
    %3765 = vmatpush1.msra.mxu0 0.0
    %3766 = vmatprep.subr.mxu0 0.0
    %3767 = vmatpush1.msra.mxu0 0.0
    %3768 = vmatprep.subr.mxu0 0.0
    %3769 = vmatpush1.msra.mxu0 0.0
    %3770 = vmatprep.subr.mxu0 0.0
    %3771 = vmatpush1.msra.mxu0 0.0
    %3772 = vmatprep.subr.mxu0 0.0
    %3773 = vmatpush1.msra.mxu0 0.0
    %3774 = vmatprep.subr.mxu0 0.0
    %3775 = vmatpush1.msra.mxu0 0.0
    %3776 = vmatprep.subr.mxu0 0.0
    %3777 = vmatpush1.msra.mxu0 0.0
    %3778 = vmatprep.subr.mxu0 0.0
    %3779 = vmatpush1.msra.mxu0 0.0
    %3780 = vmatprep.subr.mxu0 0.0
    %3781 = vmatpush1.msra.mxu0 0.0
    %3782 = vmatprep.subr.mxu0 0.0
    %3783 = vmatpush1.msra.mxu0 0.0
    %3784 = vmatprep.subr.mxu0 0.0
    %3785 = vmatpush1.msra.mxu0 0.0
    %3786 = vmatprep.subr.mxu0 0.0
    %3787 = vmatpush1.msra.mxu0 0.0
    %3788 = vmatprep.subr.mxu0 0.0
    %3789 = vmatpush1.msra.mxu0 0.0
    %3790 = vmatprep.subr.mxu0 0.0
    %3791 = vmatpush1.msra.mxu0 0.0
    %3792 = vmatprep.subr.mxu0 0.0
    %3793 = vmatpush1.msra.mxu0 0.0
    %3794 = vmatprep.mubr.f32.mxu0 0.0
    %3795 = vmatmul.mubr.f32.gmra.mrb[0].mxu0 %v3699
    %v3796 = vpop.f32.mrb[0].mxu0
    %v3797 = vadd.f32 %v3728, %v3796
    %v3798 = vpop.f32.mrb[0].mxu0
    %3799 = vmatprep.mubr.f32.mxu0 0.0
    %3800 = vmatmul.mubr.f32.gmra.mrb[0].mxu0 %v3700
    %v3801 = vpop.f32.mrb[0].mxu0
    %v3802 = vadd.f32 %v3728, %v3801
    %v3803 = vpop.f32.mrb[0].mxu0
    %3804 = vmatprep.mubr.f32.mxu0 0.0
    %3805 = vmatmul.mubr.f32.gmra.mrb[0].mxu0 %v3701
    %v3806 = vpop.f32.mrb[0].mxu0
    %v3807 = vadd.f32 %v3728, %v3806
    %v3808 = vpop.f32.mrb[0].mxu0
    %3809 = vmatprep.mubr.f32.mxu0 0.0
    %3810 = vmatmul.mubr.f32.gmra.mrb[0].mxu0 %v3702
    %v3811 = vpop.f32.mrb[0].mxu0
    %v3812 = vadd.f32 %v3728, %v3811
    %v3813 = vpop.f32.mrb[0].mxu0
    %3814 = vmatprep.mubr.f32.mxu0 0.0
    %3815 = vmatmul.mubr.f32.gmra.mrb[0].mxu0 %v3703
    %v3816 = vpop.f32.mrb[0].mxu0
    %v3817 = vadd.f32 %v3728, %v3816
    %v3818 = vpop.f32.mrb[0].mxu0
    %3819 = vmatprep.mubr.f32.mxu0 0.0
    %3820 = vmatmul.mubr.f32.gmra.mrb[0].mxu0 %v3704
    %v3821 = vpop.f32.mrb[0].mxu0
    %v3822 = vadd.f32 %v3728, %v3821
    %v3823 = vpop.f32.mrb[0].mxu0
    %3824 = vmatprep.mubr.f32.mxu0 0.0
    %3825 = vmatmul.mubr.f32.gmra.mrb[0].mxu0 %v3705
    %v3826 = vpop.f32.mrb[0].mxu0
    %v3827 = vadd.f32 %v3728, %v3826
    %v3828 = vpop.f32.mrb[0].mxu0
    %3829 = vmatprep.mubr.f32.mxu0 0.0
    %3830 = vmatmul.mubr.f32.gmra.mrb[0].mxu0 %v3706
    %v3831 = vpop.f32.mrb[0].mxu0
    %v3832 = vadd.f32 %v3728, %v3831
    %v3833 = vpop.f32.mrb[0].mxu0
    %3834 = vdwg.mxu0
    %vm3835 = vcmask 7168
    %3836 = vst.msk [vmem:[%s9] sm:$0xff] %vm3835, %v3797
    %3837 = vst.msk [vmem:[%s9 + $0x8] sm:$0xff] %vm3835, %v3802
    %3838 = vst.msk [vmem:[%s9 + $0x10] sm:$0xff] %vm3835, %v3807
    %3839 = vst.msk [vmem:[%s9 + $0x18] sm:$0xff] %vm3835, %v3812
    %3840 = vst.msk [vmem:[%s9 + $0x20] sm:$0xff] %vm3835, %v3817
    %3841 = vst.msk [vmem:[%s9 + $0x28] sm:$0xff] %vm3835, %v3822
    %3842 = vst.msk [vmem:[%s9 + $0x30] sm:$0xff] %vm3835, %v3827
    %3843 = vst.msk [vmem:[%s9 + $0x38] sm:$0xff] %vm3835, %v3832
    // Predicated region
    $region54: #{tpu_custom_call.1} parent=1 // pred_check
      _
    $region55: #{tpu_custom_call.1} parent=1 // pred_check_branch
      %3845 = sbr.rel (0) target = $region57
    $region56: #{tpu_custom_call.1} parent=1 // pred_region
      _
    $region57: #{tpu_custom_call.1} parent=1 // pred_fallthru
      _
    // Predicated region
    $region58: #{tpu_custom_call.1} parent=1 // pred_check
      _
    $region59: #{tpu_custom_call.1} parent=1 // pred_check_branch
      %3847 = sbr.rel (0) target = $region61
    $region60: #{tpu_custom_call.1} parent=1 // pred_region
      _
    $region61: #{tpu_custom_call.1} parent=1 // pred_fallthru
      _
    %3848 = vsyncpa [#allocation10], 1
    %3849 = vsyncpa [#allocation12], 1

</llo_original>
